<compile_context>
chip_gen: v6e
topology: v6e:2x2x1
jax: 0.10.0
libtpu: 0.0.40
codegen_flags: <defaults>
</compile_context>

<pallas_src>
import functools

import jax
import jax.numpy as jnp
from jax import lax
from jax.experimental import pallas as pl
from jax.experimental.pallas import tpu as pltpu

NB_FEATS1, NB_FEATS2, NB_FEATS3 = 20, 30, 80

_NEG = -3.0e38                  # "minus infinity" fill for the max accumulators
MAX_TILE_ROWS = 2048            # large MLP row tiles: amortize ~0.35 us per-grid-step cost
SUB_ROWS = 256                  # pooling sub-block (masked-reduce work is linear in this)
NUM_CORE_SLICES = 2             # leading "parallel" axis -> v7x megacore partial maxima
VMEM_LIMIT = 32 * 1024 * 1024   # above v5e's 16 MiB scoped default, within v7x's 64 MiB


def _round_up(x, m):
    return ((x + m - 1) // m) * m


# ---------------------------------------------------------------------------
# In-kernel building blocks
# ---------------------------------------------------------------------------
def _rel_mlp(x, w1_ref, b1_ref, w2_ref, b2_ref, w3_ref, b3_ref):
    """Relative-coordinate MLP 3 -> H1 -> H2 -> C (ReLU).  x: (T, 3) f32."""
    # K=3 first layer: three VPU broadcast-FMAs instead of a zero-padded MXU matmul.
    w1 = w1_ref[...].astype(jnp.float32)                          # (3, H1)
    h = (x[:, 0:1] * w1[0:1, :] + x[:, 1:2] * w1[1:2, :]
         + x[:, 2:3] * w1[2:3, :] + b1_ref[...])
    h = jnp.maximum(h, 0.0)                                       # (T, H1) f32
    h = jnp.dot(h.astype(jnp.bfloat16), w2_ref[...],
                preferred_element_type=jnp.float32) + b2_ref[...]
    h = jnp.maximum(h, 0.0)                                       # (T, H2) f32
    h = jnp.dot(h.astype(jnp.bfloat16), w3_ref[...],
                preferred_element_type=jnp.float32) + b3_ref[...]
    return jnp.maximum(h, 0.0)                                    # (T, C) f32


def _fold_segment_max(cid, lo, hi, targets):
    """Fold one sub-block of rows into per-cluster max accumulators.

    cid: (sub_n, 1) int32 sorted cluster ids (padded rows are -1, never match).
    lo / hi: first / last cluster id present in this sub-block (scalars).
    targets: tuple of (vals (sub_n, C) f32, o_ref (Mpad, C) f32).
    """
    def masked_max(s, vals):
        return jnp.max(jnp.where(cid == s, vals, _NEG), axis=0, keepdims=True)

    # Clusters strictly inside (lo, hi) are fully contained in this sub-block
    # (rows are globally sorted by cluster id) -> plain store, no RMW, no load.
    def interior(s, carry):
        for vals, o_ref in targets:
            o_ref[pl.ds(s, 1), :] = masked_max(s, vals).astype(o_ref.dtype)
        return carry

    lax.fori_loop(lo + 1, hi, interior, 0)

    # Boundary clusters may span sub-blocks / tiles / core slices -> RMW max.
    # (Idempotent if lo == hi; no-op for fully padded sub-blocks since cid == -1.)
    for s in (lo, hi):
        for vals, o_ref in targets:
            cur = o_ref[pl.ds(s, 1), :]
            o_ref[pl.ds(s, 1), :] = jnp.maximum(cur, masked_max(s, vals).astype(o_ref.dtype))


# ---------------------------------------------------------------------------
# Fused per-stage kernels (per-point MLP + in-place segment max pooling)
# ---------------------------------------------------------------------------
def _simple_fused_kernel(lo_sm, hi_sm, rel_ref, cid_ref,
                         w1, b1, w2, b2, w3, b3, oenc_ref,
                         *, tile_n, sub_n, tiles_per_core):
    i = pl.program_id(1)

    @pl.when(i == 0)
    def _init():
        oenc_ref[...] = jnp.full(oenc_ref.shape, _NEG, oenc_ref.dtype)

    enc = _rel_mlp(rel_ref[...].astype(jnp.float32), w1, b1, w2, b2, w3, b3)
    cid = cid_ref[...]                                            # (tile_n, 1) int32
    t = pl.program_id(0) * tiles_per_core + i                     # absolute row-tile index
    num_sub = tile_n // sub_n
    for j in range(num_sub):                                      # static unroll
        sb = t * num_sub + j
        r0 = j * sub_n
        _fold_segment_max(cid[r0:r0 + sub_n, :], lo_sm[sb], hi_sm[sb],
                          ((enc[r0:r0 + sub_n, :], oenc_ref),))


def _middle_fused_kernel(lo_sm, hi_sm, rel_ref, feat_ref, cid_ref,
                         w1, b1, w2, b2, w3, b3, wm, bm,
                         oenc_ref, ofeat_ref,
                         *, tile_n, sub_n, tiles_per_core):
    i = pl.program_id(1)

    @pl.when(i == 0)
    def _init():
        oenc_ref[...] = jnp.full(oenc_ref.shape, _NEG, oenc_ref.dtype)
        ofeat_ref[...] = jnp.full(ofeat_ref.shape, _NEG, ofeat_ref.dtype)

    r = _rel_mlp(rel_ref[...].astype(jnp.float32), w1, b1, w2, b2, w3, b3)
    f = feat_ref[...]                                             # (tile_n, Fin) bf16
    # Single stacked-K mix matmul: [r | f] @ [Wmr ; Wmf]  (one MXU pass, no per-point concat
    # is emitted to HBM -- the lane concat stays in VMEM/XLU which has slack here).
    x = jnp.dot(jnp.concatenate([r.astype(jnp.bfloat16), f], axis=1), wm[...],
                preferred_element_type=jnp.float32) + bm[...]
    enc = jnp.maximum(x, 0.0)                                     # (tile_n, Cout) f32
    f32 = f.astype(jnp.float32)

    cid = cid_ref[...]
    t = pl.program_id(0) * tiles_per_core + i
    num_sub = tile_n // sub_n
    for j in range(num_sub):
        sb = t * num_sub + j
        r0 = j * sub_n
        _fold_segment_max(cid[r0:r0 + sub_n, :], lo_sm[sb], hi_sm[sb],
                          ((enc[r0:r0 + sub_n, :], oenc_ref),
                           (f32[r0:r0 + sub_n, :], ofeat_ref)))


# ---------------------------------------------------------------------------
# XLA-side padding / per-sub-block cluster-range tables
# ---------------------------------------------------------------------------
def _stage_tiles(n):
    if n <= SUB_ROWS:
        tile = _round_up(max(n, 16), 16)
        sub = tile
    else:
        tile = min(MAX_TILE_ROWS, _round_up(n, SUB_ROWS))
        sub = SUB_ROWS
    assert tile % sub == 0
    return tile, sub


def _pad_inputs(rel_sorted, feats_sorted, cid_sorted, tile_n, sub_n):
    """Pad row arrays to a whole number of (NUM_CORE_SLICES-aligned) tiles and build the
    per-sub-block [first_cluster_id, last_cluster_id] tables (scalar-prefetched to SMEM)."""
    n = rel_sorted.shape[0]
    ntiles = _round_up(-(-n // tile_n), NUM_CORE_SLICES)
    npad = ntiles * tile_n
    relp = jnp.pad(rel_sorted, ((0, npad - n), (0, 0)))
    # Padded rows get cluster id -1 -> they can never win a segment max.
    cidp = jnp.pad(cid_sorted, (0, npad - n), constant_values=-1).reshape(npad, 1)
    featp = None
    if feats_sorted is not None:
        featp = jnp.pad(feats_sorted, ((0, npad - n), (0, 0)))

    nsub = npad // sub_n
    starts = jnp.arange(nsub, dtype=jnp.int32) * sub_n
    ends = jnp.minimum(starts + sub_n, n) - 1
    valid = starts < n
    lo = jnp.where(valid, cid_sorted[jnp.clip(starts, 0, n - 1)], 0).astype(jnp.int32)
    hi = jnp.where(valid, cid_sorted[jnp.clip(ends, 0, n - 1)], 0).astype(jnp.int32)
    return relp, featp, cidp, lo, hi, ntiles


def _weight_spec(a):
    return pl.BlockSpec(a.shape, lambda c, i, lo, hi: (0, 0))


def _finish_pool(out, mpad):
    """Combine the per-core partial maxima and fill empty clusters with 0."""
    pooled = jnp.maximum(out[:mpad], out[mpad:])
    return jnp.where(pooled > _NEG * 0.5, pooled, 0.0)


# ---------------------------------------------------------------------------
# Stage wrappers
# ---------------------------------------------------------------------------
def simple_encoder_stage(layers, rel_sorted, cid_sorted, num_clusters):
    """SimpleRelativeEncoder: per-point MLP + per-cluster max pool, fused."""
    (w1, b1), (w2, b2), (w3, b3) = layers
    n = rel_sorted.shape[0]
    tile_n, sub_n = _stage_tiles(n)
    relp, _, cidp, lo, hi, ntiles = _pad_inputs(rel_sorted, None, cid_sorted, tile_n, sub_n)
    tiles_per_core = ntiles // NUM_CORE_SLICES
    mpad = _round_up(num_clusters, 8)
    c_out = w3.shape[1]

    kernel = functools.partial(_simple_fused_kernel, tile_n=tile_n, sub_n=sub_n,
                               tiles_per_core=tiles_per_core)
    row_map = lambda c, i, lo, hi: (c * tiles_per_core + i, 0)
    out = pl.pallas_call(
        kernel,
        out_shape=jax.ShapeDtypeStruct((NUM_CORE_SLICES * mpad, c_out), jnp.float32),
        grid_spec=pltpu.PrefetchScalarGridSpec(
            num_scalar_prefetch=2,
            grid=(NUM_CORE_SLICES, tiles_per_core),
            in_specs=[pl.BlockSpec((tile_n, 3), row_map),
                      pl.BlockSpec((tile_n, 1), row_map),
                      _weight_spec(w1), _weight_spec(b1),
                      _weight_spec(w2), _weight_spec(b2),
                      _weight_spec(w3), _weight_spec(b3)],
            out_specs=pl.BlockSpec((mpad, c_out), lambda c, i, lo, hi: (c, 0)),
        ),
        compiler_params=pltpu.CompilerParams(
            dimension_semantics=("parallel", "arbitrary"),
            vmem_limit_bytes=VMEM_LIMIT),
    )(lo, hi, relp, cidp, w1, b1, w2, b2, w3, b3)
    return _finish_pool(out, mpad)                                 # (mpad, c_out) f32


def middle_encoder_stage(p, rel_sorted, feats_sorted, cid_sorted, num_clusters):
    """MiddleLayerEncoder: rel-MLP + mix layer + per-cluster max pool of both the encoding
    and the pass-through feats, fused.  Returns pooled [encoding | feats] (mpad, Cout+Fin)."""
    (w1, b1), (w2, b2), (w3, b3) = p["rel_mlp"]
    wm, bm = p["mix"]
    n = rel_sorted.shape[0]
    f_in = feats_sorted.shape[1]
    c_out = wm.shape[1]
    tile_n, sub_n = _stage_tiles(n)
    relp, featp, cidp, lo, hi, ntiles = _pad_inputs(rel_sorted, feats_sorted, cid_sorted,
                                                    tile_n, sub_n)
    tiles_per_core = ntiles // NUM_CORE_SLICES
    mpad = _round_up(num_clusters, 8)

    kernel = functools.partial(_middle_fused_kernel, tile_n=tile_n, sub_n=sub_n,
                               tiles_per_core=tiles_per_core)
    row_map = lambda c, i, lo, hi: (c * tiles_per_core + i, 0)
    out_map = lambda c, i, lo, hi: (c, 0)
    enc, feat = pl.pallas_call(
        kernel,
        out_shape=(jax.ShapeDtypeStruct((NUM_CORE_SLICES * mpad, c_out), jnp.float32),
                   jax.ShapeDtypeStruct((NUM_CORE_SLICES * mpad, f_in), jnp.float32)),
        grid_spec=pltpu.PrefetchScalarGridSpec(
            num_scalar_prefetch=2,
            grid=(NUM_CORE_SLICES, tiles_per_core),
            in_specs=[pl.BlockSpec((tile_n, 3), row_map),
                      pl.BlockSpec((tile_n, f_in), row_map),
                      pl.BlockSpec((tile_n, 1), row_map),
                      _weight_spec(w1), _weight_spec(b1),
                      _weight_spec(w2), _weight_spec(b2),
                      _weight_spec(w3), _weight_spec(b3),
                      _weight_spec(wm), _weight_spec(bm)],
            out_specs=(pl.BlockSpec((mpad, c_out), out_map),
                       pl.BlockSpec((mpad, f_in), out_map)),
        ),
        compiler_params=pltpu.CompilerParams(
            dimension_semantics=("parallel", "arbitrary"),
            vmem_limit_bytes=VMEM_LIMIT),
    )(lo, hi, relp, featp, cidp, w1, b1, w2, b2, w3, b3, wm, bm)
    enc = _finish_pool(enc, mpad)
    feat = _finish_pool(feat, mpad)
    return jnp.concatenate([enc, feat], axis=1)                   # (mpad, c_out + f_in) f32


# ---------------------------------------------------------------------------
# Parameter init (deterministic, in-script). Weights bf16, biases f32 (1, C).
# ---------------------------------------------------------------------------
def _init_linear(key, fan_in, fan_out):
    kw, kb = jax.random.split(key)
    w = (jax.random.normal(kw, (fan_in, fan_out), jnp.float32)
         / jnp.sqrt(float(fan_in))).astype(jnp.bfloat16)
    b = 0.01 * jax.random.normal(kb, (1, fan_out), jnp.float32)
    return w, b


def _init_mlp(key, dims):
    keys = jax.random.split(key, len(dims) - 1)
    return [_init_linear(k, di, do) for k, di, do in zip(keys, dims[:-1], dims[1:])]


def _init_mix(key, f_rel, f_in, f_out):
    # Stacked mix weight for the single [r | f] @ W matmul.
    return _init_linear(key, f_rel + f_in, f_out)


def init_full_encoder(key):
    k1, k2a, k2b, k3a, k3b = jax.random.split(key, 5)
    return {
        # SimpleRelativeEncoder(80, 40, nb_feats_out=20)
        "enc1": {"mlp": _init_mlp(k1, [3, 80, 40, NB_FEATS1])},
        # MiddleLayerEncoder(nb_feats_neighb=20, nb_feats_in=20, nb_feats_out=30)
        "enc2": {"rel_mlp": _init_mlp(k2a, [3, 80, 40, NB_FEATS1]),
                 "mix": _init_mix(k2b, NB_FEATS1, NB_FEATS1, NB_FEATS2)},
        # MiddleLayerEncoder(nb_feats_neighb=20, nb_feats_in=50, nb_feats_out=80)
        "enc3": {"rel_mlp": _init_mlp(k3a, [3, 80, 40, NB_FEATS1]),
                 "mix": _init_mix(k3b, NB_FEATS1, NB_FEATS1 + NB_FEATS2, NB_FEATS3)},
    }


# ---------------------------------------------------------------------------
# Model forward (sort/gather glue in XLA, fused MLP+pooling in Pallas)
# ---------------------------------------------------------------------------
def full_encoder_forward(params, relatives, cluster, num_clusters1,
                         relatives2, indices2, cluster2, num_clusters2,
                         relatives3, cluster3, num_clusters3):
    # ---- enc1: SimpleRelativeEncoder --------------------------------------
    order1 = jnp.argsort(cluster)                      # sort points by cluster id so the
    c1 = cluster[order1].astype(jnp.int32)             # fused pooling sees contiguous ranges
    rel1 = relatives[order1].astype(jnp.float32)
    feats1 = simple_encoder_stage(params["enc1"]["mlp"], rel1, c1, num_clusters1)  # (M1pad,20)

    # ---- enc2: MiddleLayerEncoder ------------------------------------------
    order2 = jnp.argsort(cluster2)
    c2 = cluster2[order2].astype(jnp.int32)
    rel2 = relatives2[order2].astype(jnp.float32)
    f2 = feats1[indices2[order2]].astype(jnp.bfloat16)           # gather composed with sort
    concat = middle_encoder_stage(params["enc2"], rel2, f2, c2, num_clusters2)      # (M2pad,50)

    # ---- enc3: MiddleLayerEncoder ------------------------------------------
    order3 = jnp.argsort(cluster3)
    c3 = cluster3[order3].astype(jnp.int32)
    rel3 = relatives3[order3].astype(jnp.float32)
    f3 = concat[order3].astype(jnp.bfloat16)
    concat2 = middle_encoder_stage(params["enc3"], rel3, f3, c3, num_clusters3)     # (M3pad,130)
    return concat2[:num_clusters3]                                                  # (M3, 130)


# ---------------------------------------------------------------------------
if __name__ == "__main__":
    key = jax.random.PRNGKey(0)
    k = jax.random.split(key, 8)

    N1, M1 = 64, 16      # level-1 points / clusters
    N2, M2 = 32, 8       # level-2 points / clusters
    N3, M3 = M2, 4       # level-3 points == level-2 clusters

    relatives = jax.random.normal(k[0], (N1, 3), jnp.float32)
    cluster = jax.random.permutation(k[1], jnp.arange(N1, dtype=jnp.int32) % M1)
    relatives2 = jax.random.normal(k[2], (N2, 3), jnp.float32)
    indices2 = jax.random.randint(k[3], (N2,), 0, M1, dtype=jnp.int32)
    cluster2 = jax.random.permutation(k[4], jnp.arange(N2, dtype=jnp.int32) % M2)
    relatives3 = jax.random.normal(k[5], (N3, 3), jnp.float32)
    cluster3 = jax.random.permutation(k[6], jnp.arange(N3, dtype=jnp.int32) % M3)

    params = init_full_encoder(jax.random.PRNGKey(1))

    @jax.jit
    def run(relatives, cluster, relatives2, indices2, cluster2, relatives3, cluster3):
        return full_encoder_forward(
            params,
            relatives, cluster, M1,
            relatives2, indices2, cluster2, M2,
            relatives3, cluster3, M3,
        )

    out = run(relatives, cluster, relatives2, indices2, cluster2, relatives3, cluster3)
    out = jax.block_until_ready(out)

    expected = (M3, NB_FEATS3 + NB_FEATS1 + NB_FEATS2)   # (4, 130)
    assert out.shape == expected, (out.shape, expected)
    assert bool(jnp.all(jnp.isfinite(out)))
    print("KERNEL_OK")
</pallas_src>

<mosaic_0001>
module attributes {stable_mosaic.version = 11 : i64} {
  func.func @_simple_fused_kernel(%arg0: i32, %arg1: i32, %arg2: memref<2xi32, #tpu.memory_space<smem>>, %arg3: memref<2xi32, #tpu.memory_space<smem>>, %arg4: memref<64x3xf32, #tpu.memory_space<vmem>>, %arg5: memref<64x1xi32, #tpu.memory_space<vmem>>, %arg6: memref<3x80xbf16, #tpu.memory_space<vmem>>, %arg7: memref<1x80xf32, #tpu.memory_space<vmem>>, %arg8: memref<80x40xbf16, #tpu.memory_space<vmem>>, %arg9: memref<1x40xf32, #tpu.memory_space<vmem>>, %arg10: memref<40x20xbf16, #tpu.memory_space<vmem>>, %arg11: memref<1x20xf32, #tpu.memory_space<vmem>>, %arg12: memref<16x20xf32, #tpu.memory_space<vmem>>) attributes {dimension_semantics = [#tpu.dimension_semantics<parallel>, #tpu.dimension_semantics<arbitrary>], iteration_bounds = array<i64: 2, 1>, scalar_prefetch = 2 : i64, scratch_operands = 0 : i64, tpu.core_type = #tpu.core_type<tc>, window_params = [{transform_indices = @transform_0, window_bounds = array<i64: 64, 3>}, {transform_indices = @transform_1, window_bounds = array<i64: 64, 1>}, {pipeline_mode = #tpu.pipeline_mode<synchronous>, transform_indices = @transform_2, window_bounds = array<i64: 3, 80>}, {pipeline_mode = #tpu.pipeline_mode<synchronous>, transform_indices = @transform_3, window_bounds = array<i64: 1, 80>}, {pipeline_mode = #tpu.pipeline_mode<synchronous>, transform_indices = @transform_4, window_bounds = array<i64: 80, 40>}, {pipeline_mode = #tpu.pipeline_mode<synchronous>, transform_indices = @transform_5, window_bounds = array<i64: 1, 40>}, {pipeline_mode = #tpu.pipeline_mode<synchronous>, transform_indices = @transform_6, window_bounds = array<i64: 40, 20>}, {pipeline_mode = #tpu.pipeline_mode<synchronous>, transform_indices = @transform_7, window_bounds = array<i64: 1, 20>}, {transform_indices = @transform_8, window_bounds = array<i64: 16, 20>}]} {
    %c0_i32 = arith.constant 0 : i32
    %0 = arith.cmpi eq, %arg1, %c0_i32 : i32
    %1 = arith.extui %0 : i1 to i32
    %c0_i32_0 = arith.constant 0 : i32
    %2 = arith.cmpi ne, %1, %c0_i32_0 : i32
    scf.if %2 {
      %cst_33 = arith.constant -3.000000e+38 : f32
      %82 = vector.broadcast %cst_33 : f32 to vector<16x20xf32>
      %c0_34 = arith.constant 0 : index
      %c0_35 = arith.constant 0 : index
      %83 = vector.load %arg12[%c0_34, %c0_35] : memref<16x20xf32, #tpu.memory_space<vmem>>, vector<16x20xf32>
      tpu.vector_store %arg12[%c0_34, %c0_35], %82 {strides = array<i32>} : memref<16x20xf32, #tpu.memory_space<vmem>>, vector<16x20xf32>,
    } else {
    }
    %c0 = arith.constant 0 : index
    %c0_1 = arith.constant 0 : index
    %3 = vector.load %arg4[%c0, %c0_1] : memref<64x3xf32, #tpu.memory_space<vmem>>, vector<64x3xf32>
    %c0_2 = arith.constant 0 : index
    %c0_3 = arith.constant 0 : index
    %4 = vector.load %arg6[%c0_2, %c0_3] : memref<3x80xbf16, #tpu.memory_space<vmem>>, vector<3x80xbf16>
    %5 = arith.extf %4 : vector<3x80xbf16> to vector<3x80xf32>
    %6 = vector.extract_strided_slice %3 {offsets = [0, 0], sizes = [64, 1], strides = [1, 1]} : vector<64x3xf32> to vector<64x1xf32>
    %7 = vector.extract_strided_slice %5 {offsets = [0, 0], sizes = [1, 80], strides = [1, 1]} : vector<3x80xf32> to vector<1x80xf32>
    %8 = vector.broadcast %6 : vector<64x1xf32> to vector<64x80xf32>
    %9 = vector.broadcast %7 : vector<1x80xf32> to vector<64x80xf32>
    %10 = arith.mulf %8, %9 : vector<64x80xf32>
    %11 = vector.extract_strided_slice %3 {offsets = [0, 1], sizes = [64, 1], strides = [1, 1]} : vector<64x3xf32> to vector<64x1xf32>
    %12 = vector.extract_strided_slice %5 {offsets = [1, 0], sizes = [1, 80], strides = [1, 1]} : vector<3x80xf32> to vector<1x80xf32>
    %13 = vector.broadcast %11 : vector<64x1xf32> to vector<64x80xf32>
    %14 = vector.broadcast %12 : vector<1x80xf32> to vector<64x80xf32>
    %15 = arith.mulf %13, %14 : vector<64x80xf32>
    %16 = arith.addf %10, %15 : vector<64x80xf32>
    %17 = vector.extract_strided_slice %3 {offsets = [0, 2], sizes = [64, 1], strides = [1, 1]} : vector<64x3xf32> to vector<64x1xf32>
    %18 = vector.extract_strided_slice %5 {offsets = [2, 0], sizes = [1, 80], strides = [1, 1]} : vector<3x80xf32> to vector<1x80xf32>
    %19 = vector.broadcast %17 : vector<64x1xf32> to vector<64x80xf32>
    %20 = vector.broadcast %18 : vector<1x80xf32> to vector<64x80xf32>
    %21 = arith.mulf %19, %20 : vector<64x80xf32>
    %22 = arith.addf %16, %21 : vector<64x80xf32>
    %c0_4 = arith.constant 0 : index
    %c0_5 = arith.constant 0 : index
    %23 = vector.load %arg7[%c0_4, %c0_5] : memref<1x80xf32, #tpu.memory_space<vmem>>, vector<1x80xf32>
    %24 = vector.broadcast %23 : vector<1x80xf32> to vector<64x80xf32>
    %25 = arith.addf %22, %24 : vector<64x80xf32>
    %cst = arith.constant 0.000000e+00 : f32
    %26 = vector.broadcast %cst : f32 to vector<64x80xf32>
    %27 = arith.maximumf %25, %26 : vector<64x80xf32>
    %28 = arith.truncf %27 : vector<64x80xf32> to vector<64x80xbf16>
    %c0_6 = arith.constant 0 : index
    %c0_7 = arith.constant 0 : index
    %29 = vector.load %arg8[%c0_6, %c0_7] : memref<80x40xbf16, #tpu.memory_space<vmem>>, vector<80x40xbf16>
    %cst_8 = arith.constant dense<0.000000e+00> : vector<64x40xf32>
    %30 = tpu.matmul %28, %29, %cst_8 {dimension_numbers = #tpu.dot_dimension_numbers<[1], [0], [0], [1], [0, 0, 1, 1], [], []>} : vector<64x80xbf16>, vector<80x40xbf16>, vector<64x40xf32> -> vector<64x40xf32>
    %c0_9 = arith.constant 0 : index
    %c0_10 = arith.constant 0 : index
    %31 = vector.load %arg9[%c0_9, %c0_10] : memref<1x40xf32, #tpu.memory_space<vmem>>, vector<1x40xf32>
    %32 = vector.broadcast %31 : vector<1x40xf32> to vector<64x40xf32>
    %33 = arith.addf %30, %32 : vector<64x40xf32>
    %cst_11 = arith.constant 0.000000e+00 : f32
    %34 = vector.broadcast %cst_11 : f32 to vector<64x40xf32>
    %35 = arith.maximumf %33, %34 : vector<64x40xf32>
    %36 = arith.truncf %35 : vector<64x40xf32> to vector<64x40xbf16>
    %c0_12 = arith.constant 0 : index
    %c0_13 = arith.constant 0 : index
    %37 = vector.load %arg10[%c0_12, %c0_13] : memref<40x20xbf16, #tpu.memory_space<vmem>>, vector<40x20xbf16>
    %cst_14 = arith.constant dense<0.000000e+00> : vector<64x20xf32>
    %38 = tpu.matmul %36, %37, %cst_14 {dimension_numbers = #tpu.dot_dimension_numbers<[1], [0], [0], [1], [0, 0, 1, 1], [], []>} : vector<64x40xbf16>, vector<40x20xbf16>, vector<64x20xf32> -> vector<64x20xf32>
    %c0_15 = arith.constant 0 : index
    %c0_16 = arith.constant 0 : index
    %39 = vector.load %arg11[%c0_15, %c0_16] : memref<1x20xf32, #tpu.memory_space<vmem>>, vector<1x20xf32>
    %40 = vector.broadcast %39 : vector<1x20xf32> to vector<64x20xf32>
    %41 = arith.addf %38, %40 : vector<64x20xf32>
    %cst_17 = arith.constant 0.000000e+00 : f32
    %42 = vector.broadcast %cst_17 : f32 to vector<64x20xf32>
    %43 = arith.maximumf %41, %42 : vector<64x20xf32>
    %c0_18 = arith.constant 0 : index
    %c0_19 = arith.constant 0 : index
    %44 = vector.load %arg5[%c0_18, %c0_19] : memref<64x1xi32, #tpu.memory_space<vmem>>, vector<64x1xi32>
    %c1_i32 = arith.constant 1 : i32
    %45 = arith.muli %arg0, %c1_i32 : i32
    %46 = arith.addi %45, %arg1 : i32
    %c1_i32_20 = arith.constant 1 : i32
    %47 = arith.muli %46, %c1_i32_20 : i32
    %c0_i32_21 = arith.constant 0 : i32
    %48 = arith.addi %47, %c0_i32_21 : i32
    %49 = arith.index_cast %48 : i32 to index
    %50 = memref.load %arg2[%49] : memref<2xi32, #tpu.memory_space<smem>>
    %51 = arith.index_cast %48 : i32 to index
    %52 = memref.load %arg3[%51] : memref<2xi32, #tpu.memory_space<smem>>
    %c1_i32_22 = arith.constant 1 : i32
    %53 = arith.addi %50, %c1_i32_22 : i32
    %c0_i32_23 = arith.constant 0 : i32
    %54 = arith.subi %52, %53 : i32
    %55 = arith.addi %53, %54 : i32
    %c1_i32_24 = arith.constant 1 : i32
    scf.for %arg13 = %53 to %55 step %c1_i32_24  : i32 {
      %82 = vector.broadcast %arg13 : i32 to vector<64x1xi32>
      %83 = arith.cmpi eq, %44, %82 : vector<64x1xi32>
      %cst_33 = arith.constant -3.000000e+38 : f32
      %84 = vector.shape_cast %83 : vector<64x1xi1> to vector<64x1xi1>
      %85 = vector.broadcast %84 : vector<64x1xi1> to vector<64x20xi1>
      %86 = vector.broadcast %cst_33 : f32 to vector<64x20xf32>
      %87 = arith.select %85, %43, %86 : vector<64x20xi1>, vector<64x20xf32>
      %cst_34 = arith.constant dense<0xFF800000> : vector<20xf32>
      %88 = vector.multi_reduction <maximumf>, %87, %cst_34 [0] : vector<64x20xf32> to vector<20xf32>
      %89 = vector.shape_cast %88 : vector<20xf32> to vector<1x20xf32>
      %90 = arith.index_cast %arg13 : i32 to index
      %c0_35 = arith.constant 0 : index
      %91 = vector.load %arg12[%90, %c0_35] : memref<16x20xf32, #tpu.memory_space<vmem>>, vector<1x20xf32>
      tpu.vector_store %arg12[%90, %c0_35], %89 {strides = array<i32>} : memref<16x20xf32, #tpu.memory_space<vmem>>, vector<1x20xf32>,
    }
    %56 = arith.index_cast %50 : i32 to index
    %c0_25 = arith.constant 0 : index
    %57 = vector.load %arg12[%56, %c0_25] : memref<16x20xf32, #tpu.memory_space<vmem>>, vector<1x20xf32>
    %58 = vector.broadcast %50 : i32 to vector<64x1xi32>
    %59 = arith.cmpi eq, %44, %58 : vector<64x1xi32>
    %cst_26 = arith.constant -3.000000e+38 : f32
    %60 = vector.shape_cast %59 : vector<64x1xi1> to vector<64x1xi1>
    %61 = vector.broadcast %60 : vector<64x1xi1> to vector<64x20xi1>
    %62 = vector.broadcast %cst_26 : f32 to vector<64x20xf32>
    %63 = arith.select %61, %43, %62 : vector<64x20xi1>, vector<64x20xf32>
    %cst_27 = arith.constant dense<0xFF800000> : vector<20xf32>
    %64 = vector.multi_reduction <maximumf>, %63, %cst_27 [0] : vector<64x20xf32> to vector<20xf32>
    %65 = vector.shape_cast %64 : vector<20xf32> to vector<1x20xf32>
    %66 = arith.maximumf %57, %65 : vector<1x20xf32>
    %67 = arith.index_cast %50 : i32 to index
    %c0_28 = arith.constant 0 : index
    %68 = vector.load %arg12[%67, %c0_28] : memref<16x20xf32, #tpu.memory_space<vmem>>, vector<1x20xf32>
    tpu.vector_store %arg12[%67, %c0_28], %66 {strides = array<i32>} : memref<16x20xf32, #tpu.memory_space<vmem>>, vector<1x20xf32>,
    %69 = arith.index_cast %52 : i32 to index
    %c0_29 = arith.constant 0 : index
    %70 = vector.load %arg12[%69, %c0_29] : memref<16x20xf32, #tpu.memory_space<vmem>>, vector<1x20xf32>
    %71 = vector.broadcast %52 : i32 to vector<64x1xi32>
    %72 = arith.cmpi eq, %44, %71 : vector<64x1xi32>
    %cst_30 = arith.constant -3.000000e+38 : f32
    %73 = vector.shape_cast %72 : vector<64x1xi1> to vector<64x1xi1>
    %74 = vector.broadcast %73 : vector<64x1xi1> to vector<64x20xi1>
    %75 = vector.broadcast %cst_30 : f32 to vector<64x20xf32>
    %76 = arith.select %74, %43, %75 : vector<64x20xi1>, vector<64x20xf32>
    %cst_31 = arith.constant dense<0xFF800000> : vector<20xf32>
    %77 = vector.multi_reduction <maximumf>, %76, %cst_31 [0] : vector<64x20xf32> to vector<20xf32>
    %78 = vector.shape_cast %77 : vector<20xf32> to vector<1x20xf32>
    %79 = arith.maximumf %70, %78 : vector<1x20xf32>
    %80 = arith.index_cast %52 : i32 to index
    %c0_32 = arith.constant 0 : index
    %81 = vector.load %arg12[%80, %c0_32] : memref<16x20xf32, #tpu.memory_space<vmem>>, vector<1x20xf32>
    tpu.vector_store %arg12[%80, %c0_32], %79 {strides = array<i32>} : memref<16x20xf32, #tpu.memory_space<vmem>>, vector<1x20xf32>,
    return
  }
  func.func @transform_0(%arg0: i32, %arg1: i32, %arg2: memref<2xi32, #tpu.memory_space<smem>>, %arg3: memref<2xi32, #tpu.memory_space<smem>>) -> (i32, i32) {
    %c1_i32 = arith.constant 1 : i32
    %0 = arith.muli %arg0, %c1_i32 : i32
    %1 = arith.addi %0, %arg1 : i32
    %c0_i32 = arith.constant 0 : i32
    %c0_i32_0 = arith.constant 0 : i32
    return %1, %c0_i32 : i32, i32
  }
  func.func @transform_1(%arg0: i32, %arg1: i32, %arg2: memref<2xi32, #tpu.memory_space<smem>>, %arg3: memref<2xi32, #tpu.memory_space<smem>>) -> (i32, i32) {
    %c1_i32 = arith.constant 1 : i32
    %0 = arith.muli %arg0, %c1_i32 : i32
    %1 = arith.addi %0, %arg1 : i32
    %c0_i32 = arith.constant 0 : i32
    %c0_i32_0 = arith.constant 0 : i32
    return %1, %c0_i32 : i32, i32
  }
  func.func @transform_2(%arg0: i32, %arg1: i32, %arg2: memref<2xi32, #tpu.memory_space<smem>>, %arg3: memref<2xi32, #tpu.memory_space<smem>>) -> (i32, i32) {
    %c0_i32 = arith.constant 0 : i32
    %c0_i32_0 = arith.constant 0 : i32
    %c0_i32_1 = arith.constant 0 : i32
    return %c0_i32, %c0_i32_0 : i32, i32
  }
  func.func @transform_3(%arg0: i32, %arg1: i32, %arg2: memref<2xi32, #tpu.memory_space<smem>>, %arg3: memref<2xi32, #tpu.memory_space<smem>>) -> (i32, i32) {
    %c0_i32 = arith.constant 0 : i32
    %c0_i32_0 = arith.constant 0 : i32
    %c0_i32_1 = arith.constant 0 : i32
    return %c0_i32, %c0_i32_0 : i32, i32
  }
  func.func @transform_4(%arg0: i32, %arg1: i32, %arg2: memref<2xi32, #tpu.memory_space<smem>>, %arg3: memref<2xi32, #tpu.memory_space<smem>>) -> (i32, i32) {
    %c0_i32 = arith.constant 0 : i32
    %c0_i32_0 = arith.constant 0 : i32
    %c0_i32_1 = arith.constant 0 : i32
    return %c0_i32, %c0_i32_0 : i32, i32
  }
  func.func @transform_5(%arg0: i32, %arg1: i32, %arg2: memref<2xi32, #tpu.memory_space<smem>>, %arg3: memref<2xi32, #tpu.memory_space<smem>>) -> (i32, i32) {
    %c0_i32 = arith.constant 0 : i32
    %c0_i32_0 = arith.constant 0 : i32
    %c0_i32_1 = arith.constant 0 : i32
    return %c0_i32, %c0_i32_0 : i32, i32
  }
  func.func @transform_6(%arg0: i32, %arg1: i32, %arg2: memref<2xi32, #tpu.memory_space<smem>>, %arg3: memref<2xi32, #tpu.memory_space<smem>>) -> (i32, i32) {
    %c0_i32 = arith.constant 0 : i32
    %c0_i32_0 = arith.constant 0 : i32
    %c0_i32_1 = arith.constant 0 : i32
    return %c0_i32, %c0_i32_0 : i32, i32
  }
  func.func @transform_7(%arg0: i32, %arg1: i32, %arg2: memref<2xi32, #tpu.memory_space<smem>>, %arg3: memref<2xi32, #tpu.memory_space<smem>>) -> (i32, i32) {
    %c0_i32 = arith.constant 0 : i32
    %c0_i32_0 = arith.constant 0 : i32
    %c0_i32_1 = arith.constant 0 : i32
    return %c0_i32, %c0_i32_0 : i32, i32
  }
  func.func @transform_8(%arg0: i32, %arg1: i32, %arg2: memref<2xi32, #tpu.memory_space<smem>>, %arg3: memref<2xi32, #tpu.memory_space<smem>>) -> (i32, i32) {
    %c0_i32 = arith.constant 0 : i32
    %c0_i32_0 = arith.constant 0 : i32
    return %arg0, %c0_i32 : i32, i32
  }
}

module attributes {stable_mosaic.version = 11 : i64} {
  func.func @_middle_fused_kernel(%arg0: i32, %arg1: i32, %arg2: memref<2xi32, #tpu.memory_space<smem>>, %arg3: memref<2xi32, #tpu.memory_space<smem>>, %arg4: memref<32x3xf32, #tpu.memory_space<vmem>>, %arg5: memref<32x20xbf16, #tpu.memory_space<vmem>>, %arg6: memref<32x1xi32, #tpu.memory_space<vmem>>, %arg7: memref<3x80xbf16, #tpu.memory_space<vmem>>, %arg8: memref<1x80xf32, #tpu.memory_space<vmem>>, %arg9: memref<80x40xbf16, #tpu.memory_space<vmem>>, %arg10: memref<1x40xf32, #tpu.memory_space<vmem>>, %arg11: memref<40x20xbf16, #tpu.memory_space<vmem>>, %arg12: memref<1x20xf32, #tpu.memory_space<vmem>>, %arg13: memref<40x30xbf16, #tpu.memory_space<vmem>>, %arg14: memref<1x30xf32, #tpu.memory_space<vmem>>, %arg15: memref<8x30xf32, #tpu.memory_space<vmem>>, %arg16: memref<8x20xf32, #tpu.memory_space<vmem>>) attributes {dimension_semantics = [#tpu.dimension_semantics<parallel>, #tpu.dimension_semantics<arbitrary>], iteration_bounds = array<i64: 2, 1>, scalar_prefetch = 2 : i64, scratch_operands = 0 : i64, tpu.core_type = #tpu.core_type<tc>, window_params = [{transform_indices = @transform_0, window_bounds = array<i64: 32, 3>}, {transform_indices = @transform_1, window_bounds = array<i64: 32, 20>}, {transform_indices = @transform_2, window_bounds = array<i64: 32, 1>}, {pipeline_mode = #tpu.pipeline_mode<synchronous>, transform_indices = @transform_3, window_bounds = array<i64: 3, 80>}, {pipeline_mode = #tpu.pipeline_mode<synchronous>, transform_indices = @transform_4, window_bounds = array<i64: 1, 80>}, {pipeline_mode = #tpu.pipeline_mode<synchronous>, transform_indices = @transform_5, window_bounds = array<i64: 80, 40>}, {pipeline_mode = #tpu.pipeline_mode<synchronous>, transform_indices = @transform_6, window_bounds = array<i64: 1, 40>}, {pipeline_mode = #tpu.pipeline_mode<synchronous>, transform_indices = @transform_7, window_bounds = array<i64: 40, 20>}, {pipeline_mode = #tpu.pipeline_mode<synchronous>, transform_indices = @transform_8, window_bounds = array<i64: 1, 20>}, {pipeline_mode = #tpu.pipeline_mode<synchronous>, transform_indices = @transform_9, window_bounds = array<i64: 40, 30>}, {pipeline_mode = #tpu.pipeline_mode<synchronous>, transform_indices = @transform_10, window_bounds = array<i64: 1, 30>}, {transform_indices = @transform_11, window_bounds = array<i64: 8, 30>}, {transform_indices = @transform_12, window_bounds = array<i64: 8, 20>}]} {
    %c0_i32 = arith.constant 0 : i32
    %0 = arith.cmpi eq, %arg1, %c0_i32 : i32
    %1 = arith.extui %0 : i1 to i32
    %c0_i32_0 = arith.constant 0 : i32
    %2 = arith.cmpi ne, %1, %c0_i32_0 : i32
    scf.if %2 {
      %cst_49 = arith.constant -3.000000e+38 : f32
      %119 = vector.broadcast %cst_49 : f32 to vector<8x30xf32>
      %c0_50 = arith.constant 0 : index
      %c0_51 = arith.constant 0 : index
      %120 = vector.load %arg15[%c0_50, %c0_51] : memref<8x30xf32, #tpu.memory_space<vmem>>, vector<8x30xf32>
      tpu.vector_store %arg15[%c0_50, %c0_51], %119 {strides = array<i32>} : memref<8x30xf32, #tpu.memory_space<vmem>>, vector<8x30xf32>,
      %cst_52 = arith.constant -3.000000e+38 : f32
      %121 = vector.broadcast %cst_52 : f32 to vector<8x20xf32>
      %c0_53 = arith.constant 0 : index
      %c0_54 = arith.constant 0 : index
      %122 = vector.load %arg16[%c0_53, %c0_54] : memref<8x20xf32, #tpu.memory_space<vmem>>, vector<8x20xf32>
      tpu.vector_store %arg16[%c0_53, %c0_54], %121 {strides = array<i32>} : memref<8x20xf32, #tpu.memory_space<vmem>>, vector<8x20xf32>,
    } else {
    }
    %c0 = arith.constant 0 : index
    %c0_1 = arith.constant 0 : index
    %3 = vector.load %arg4[%c0, %c0_1] : memref<32x3xf32, #tpu.memory_space<vmem>>, vector<32x3xf32>
    %c0_2 = arith.constant 0 : index
    %c0_3 = arith.constant 0 : index
    %4 = vector.load %arg7[%c0_2, %c0_3] : memref<3x80xbf16, #tpu.memory_space<vmem>>, vector<3x80xbf16>
    %5 = arith.extf %4 : vector<3x80xbf16> to vector<3x80xf32>
    %6 = vector.extract_strided_slice %3 {offsets = [0, 0], sizes = [32, 1], strides = [1, 1]} : vector<32x3xf32> to vector<32x1xf32>
    %7 = vector.extract_strided_slice %5 {offsets = [0, 0], sizes = [1, 80], strides = [1, 1]} : vector<3x80xf32> to vector<1x80xf32>
    %8 = vector.broadcast %6 : vector<32x1xf32> to vector<32x80xf32>
    %9 = vector.broadcast %7 : vector<1x80xf32> to vector<32x80xf32>
    %10 = arith.mulf %8, %9 : vector<32x80xf32>
    %11 = vector.extract_strided_slice %3 {offsets = [0, 1], sizes = [32, 1], strides = [1, 1]} : vector<32x3xf32> to vector<32x1xf32>
    %12 = vector.extract_strided_slice %5 {offsets = [1, 0], sizes = [1, 80], strides = [1, 1]} : vector<3x80xf32> to vector<1x80xf32>
    %13 = vector.broadcast %11 : vector<32x1xf32> to vector<32x80xf32>
    %14 = vector.broadcast %12 : vector<1x80xf32> to vector<32x80xf32>
    %15 = arith.mulf %13, %14 : vector<32x80xf32>
    %16 = arith.addf %10, %15 : vector<32x80xf32>
    %17 = vector.extract_strided_slice %3 {offsets = [0, 2], sizes = [32, 1], strides = [1, 1]} : vector<32x3xf32> to vector<32x1xf32>
    %18 = vector.extract_strided_slice %5 {offsets = [2, 0], sizes = [1, 80], strides = [1, 1]} : vector<3x80xf32> to vector<1x80xf32>
    %19 = vector.broadcast %17 : vector<32x1xf32> to vector<32x80xf32>
    %20 = vector.broadcast %18 : vector<1x80xf32> to vector<32x80xf32>
    %21 = arith.mulf %19, %20 : vector<32x80xf32>
    %22 = arith.addf %16, %21 : vector<32x80xf32>
    %c0_4 = arith.constant 0 : index
    %c0_5 = arith.constant 0 : index
    %23 = vector.load %arg8[%c0_4, %c0_5] : memref<1x80xf32, #tpu.memory_space<vmem>>, vector<1x80xf32>
    %24 = vector.broadcast %23 : vector<1x80xf32> to vector<32x80xf32>
    %25 = arith.addf %22, %24 : vector<32x80xf32>
    %cst = arith.constant 0.000000e+00 : f32
    %26 = vector.broadcast %cst : f32 to vector<32x80xf32>
    %27 = arith.maximumf %25, %26 : vector<32x80xf32>
    %28 = arith.truncf %27 : vector<32x80xf32> to vector<32x80xbf16>
    %c0_6 = arith.constant 0 : index
    %c0_7 = arith.constant 0 : index
    %29 = vector.load %arg9[%c0_6, %c0_7] : memref<80x40xbf16, #tpu.memory_space<vmem>>, vector<80x40xbf16>
    %cst_8 = arith.constant dense<0.000000e+00> : vector<32x40xf32>
    %30 = tpu.matmul %28, %29, %cst_8 {dimension_numbers = #tpu.dot_dimension_numbers<[1], [0], [0], [1], [0, 0, 1, 1], [], []>} : vector<32x80xbf16>, vector<80x40xbf16>, vector<32x40xf32> -> vector<32x40xf32>
    %c0_9 = arith.constant 0 : index
    %c0_10 = arith.constant 0 : index
    %31 = vector.load %arg10[%c0_9, %c0_10] : memref<1x40xf32, #tpu.memory_space<vmem>>, vector<1x40xf32>
    %32 = vector.broadcast %31 : vector<1x40xf32> to vector<32x40xf32>
    %33 = arith.addf %30, %32 : vector<32x40xf32>
    %cst_11 = arith.constant 0.000000e+00 : f32
    %34 = vector.broadcast %cst_11 : f32 to vector<32x40xf32>
    %35 = arith.maximumf %33, %34 : vector<32x40xf32>
    %36 = arith.truncf %35 : vector<32x40xf32> to vector<32x40xbf16>
    %c0_12 = arith.constant 0 : index
    %c0_13 = arith.constant 0 : index
    %37 = vector.load %arg11[%c0_12, %c0_13] : memref<40x20xbf16, #tpu.memory_space<vmem>>, vector<40x20xbf16>
    %cst_14 = arith.constant dense<0.000000e+00> : vector<32x20xf32>
    %38 = tpu.matmul %36, %37, %cst_14 {dimension_numbers = #tpu.dot_dimension_numbers<[1], [0], [0], [1], [0, 0, 1, 1], [], []>} : vector<32x40xbf16>, vector<40x20xbf16>, vector<32x20xf32> -> vector<32x20xf32>
    %c0_15 = arith.constant 0 : index
    %c0_16 = arith.constant 0 : index
    %39 = vector.load %arg12[%c0_15, %c0_16] : memref<1x20xf32, #tpu.memory_space<vmem>>, vector<1x20xf32>
    %40 = vector.broadcast %39 : vector<1x20xf32> to vector<32x20xf32>
    %41 = arith.addf %38, %40 : vector<32x20xf32>
    %cst_17 = arith.constant 0.000000e+00 : f32
    %42 = vector.broadcast %cst_17 : f32 to vector<32x20xf32>
    %43 = arith.maximumf %41, %42 : vector<32x20xf32>
    %c0_18 = arith.constant 0 : index
    %c0_19 = arith.constant 0 : index
    %44 = vector.load %arg5[%c0_18, %c0_19] : memref<32x20xbf16, #tpu.memory_space<vmem>>, vector<32x20xbf16>
    %45 = arith.truncf %43 : vector<32x20xf32> to vector<32x20xbf16>
    %46 = tpu.concatenate %45, %44 in 1 : vector<32x20xbf16>, vector<32x20xbf16> -> vector<32x40xbf16>
    %c0_20 = arith.constant 0 : index
    %c0_21 = arith.constant 0 : index
    %47 = vector.load %arg13[%c0_20, %c0_21] : memref<40x30xbf16, #tpu.memory_space<vmem>>, vector<40x30xbf16>
    %cst_22 = arith.constant dense<0.000000e+00> : vector<32x30xf32>
    %48 = tpu.matmul %46, %47, %cst_22 {dimension_numbers = #tpu.dot_dimension_numbers<[1], [0], [0], [1], [0, 0, 1, 1], [], []>} : vector<32x40xbf16>, vector<40x30xbf16>, vector<32x30xf32> -> vector<32x30xf32>
    %c0_23 = arith.constant 0 : index
    %c0_24 = arith.constant 0 : index
    %49 = vector.load %arg14[%c0_23, %c0_24] : memref<1x30xf32, #tpu.memory_space<vmem>>, vector<1x30xf32>
    %50 = vector.broadcast %49 : vector<1x30xf32> to vector<32x30xf32>
    %51 = arith.addf %48, %50 : vector<32x30xf32>
    %cst_25 = arith.constant 0.000000e+00 : f32
    %52 = vector.broadcast %cst_25 : f32 to vector<32x30xf32>
    %53 = arith.maximumf %51, %52 : vector<32x30xf32>
    %54 = arith.extf %44 : vector<32x20xbf16> to vector<32x20xf32>
    %c0_26 = arith.constant 0 : index
    %c0_27 = arith.constant 0 : index
    %55 = vector.load %arg6[%c0_26, %c0_27] : memref<32x1xi32, #tpu.memory_space<vmem>>, vector<32x1xi32>
    %c1_i32 = arith.constant 1 : i32
    %56 = arith.muli %arg0, %c1_i32 : i32
    %57 = arith.addi %56, %arg1 : i32
    %c1_i32_28 = arith.constant 1 : i32
    %58 = arith.muli %57, %c1_i32_28 : i32
    %c0_i32_29 = arith.constant 0 : i32
    %59 = arith.addi %58, %c0_i32_29 : i32
    %60 = arith.index_cast %59 : i32 to index
    %61 = memref.load %arg2[%60] : memref<2xi32, #tpu.memory_space<smem>>
    %62 = arith.index_cast %59 : i32 to index
    %63 = memref.load %arg3[%62] : memref<2xi32, #tpu.memory_space<smem>>
    %c1_i32_30 = arith.constant 1 : i32
    %64 = arith.addi %61, %c1_i32_30 : i32
    %c0_i32_31 = arith.constant 0 : i32
    %65 = arith.subi %63, %64 : i32
    %66 = arith.addi %64, %65 : i32
    %c1_i32_32 = arith.constant 1 : i32
    scf.for %arg17 = %64 to %66 step %c1_i32_32  : i32 {
      %119 = vector.broadcast %arg17 : i32 to vector<32x1xi32>
      %120 = arith.cmpi eq, %55, %119 : vector<32x1xi32>
      %cst_49 = arith.constant -3.000000e+38 : f32
      %121 = vector.shape_cast %120 : vector<32x1xi1> to vector<32x1xi1>
      %122 = vector.broadcast %121 : vector<32x1xi1> to vector<32x30xi1>
      %123 = vector.broadcast %cst_49 : f32 to vector<32x30xf32>
      %124 = arith.select %122, %53, %123 : vector<32x30xi1>, vector<32x30xf32>
      %cst_50 = arith.constant dense<0xFF800000> : vector<30xf32>
      %125 = vector.multi_reduction <maximumf>, %124, %cst_50 [0] : vector<32x30xf32> to vector<30xf32>
      %126 = vector.shape_cast %125 : vector<30xf32> to vector<1x30xf32>
      %127 = arith.index_cast %arg17 : i32 to index
      %c0_51 = arith.constant 0 : index
      %128 = vector.load %arg15[%127, %c0_51] : memref<8x30xf32, #tpu.memory_space<vmem>>, vector<1x30xf32>
      tpu.vector_store %arg15[%127, %c0_51], %126 {strides = array<i32>} : memref<8x30xf32, #tpu.memory_space<vmem>>, vector<1x30xf32>,
      %129 = vector.broadcast %arg17 : i32 to vector<32x1xi32>
      %130 = arith.cmpi eq, %55, %129 : vector<32x1xi32>
      %cst_52 = arith.constant -3.000000e+38 : f32
      %131 = vector.shape_cast %130 : vector<32x1xi1> to vector<32x1xi1>
      %132 = vector.broadcast %131 : vector<32x1xi1> to vector<32x20xi1>
      %133 = vector.broadcast %cst_52 : f32 to vector<32x20xf32>
      %134 = arith.select %132, %54, %133 : vector<32x20xi1>, vector<32x20xf32>
      %cst_53 = arith.constant dense<0xFF800000> : vector<20xf32>
      %135 = vector.multi_reduction <maximumf>, %134, %cst_53 [0] : vector<32x20xf32> to vector<20xf32>
      %136 = vector.shape_cast %135 : vector<20xf32> to vector<1x20xf32>
      %137 = arith.index_cast %arg17 : i32 to index
      %c0_54 = arith.constant 0 : index
      %138 = vector.load %arg16[%137, %c0_54] : memref<8x20xf32, #tpu.memory_space<vmem>>, vector<1x20xf32>
      tpu.vector_store %arg16[%137, %c0_54], %136 {strides = array<i32>} : memref<8x20xf32, #tpu.memory_space<vmem>>, vector<1x20xf32>,
    }
    %67 = arith.index_cast %61 : i32 to index
    %c0_33 = arith.constant 0 : index
    %68 = vector.load %arg15[%67, %c0_33] : memref<8x30xf32, #tpu.memory_space<vmem>>, vector<1x30xf32>
    %69 = vector.broadcast %61 : i32 to vector<32x1xi32>
    %70 = arith.cmpi eq, %55, %69 : vector<32x1xi32>
    %cst_34 = arith.constant -3.000000e+38 : f32
    %71 = vector.shape_cast %70 : vector<32x1xi1> to vector<32x1xi1>
    %72 = vector.broadcast %71 : vector<32x1xi1> to vector<32x30xi1>
    %73 = vector.broadcast %cst_34 : f32 to vector<32x30xf32>
    %74 = arith.select %72, %53, %73 : vector<32x30xi1>, vector<32x30xf32>
    %cst_35 = arith.constant dense<0xFF800000> : vector<30xf32>
    %75 = vector.multi_reduction <maximumf>, %74, %cst_35 [0] : vector<32x30xf32> to vector<30xf32>
    %76 = vector.shape_cast %75 : vector<30xf32> to vector<1x30xf32>
    %77 = arith.maximumf %68, %76 : vector<1x30xf32>
    %78 = arith.index_cast %61 : i32 to index
    %c0_36 = arith.constant 0 : index
    %79 = vector.load %arg15[%78, %c0_36] : memref<8x30xf32, #tpu.memory_space<vmem>>, vector<1x30xf32>
    tpu.vector_store %arg15[%78, %c0_36], %77 {strides = array<i32>} : memref<8x30xf32, #tpu.memory_space<vmem>>, vector<1x30xf32>,
    %80 = arith.index_cast %61 : i32 to index
    %c0_37 = arith.constant 0 : index
    %81 = vector.load %arg16[%80, %c0_37] : memref<8x20xf32, #tpu.memory_space<vmem>>, vector<1x20xf32>
    %82 = vector.broadcast %61 : i32 to vector<32x1xi32>
    %83 = arith.cmpi eq, %55, %82 : vector<32x1xi32>
    %cst_38 = arith.constant -3.000000e+38 : f32
    %84 = vector.shape_cast %83 : vector<32x1xi1> to vector<32x1xi1>
    %85 = vector.broadcast %84 : vector<32x1xi1> to vector<32x20xi1>
    %86 = vector.broadcast %cst_38 : f32 to vector<32x20xf32>
    %87 = arith.select %85, %54, %86 : vector<32x20xi1>, vector<32x20xf32>
    %cst_39 = arith.constant dense<0xFF800000> : vector<20xf32>
    %88 = vector.multi_reduction <maximumf>, %87, %cst_39 [0] : vector<32x20xf32> to vector<20xf32>
    %89 = vector.shape_cast %88 : vector<20xf32> to vector<1x20xf32>
    %90 = arith.maximumf %81, %89 : vector<1x20xf32>
    %91 = arith.index_cast %61 : i32 to index
    %c0_40 = arith.constant 0 : index
    %92 = vector.load %arg16[%91, %c0_40] : memref<8x20xf32, #tpu.memory_space<vmem>>, vector<1x20xf32>
    tpu.vector_store %arg16[%91, %c0_40], %90 {strides = array<i32>} : memref<8x20xf32, #tpu.memory_space<vmem>>, vector<1x20xf32>,
    %93 = arith.index_cast %63 : i32 to index
    %c0_41 = arith.constant 0 : index
    %94 = vector.load %arg15[%93, %c0_41] : memref<8x30xf32, #tpu.memory_space<vmem>>, vector<1x30xf32>
    %95 = vector.broadcast %63 : i32 to vector<32x1xi32>
    %96 = arith.cmpi eq, %55, %95 : vector<32x1xi32>
    %cst_42 = arith.constant -3.000000e+38 : f32
    %97 = vector.shape_cast %96 : vector<32x1xi1> to vector<32x1xi1>
    %98 = vector.broadcast %97 : vector<32x1xi1> to vector<32x30xi1>
    %99 = vector.broadcast %cst_42 : f32 to vector<32x30xf32>
    %100 = arith.select %98, %53, %99 : vector<32x30xi1>, vector<32x30xf32>
    %cst_43 = arith.constant dense<0xFF800000> : vector<30xf32>
    %101 = vector.multi_reduction <maximumf>, %100, %cst_43 [0] : vector<32x30xf32> to vector<30xf32>
    %102 = vector.shape_cast %101 : vector<30xf32> to vector<1x30xf32>
    %103 = arith.maximumf %94, %102 : vector<1x30xf32>
    %104 = arith.index_cast %63 : i32 to index
    %c0_44 = arith.constant 0 : index
    %105 = vector.load %arg15[%104, %c0_44] : memref<8x30xf32, #tpu.memory_space<vmem>>, vector<1x30xf32>
    tpu.vector_store %arg15[%104, %c0_44], %103 {strides = array<i32>} : memref<8x30xf32, #tpu.memory_space<vmem>>, vector<1x30xf32>,
    %106 = arith.index_cast %63 : i32 to index
    %c0_45 = arith.constant 0 : index
    %107 = vector.load %arg16[%106, %c0_45] : memref<8x20xf32, #tpu.memory_space<vmem>>, vector<1x20xf32>
    %108 = vector.broadcast %63 : i32 to vector<32x1xi32>
    %109 = arith.cmpi eq, %55, %108 : vector<32x1xi32>
    %cst_46 = arith.constant -3.000000e+38 : f32
    %110 = vector.shape_cast %109 : vector<32x1xi1> to vector<32x1xi1>
    %111 = vector.broadcast %110 : vector<32x1xi1> to vector<32x20xi1>
    %112 = vector.broadcast %cst_46 : f32 to vector<32x20xf32>
    %113 = arith.select %111, %54, %112 : vector<32x20xi1>, vector<32x20xf32>
    %cst_47 = arith.constant dense<0xFF800000> : vector<20xf32>
    %114 = vector.multi_reduction <maximumf>, %113, %cst_47 [0] : vector<32x20xf32> to vector<20xf32>
    %115 = vector.shape_cast %114 : vector<20xf32> to vector<1x20xf32>
    %116 = arith.maximumf %107, %115 : vector<1x20xf32>
    %117 = arith.index_cast %63 : i32 to index
    %c0_48 = arith.constant 0 : index
    %118 = vector.load %arg16[%117, %c0_48] : memref<8x20xf32, #tpu.memory_space<vmem>>, vector<1x20xf32>
    tpu.vector_store %arg16[%117, %c0_48], %116 {strides = array<i32>} : memref<8x20xf32, #tpu.memory_space<vmem>>, vector<1x20xf32>,
    return
  }
  func.func @transform_0(%arg0: i32, %arg1: i32, %arg2: memref<2xi32, #tpu.memory_space<smem>>, %arg3: memref<2xi32, #tpu.memory_space<smem>>) -> (i32, i32) {
    %c1_i32 = arith.constant 1 : i32
    %0 = arith.muli %arg0, %c1_i32 : i32
    %1 = arith.addi %0, %arg1 : i32
    %c0_i32 = arith.constant 0 : i32
    %c0_i32_0 = arith.constant 0 : i32
    return %1, %c0_i32 : i32, i32
  }
  func.func @transform_1(%arg0: i32, %arg1: i32, %arg2: memref<2xi32, #tpu.memory_space<smem>>, %arg3: memref<2xi32, #tpu.memory_space<smem>>) -> (i32, i32) {
    %c1_i32 = arith.constant 1 : i32
    %0 = arith.muli %arg0, %c1_i32 : i32
    %1 = arith.addi %0, %arg1 : i32
    %c0_i32 = arith.constant 0 : i32
    %c0_i32_0 = arith.constant 0 : i32
    return %1, %c0_i32 : i32, i32
  }
  func.func @transform_2(%arg0: i32, %arg1: i32, %arg2: memref<2xi32, #tpu.memory_space<smem>>, %arg3: memref<2xi32, #tpu.memory_space<smem>>) -> (i32, i32) {
    %c1_i32 = arith.constant 1 : i32
    %0 = arith.muli %arg0, %c1_i32 : i32
    %1 = arith.addi %0, %arg1 : i32
    %c0_i32 = arith.constant 0 : i32
    %c0_i32_0 = arith.constant 0 : i32
    return %1, %c0_i32 : i32, i32
  }
  func.func @transform_3(%arg0: i32, %arg1: i32, %arg2: memref<2xi32, #tpu.memory_space<smem>>, %arg3: memref<2xi32, #tpu.memory_space<smem>>) -> (i32, i32) {
    %c0_i32 = arith.constant 0 : i32
    %c0_i32_0 = arith.constant 0 : i32
    %c0_i32_1 = arith.constant 0 : i32
    return %c0_i32, %c0_i32_0 : i32, i32
  }
  func.func @transform_4(%arg0: i32, %arg1: i32, %arg2: memref<2xi32, #tpu.memory_space<smem>>, %arg3: memref<2xi32, #tpu.memory_space<smem>>) -> (i32, i32) {
    %c0_i32 = arith.constant 0 : i32
    %c0_i32_0 = arith.constant 0 : i32
    %c0_i32_1 = arith.constant 0 : i32
    return %c0_i32, %c0_i32_0 : i32, i32
  }
  func.func @transform_5(%arg0: i32, %arg1: i32, %arg2: memref<2xi32, #tpu.memory_space<smem>>, %arg3: memref<2xi32, #tpu.memory_space<smem>>) -> (i32, i32) {
    %c0_i32 = arith.constant 0 : i32
    %c0_i32_0 = arith.constant 0 : i32
    %c0_i32_1 = arith.constant 0 : i32
    return %c0_i32, %c0_i32_0 : i32, i32
  }
  func.func @transform_6(%arg0: i32, %arg1: i32, %arg2: memref<2xi32, #tpu.memory_space<smem>>, %arg3: memref<2xi32, #tpu.memory_space<smem>>) -> (i32, i32) {
    %c0_i32 = arith.constant 0 : i32
    %c0_i32_0 = arith.constant 0 : i32
    %c0_i32_1 = arith.constant 0 : i32
    return %c0_i32, %c0_i32_0 : i32, i32
  }
  func.func @transform_7(%arg0: i32, %arg1: i32, %arg2: memref<2xi32, #tpu.memory_space<smem>>, %arg3: memref<2xi32, #tpu.memory_space<smem>>) -> (i32, i32) {
    %c0_i32 = arith.constant 0 : i32
    %c0_i32_0 = arith.constant 0 : i32
    %c0_i32_1 = arith.constant 0 : i32
    return %c0_i32, %c0_i32_0 : i32, i32
  }
  func.func @transform_8(%arg0: i32, %arg1: i32, %arg2: memref<2xi32, #tpu.memory_space<smem>>, %arg3: memref<2xi32, #tpu.memory_space<smem>>) -> (i32, i32) {
    %c0_i32 = arith.constant 0 : i32
    %c0_i32_0 = arith.constant 0 : i32
    %c0_i32_1 = arith.constant 0 : i32
    return %c0_i32, %c0_i32_0 : i32, i32
  }
  func.func @transform_9(%arg0: i32, %arg1: i32, %arg2: memref<2xi32, #tpu.memory_space<smem>>, %arg3: memref<2xi32, #tpu.memory_space<smem>>) -> (i32, i32) {
    %c0_i32 = arith.constant 0 : i32
    %c0_i32_0 = arith.constant 0 : i32
    %c0_i32_1 = arith.constant 0 : i32
    return %c0_i32, %c0_i32_0 : i32, i32
  }
  func.func @transform_10(%arg0: i32, %arg1: i32, %arg2: memref<2xi32, #tpu.memory_space<smem>>, %arg3: memref<2xi32, #tpu.memory_space<smem>>) -> (i32, i32) {
    %c0_i32 = arith.constant 0 : i32
    %c0_i32_0 = arith.constant 0 : i32
    %c0_i32_1 = arith.constant 0 : i32
    return %c0_i32, %c0_i32_0 : i32, i32
  }
  func.func @transform_11(%arg0: i32, %arg1: i32, %arg2: memref<2xi32, #tpu.memory_space<smem>>, %arg3: memref<2xi32, #tpu.memory_space<smem>>) -> (i32, i32) {
    %c0_i32 = arith.constant 0 : i32
    %c0_i32_0 = arith.constant 0 : i32
    return %arg0, %c0_i32 : i32, i32
  }
  func.func @transform_12(%arg0: i32, %arg1: i32, %arg2: memref<2xi32, #tpu.memory_space<smem>>, %arg3: memref<2xi32, #tpu.memory_space<smem>>) -> (i32, i32) {
    %c0_i32 = arith.constant 0 : i32
    %c0_i32_0 = arith.constant 0 : i32
    return %arg0, %c0_i32 : i32, i32
  }
}

module attributes {stable_mosaic.version = 11 : i64} {
  func.func @_middle_fused_kernel(%arg0: i32, %arg1: i32, %arg2: memref<2xi32, #tpu.memory_space<smem>>, %arg3: memref<2xi32, #tpu.memory_space<smem>>, %arg4: memref<16x3xf32, #tpu.memory_space<vmem>>, %arg5: memref<16x50xbf16, #tpu.memory_space<vmem>>, %arg6: memref<16x1xi32, #tpu.memory_space<vmem>>, %arg7: memref<3x80xbf16, #tpu.memory_space<vmem>>, %arg8: memref<1x80xf32, #tpu.memory_space<vmem>>, %arg9: memref<80x40xbf16, #tpu.memory_space<vmem>>, %arg10: memref<1x40xf32, #tpu.memory_space<vmem>>, %arg11: memref<40x20xbf16, #tpu.memory_space<vmem>>, %arg12: memref<1x20xf32, #tpu.memory_space<vmem>>, %arg13: memref<70x80xbf16, #tpu.memory_space<vmem>>, %arg14: memref<1x80xf32, #tpu.memory_space<vmem>>, %arg15: memref<8x80xf32, #tpu.memory_space<vmem>>, %arg16: memref<8x50xf32, #tpu.memory_space<vmem>>) attributes {dimension_semantics = [#tpu.dimension_semantics<parallel>, #tpu.dimension_semantics<arbitrary>], iteration_bounds = array<i64: 2, 1>, scalar_prefetch = 2 : i64, scratch_operands = 0 : i64, tpu.core_type = #tpu.core_type<tc>, window_params = [{transform_indices = @transform_0, window_bounds = array<i64: 16, 3>}, {transform_indices = @transform_1, window_bounds = array<i64: 16, 50>}, {transform_indices = @transform_2, window_bounds = array<i64: 16, 1>}, {pipeline_mode = #tpu.pipeline_mode<synchronous>, transform_indices = @transform_3, window_bounds = array<i64: 3, 80>}, {pipeline_mode = #tpu.pipeline_mode<synchronous>, transform_indices = @transform_4, window_bounds = array<i64: 1, 80>}, {pipeline_mode = #tpu.pipeline_mode<synchronous>, transform_indices = @transform_5, window_bounds = array<i64: 80, 40>}, {pipeline_mode = #tpu.pipeline_mode<synchronous>, transform_indices = @transform_6, window_bounds = array<i64: 1, 40>}, {pipeline_mode = #tpu.pipeline_mode<synchronous>, transform_indices = @transform_7, window_bounds = array<i64: 40, 20>}, {pipeline_mode = #tpu.pipeline_mode<synchronous>, transform_indices = @transform_8, window_bounds = array<i64: 1, 20>}, {pipeline_mode = #tpu.pipeline_mode<synchronous>, transform_indices = @transform_9, window_bounds = array<i64: 70, 80>}, {pipeline_mode = #tpu.pipeline_mode<synchronous>, transform_indices = @transform_10, window_bounds = array<i64: 1, 80>}, {transform_indices = @transform_11, window_bounds = array<i64: 8, 80>}, {transform_indices = @transform_12, window_bounds = array<i64: 8, 50>}]} {
    %c0_i32 = arith.constant 0 : i32
    %0 = arith.cmpi eq, %arg1, %c0_i32 : i32
    %1 = arith.extui %0 : i1 to i32
    %c0_i32_0 = arith.constant 0 : i32
    %2 = arith.cmpi ne, %1, %c0_i32_0 : i32
    scf.if %2 {
      %cst_49 = arith.constant -3.000000e+38 : f32
      %119 = vector.broadcast %cst_49 : f32 to vector<8x80xf32>
      %c0_50 = arith.constant 0 : index
      %c0_51 = arith.constant 0 : index
      %120 = vector.load %arg15[%c0_50, %c0_51] : memref<8x80xf32, #tpu.memory_space<vmem>>, vector<8x80xf32>
      tpu.vector_store %arg15[%c0_50, %c0_51], %119 {strides = array<i32>} : memref<8x80xf32, #tpu.memory_space<vmem>>, vector<8x80xf32>,
      %cst_52 = arith.constant -3.000000e+38 : f32
      %121 = vector.broadcast %cst_52 : f32 to vector<8x50xf32>
      %c0_53 = arith.constant 0 : index
      %c0_54 = arith.constant 0 : index
      %122 = vector.load %arg16[%c0_53, %c0_54] : memref<8x50xf32, #tpu.memory_space<vmem>>, vector<8x50xf32>
      tpu.vector_store %arg16[%c0_53, %c0_54], %121 {strides = array<i32>} : memref<8x50xf32, #tpu.memory_space<vmem>>, vector<8x50xf32>,
    } else {
    }
    %c0 = arith.constant 0 : index
    %c0_1 = arith.constant 0 : index
    %3 = vector.load %arg4[%c0, %c0_1] : memref<16x3xf32, #tpu.memory_space<vmem>>, vector<16x3xf32>
    %c0_2 = arith.constant 0 : index
    %c0_3 = arith.constant 0 : index
    %4 = vector.load %arg7[%c0_2, %c0_3] : memref<3x80xbf16, #tpu.memory_space<vmem>>, vector<3x80xbf16>
    %5 = arith.extf %4 : vector<3x80xbf16> to vector<3x80xf32>
    %6 = vector.extract_strided_slice %3 {offsets = [0, 0], sizes = [16, 1], strides = [1, 1]} : vector<16x3xf32> to vector<16x1xf32>
    %7 = vector.extract_strided_slice %5 {offsets = [0, 0], sizes = [1, 80], strides = [1, 1]} : vector<3x80xf32> to vector<1x80xf32>
    %8 = vector.broadcast %6 : vector<16x1xf32> to vector<16x80xf32>
    %9 = vector.broadcast %7 : vector<1x80xf32> to vector<16x80xf32>
    %10 = arith.mulf %8, %9 : vector<16x80xf32>
    %11 = vector.extract_strided_slice %3 {offsets = [0, 1], sizes = [16, 1], strides = [1, 1]} : vector<16x3xf32> to vector<16x1xf32>
    %12 = vector.extract_strided_slice %5 {offsets = [1, 0], sizes = [1, 80], strides = [1, 1]} : vector<3x80xf32> to vector<1x80xf32>
    %13 = vector.broadcast %11 : vector<16x1xf32> to vector<16x80xf32>
    %14 = vector.broadcast %12 : vector<1x80xf32> to vector<16x80xf32>
    %15 = arith.mulf %13, %14 : vector<16x80xf32>
    %16 = arith.addf %10, %15 : vector<16x80xf32>
    %17 = vector.extract_strided_slice %3 {offsets = [0, 2], sizes = [16, 1], strides = [1, 1]} : vector<16x3xf32> to vector<16x1xf32>
    %18 = vector.extract_strided_slice %5 {offsets = [2, 0], sizes = [1, 80], strides = [1, 1]} : vector<3x80xf32> to vector<1x80xf32>
    %19 = vector.broadcast %17 : vector<16x1xf32> to vector<16x80xf32>
    %20 = vector.broadcast %18 : vector<1x80xf32> to vector<16x80xf32>
    %21 = arith.mulf %19, %20 : vector<16x80xf32>
    %22 = arith.addf %16, %21 : vector<16x80xf32>
    %c0_4 = arith.constant 0 : index
    %c0_5 = arith.constant 0 : index
    %23 = vector.load %arg8[%c0_4, %c0_5] : memref<1x80xf32, #tpu.memory_space<vmem>>, vector<1x80xf32>
    %24 = vector.broadcast %23 : vector<1x80xf32> to vector<16x80xf32>
    %25 = arith.addf %22, %24 : vector<16x80xf32>
    %cst = arith.constant 0.000000e+00 : f32
    %26 = vector.broadcast %cst : f32 to vector<16x80xf32>
    %27 = arith.maximumf %25, %26 : vector<16x80xf32>
    %28 = arith.truncf %27 : vector<16x80xf32> to vector<16x80xbf16>
    %c0_6 = arith.constant 0 : index
    %c0_7 = arith.constant 0 : index
    %29 = vector.load %arg9[%c0_6, %c0_7] : memref<80x40xbf16, #tpu.memory_space<vmem>>, vector<80x40xbf16>
    %cst_8 = arith.constant dense<0.000000e+00> : vector<16x40xf32>
    %30 = tpu.matmul %28, %29, %cst_8 {dimension_numbers = #tpu.dot_dimension_numbers<[1], [0], [0], [1], [0, 0, 1, 1], [], []>} : vector<16x80xbf16>, vector<80x40xbf16>, vector<16x40xf32> -> vector<16x40xf32>
    %c0_9 = arith.constant 0 : index
    %c0_10 = arith.constant 0 : index
    %31 = vector.load %arg10[%c0_9, %c0_10] : memref<1x40xf32, #tpu.memory_space<vmem>>, vector<1x40xf32>
    %32 = vector.broadcast %31 : vector<1x40xf32> to vector<16x40xf32>
    %33 = arith.addf %30, %32 : vector<16x40xf32>
    %cst_11 = arith.constant 0.000000e+00 : f32
    %34 = vector.broadcast %cst_11 : f32 to vector<16x40xf32>
    %35 = arith.maximumf %33, %34 : vector<16x40xf32>
    %36 = arith.truncf %35 : vector<16x40xf32> to vector<16x40xbf16>
    %c0_12 = arith.constant 0 : index
    %c0_13 = arith.constant 0 : index
    %37 = vector.load %arg11[%c0_12, %c0_13] : memref<40x20xbf16, #tpu.memory_space<vmem>>, vector<40x20xbf16>
    %cst_14 = arith.constant dense<0.000000e+00> : vector<16x20xf32>
    %38 = tpu.matmul %36, %37, %cst_14 {dimension_numbers = #tpu.dot_dimension_numbers<[1], [0], [0], [1], [0, 0, 1, 1], [], []>} : vector<16x40xbf16>, vector<40x20xbf16>, vector<16x20xf32> -> vector<16x20xf32>
    %c0_15 = arith.constant 0 : index
    %c0_16 = arith.constant 0 : index
    %39 = vector.load %arg12[%c0_15, %c0_16] : memref<1x20xf32, #tpu.memory_space<vmem>>, vector<1x20xf32>
    %40 = vector.broadcast %39 : vector<1x20xf32> to vector<16x20xf32>
    %41 = arith.addf %38, %40 : vector<16x20xf32>
    %cst_17 = arith.constant 0.000000e+00 : f32
    %42 = vector.broadcast %cst_17 : f32 to vector<16x20xf32>
    %43 = arith.maximumf %41, %42 : vector<16x20xf32>
    %c0_18 = arith.constant 0 : index
    %c0_19 = arith.constant 0 : index
    %44 = vector.load %arg5[%c0_18, %c0_19] : memref<16x50xbf16, #tpu.memory_space<vmem>>, vector<16x50xbf16>
    %45 = arith.truncf %43 : vector<16x20xf32> to vector<16x20xbf16>
    %46 = tpu.concatenate %45, %44 in 1 : vector<16x20xbf16>, vector<16x50xbf16> -> vector<16x70xbf16>
    %c0_20 = arith.constant 0 : index
    %c0_21 = arith.constant 0 : index
    %47 = vector.load %arg13[%c0_20, %c0_21] : memref<70x80xbf16, #tpu.memory_space<vmem>>, vector<70x80xbf16>
    %cst_22 = arith.constant dense<0.000000e+00> : vector<16x80xf32>
    %48 = tpu.matmul %46, %47, %cst_22 {dimension_numbers = #tpu.dot_dimension_numbers<[1], [0], [0], [1], [0, 0, 1, 1], [], []>} : vector<16x70xbf16>, vector<70x80xbf16>, vector<16x80xf32> -> vector<16x80xf32>
    %c0_23 = arith.constant 0 : index
    %c0_24 = arith.constant 0 : index
    %49 = vector.load %arg14[%c0_23, %c0_24] : memref<1x80xf32, #tpu.memory_space<vmem>>, vector<1x80xf32>
    %50 = vector.broadcast %49 : vector<1x80xf32> to vector<16x80xf32>
    %51 = arith.addf %48, %50 : vector<16x80xf32>
    %cst_25 = arith.constant 0.000000e+00 : f32
    %52 = vector.broadcast %cst_25 : f32 to vector<16x80xf32>
    %53 = arith.maximumf %51, %52 : vector<16x80xf32>
    %54 = arith.extf %44 : vector<16x50xbf16> to vector<16x50xf32>
    %c0_26 = arith.constant 0 : index
    %c0_27 = arith.constant 0 : index
    %55 = vector.load %arg6[%c0_26, %c0_27] : memref<16x1xi32, #tpu.memory_space<vmem>>, vector<16x1xi32>
    %c1_i32 = arith.constant 1 : i32
    %56 = arith.muli %arg0, %c1_i32 : i32
    %57 = arith.addi %56, %arg1 : i32
    %c1_i32_28 = arith.constant 1 : i32
    %58 = arith.muli %57, %c1_i32_28 : i32
    %c0_i32_29 = arith.constant 0 : i32
    %59 = arith.addi %58, %c0_i32_29 : i32
    %60 = arith.index_cast %59 : i32 to index
    %61 = memref.load %arg2[%60] : memref<2xi32, #tpu.memory_space<smem>>
    %62 = arith.index_cast %59 : i32 to index
    %63 = memref.load %arg3[%62] : memref<2xi32, #tpu.memory_space<smem>>
    %c1_i32_30 = arith.constant 1 : i32
    %64 = arith.addi %61, %c1_i32_30 : i32
    %c0_i32_31 = arith.constant 0 : i32
    %65 = arith.subi %63, %64 : i32
    %66 = arith.addi %64, %65 : i32
    %c1_i32_32 = arith.constant 1 : i32
    scf.for %arg17 = %64 to %66 step %c1_i32_32  : i32 {
      %119 = vector.broadcast %arg17 : i32 to vector<16x1xi32>
      %120 = arith.cmpi eq, %55, %119 : vector<16x1xi32>
      %cst_49 = arith.constant -3.000000e+38 : f32
      %121 = vector.shape_cast %120 : vector<16x1xi1> to vector<16x1xi1>
      %122 = vector.broadcast %121 : vector<16x1xi1> to vector<16x80xi1>
      %123 = vector.broadcast %cst_49 : f32 to vector<16x80xf32>
      %124 = arith.select %122, %53, %123 : vector<16x80xi1>, vector<16x80xf32>
      %cst_50 = arith.constant dense<0xFF800000> : vector<80xf32>
      %125 = vector.multi_reduction <maximumf>, %124, %cst_50 [0] : vector<16x80xf32> to vector<80xf32>
      %126 = vector.shape_cast %125 : vector<80xf32> to vector<1x80xf32>
      %127 = arith.index_cast %arg17 : i32 to index
      %c0_51 = arith.constant 0 : index
      %128 = vector.load %arg15[%127, %c0_51] : memref<8x80xf32, #tpu.memory_space<vmem>>, vector<1x80xf32>
      tpu.vector_store %arg15[%127, %c0_51], %126 {strides = array<i32>} : memref<8x80xf32, #tpu.memory_space<vmem>>, vector<1x80xf32>,
      %129 = vector.broadcast %arg17 : i32 to vector<16x1xi32>
      %130 = arith.cmpi eq, %55, %129 : vector<16x1xi32>
      %cst_52 = arith.constant -3.000000e+38 : f32
      %131 = vector.shape_cast %130 : vector<16x1xi1> to vector<16x1xi1>
      %132 = vector.broadcast %131 : vector<16x1xi1> to vector<16x50xi1>
      %133 = vector.broadcast %cst_52 : f32 to vector<16x50xf32>
      %134 = arith.select %132, %54, %133 : vector<16x50xi1>, vector<16x50xf32>
      %cst_53 = arith.constant dense<0xFF800000> : vector<50xf32>
      %135 = vector.multi_reduction <maximumf>, %134, %cst_53 [0] : vector<16x50xf32> to vector<50xf32>
      %136 = vector.shape_cast %135 : vector<50xf32> to vector<1x50xf32>
      %137 = arith.index_cast %arg17 : i32 to index
      %c0_54 = arith.constant 0 : index
      %138 = vector.load %arg16[%137, %c0_54] : memref<8x50xf32, #tpu.memory_space<vmem>>, vector<1x50xf32>
      tpu.vector_store %arg16[%137, %c0_54], %136 {strides = array<i32>} : memref<8x50xf32, #tpu.memory_space<vmem>>, vector<1x50xf32>,
    }
    %67 = arith.index_cast %61 : i32 to index
    %c0_33 = arith.constant 0 : index
    %68 = vector.load %arg15[%67, %c0_33] : memref<8x80xf32, #tpu.memory_space<vmem>>, vector<1x80xf32>
    %69 = vector.broadcast %61 : i32 to vector<16x1xi32>
    %70 = arith.cmpi eq, %55, %69 : vector<16x1xi32>
    %cst_34 = arith.constant -3.000000e+38 : f32
    %71 = vector.shape_cast %70 : vector<16x1xi1> to vector<16x1xi1>
    %72 = vector.broadcast %71 : vector<16x1xi1> to vector<16x80xi1>
    %73 = vector.broadcast %cst_34 : f32 to vector<16x80xf32>
    %74 = arith.select %72, %53, %73 : vector<16x80xi1>, vector<16x80xf32>
    %cst_35 = arith.constant dense<0xFF800000> : vector<80xf32>
    %75 = vector.multi_reduction <maximumf>, %74, %cst_35 [0] : vector<16x80xf32> to vector<80xf32>
    %76 = vector.shape_cast %75 : vector<80xf32> to vector<1x80xf32>
    %77 = arith.maximumf %68, %76 : vector<1x80xf32>
    %78 = arith.index_cast %61 : i32 to index
    %c0_36 = arith.constant 0 : index
    %79 = vector.load %arg15[%78, %c0_36] : memref<8x80xf32, #tpu.memory_space<vmem>>, vector<1x80xf32>
    tpu.vector_store %arg15[%78, %c0_36], %77 {strides = array<i32>} : memref<8x80xf32, #tpu.memory_space<vmem>>, vector<1x80xf32>,
    %80 = arith.index_cast %61 : i32 to index
    %c0_37 = arith.constant 0 : index
    %81 = vector.load %arg16[%80, %c0_37] : memref<8x50xf32, #tpu.memory_space<vmem>>, vector<1x50xf32>
    %82 = vector.broadcast %61 : i32 to vector<16x1xi32>
    %83 = arith.cmpi eq, %55, %82 : vector<16x1xi32>
    %cst_38 = arith.constant -3.000000e+38 : f32
    %84 = vector.shape_cast %83 : vector<16x1xi1> to vector<16x1xi1>
    %85 = vector.broadcast %84 : vector<16x1xi1> to vector<16x50xi1>
    %86 = vector.broadcast %cst_38 : f32 to vector<16x50xf32>
    %87 = arith.select %85, %54, %86 : vector<16x50xi1>, vector<16x50xf32>
    %cst_39 = arith.constant dense<0xFF800000> : vector<50xf32>
    %88 = vector.multi_reduction <maximumf>, %87, %cst_39 [0] : vector<16x50xf32> to vector<50xf32>
    %89 = vector.shape_cast %88 : vector<50xf32> to vector<1x50xf32>
    %90 = arith.maximumf %81, %89 : vector<1x50xf32>
    %91 = arith.index_cast %61 : i32 to index
    %c0_40 = arith.constant 0 : index
    %92 = vector.load %arg16[%91, %c0_40] : memref<8x50xf32, #tpu.memory_space<vmem>>, vector<1x50xf32>
    tpu.vector_store %arg16[%91, %c0_40], %90 {strides = array<i32>} : memref<8x50xf32, #tpu.memory_space<vmem>>, vector<1x50xf32>,
    %93 = arith.index_cast %63 : i32 to index
    %c0_41 = arith.constant 0 : index
    %94 = vector.load %arg15[%93, %c0_41] : memref<8x80xf32, #tpu.memory_space<vmem>>, vector<1x80xf32>
    %95 = vector.broadcast %63 : i32 to vector<16x1xi32>
    %96 = arith.cmpi eq, %55, %95 : vector<16x1xi32>
    %cst_42 = arith.constant -3.000000e+38 : f32
    %97 = vector.shape_cast %96 : vector<16x1xi1> to vector<16x1xi1>
    %98 = vector.broadcast %97 : vector<16x1xi1> to vector<16x80xi1>
    %99 = vector.broadcast %cst_42 : f32 to vector<16x80xf32>
    %100 = arith.select %98, %53, %99 : vector<16x80xi1>, vector<16x80xf32>
    %cst_43 = arith.constant dense<0xFF800000> : vector<80xf32>
    %101 = vector.multi_reduction <maximumf>, %100, %cst_43 [0] : vector<16x80xf32> to vector<80xf32>
    %102 = vector.shape_cast %101 : vector<80xf32> to vector<1x80xf32>
    %103 = arith.maximumf %94, %102 : vector<1x80xf32>
    %104 = arith.index_cast %63 : i32 to index
    %c0_44 = arith.constant 0 : index
    %105 = vector.load %arg15[%104, %c0_44] : memref<8x80xf32, #tpu.memory_space<vmem>>, vector<1x80xf32>
    tpu.vector_store %arg15[%104, %c0_44], %103 {strides = array<i32>} : memref<8x80xf32, #tpu.memory_space<vmem>>, vector<1x80xf32>,
    %106 = arith.index_cast %63 : i32 to index
    %c0_45 = arith.constant 0 : index
    %107 = vector.load %arg16[%106, %c0_45] : memref<8x50xf32, #tpu.memory_space<vmem>>, vector<1x50xf32>
    %108 = vector.broadcast %63 : i32 to vector<16x1xi32>
    %109 = arith.cmpi eq, %55, %108 : vector<16x1xi32>
    %cst_46 = arith.constant -3.000000e+38 : f32
    %110 = vector.shape_cast %109 : vector<16x1xi1> to vector<16x1xi1>
    %111 = vector.broadcast %110 : vector<16x1xi1> to vector<16x50xi1>
    %112 = vector.broadcast %cst_46 : f32 to vector<16x50xf32>
    %113 = arith.select %111, %54, %112 : vector<16x50xi1>, vector<16x50xf32>
    %cst_47 = arith.constant dense<0xFF800000> : vector<50xf32>
    %114 = vector.multi_reduction <maximumf>, %113, %cst_47 [0] : vector<16x50xf32> to vector<50xf32>
    %115 = vector.shape_cast %114 : vector<50xf32> to vector<1x50xf32>
    %116 = arith.maximumf %107, %115 : vector<1x50xf32>
    %117 = arith.index_cast %63 : i32 to index
    %c0_48 = arith.constant 0 : index
    %118 = vector.load %arg16[%117, %c0_48] : memref<8x50xf32, #tpu.memory_space<vmem>>, vector<1x50xf32>
    tpu.vector_store %arg16[%117, %c0_48], %116 {strides = array<i32>} : memref<8x50xf32, #tpu.memory_space<vmem>>, vector<1x50xf32>,
    return
  }
  func.func @transform_0(%arg0: i32, %arg1: i32, %arg2: memref<2xi32, #tpu.memory_space<smem>>, %arg3: memref<2xi32, #tpu.memory_space<smem>>) -> (i32, i32) {
    %c1_i32 = arith.constant 1 : i32
    %0 = arith.muli %arg0, %c1_i32 : i32
    %1 = arith.addi %0, %arg1 : i32
    %c0_i32 = arith.constant 0 : i32
    %c0_i32_0 = arith.constant 0 : i32
    return %1, %c0_i32 : i32, i32
  }
  func.func @transform_1(%arg0: i32, %arg1: i32, %arg2: memref<2xi32, #tpu.memory_space<smem>>, %arg3: memref<2xi32, #tpu.memory_space<smem>>) -> (i32, i32) {
    %c1_i32 = arith.constant 1 : i32
    %0 = arith.muli %arg0, %c1_i32 : i32
    %1 = arith.addi %0, %arg1 : i32
    %c0_i32 = arith.constant 0 : i32
    %c0_i32_0 = arith.constant 0 : i32
    return %1, %c0_i32 : i32, i32
  }
  func.func @transform_2(%arg0: i32, %arg1: i32, %arg2: memref<2xi32, #tpu.memory_space<smem>>, %arg3: memref<2xi32, #tpu.memory_space<smem>>) -> (i32, i32) {
    %c1_i32 = arith.constant 1 : i32
    %0 = arith.muli %arg0, %c1_i32 : i32
    %1 = arith.addi %0, %arg1 : i32
    %c0_i32 = arith.constant 0 : i32
    %c0_i32_0 = arith.constant 0 : i32
    return %1, %c0_i32 : i32, i32
  }
  func.func @transform_3(%arg0: i32, %arg1: i32, %arg2: memref<2xi32, #tpu.memory_space<smem>>, %arg3: memref<2xi32, #tpu.memory_space<smem>>) -> (i32, i32) {
    %c0_i32 = arith.constant 0 : i32
    %c0_i32_0 = arith.constant 0 : i32
    %c0_i32_1 = arith.constant 0 : i32
    return %c0_i32, %c0_i32_0 : i32, i32
  }
  func.func @transform_4(%arg0: i32, %arg1: i32, %arg2: memref<2xi32, #tpu.memory_space<smem>>, %arg3: memref<2xi32, #tpu.memory_space<smem>>) -> (i32, i32) {
    %c0_i32 = arith.constant 0 : i32
    %c0_i32_0 = arith.constant 0 : i32
    %c0_i32_1 = arith.constant 0 : i32
    return %c0_i32, %c0_i32_0 : i32, i32
  }
  func.func @transform_5(%arg0: i32, %arg1: i32, %arg2: memref<2xi32, #tpu.memory_space<smem>>, %arg3: memref<2xi32, #tpu.memory_space<smem>>) -> (i32, i32) {
    %c0_i32 = arith.constant 0 : i32
    %c0_i32_0 = arith.constant 0 : i32
    %c0_i32_1 = arith.constant 0 : i32
    return %c0_i32, %c0_i32_0 : i32, i32
  }
  func.func @transform_6(%arg0: i32, %arg1: i32, %arg2: memref<2xi32, #tpu.memory_space<smem>>, %arg3: memref<2xi32, #tpu.memory_space<smem>>) -> (i32, i32) {
    %c0_i32 = arith.constant 0 : i32
    %c0_i32_0 = arith.constant 0 : i32
    %c0_i32_1 = arith.constant 0 : i32
    return %c0_i32, %c0_i32_0 : i32, i32
  }
  func.func @transform_7(%arg0: i32, %arg1: i32, %arg2: memref<2xi32, #tpu.memory_space<smem>>, %arg3: memref<2xi32, #tpu.memory_space<smem>>) -> (i32, i32) {
    %c0_i32 = arith.constant 0 : i32
    %c0_i32_0 = arith.constant 0 : i32
    %c0_i32_1 = arith.constant 0 : i32
    return %c0_i32, %c0_i32_0 : i32, i32
  }
  func.func @transform_8(%arg0: i32, %arg1: i32, %arg2: memref<2xi32, #tpu.memory_space<smem>>, %arg3: memref<2xi32, #tpu.memory_space<smem>>) -> (i32, i32) {
    %c0_i32 = arith.constant 0 : i32
    %c0_i32_0 = arith.constant 0 : i32
    %c0_i32_1 = arith.constant 0 : i32
    return %c0_i32, %c0_i32_0 : i32, i32
  }
  func.func @transform_9(%arg0: i32, %arg1: i32, %arg2: memref<2xi32, #tpu.memory_space<smem>>, %arg3: memref<2xi32, #tpu.memory_space<smem>>) -> (i32, i32) {
    %c0_i32 = arith.constant 0 : i32
    %c0_i32_0 = arith.constant 0 : i32
    %c0_i32_1 = arith.constant 0 : i32
    return %c0_i32, %c0_i32_0 : i32, i32
  }
  func.func @transform_10(%arg0: i32, %arg1: i32, %arg2: memref<2xi32, #tpu.memory_space<smem>>, %arg3: memref<2xi32, #tpu.memory_space<smem>>) -> (i32, i32) {
    %c0_i32 = arith.constant 0 : i32
    %c0_i32_0 = arith.constant 0 : i32
    %c0_i32_1 = arith.constant 0 : i32
    return %c0_i32, %c0_i32_0 : i32, i32
  }
  func.func @transform_11(%arg0: i32, %arg1: i32, %arg2: memref<2xi32, #tpu.memory_space<smem>>, %arg3: memref<2xi32, #tpu.memory_space<smem>>) -> (i32, i32) {
    %c0_i32 = arith.constant 0 : i32
    %c0_i32_0 = arith.constant 0 : i32
    return %arg0, %c0_i32 : i32, i32
  }
  func.func @transform_12(%arg0: i32, %arg1: i32, %arg2: memref<2xi32, #tpu.memory_space<smem>>, %arg3: memref<2xi32, #tpu.memory_space<smem>>) -> (i32, i32) {
    %c0_i32 = arith.constant 0 : i32
    %c0_i32_0 = arith.constant 0 : i32
    return %arg0, %c0_i32 : i32, i32
  }
}

</mosaic_0001>

<llo_original>
// kernel: run.3
$region0: #{run.3}
  #allocation0 [shape = 'u32[]', space=smem, size = 0x4, offset = 0x4, fixed_abs, tag = 'smem constant byte address 0x4 - core index']
  #allocation1 [shape = 'u32[144,128]{1,0:T(1,128)}', space=vmem, size = 0x12000, scoped, tag = 'internal scratch']
  #allocation2 [shape = 's32[1]{0}', space=sflag, size = 0x4, scoped, tag = 'scoped memory for run.3']
  #allocation3 [shape = 'u8[512]{0}', space=smem, size = 0x200, scoped, tag = 'prefetched SMEM operand 0']
  #allocation4 [shape = 'u8[512]{0}', space=smem, size = 0x200, scoped, tag = 'prefetched SMEM operand 1']
  %s0 = inlined_call_operand.vmem [shape: s32[2], index: 0, kind: input, shape index: {}]
  %s1 = inlined_call_operand.vmem [shape: s32[2], index: 1, kind: input, shape index: {}]
  %s2 = inlined_call_operand.vmem [shape: f32[128,3], index: 2, kind: input, shape index: {}]
  %s3 = inlined_call_operand.vmem [shape: s32[128,1], index: 3, kind: input, shape index: {}]
  %s4 = inlined_call_operand.vmem [shape: bf16[3,80], index: 4, kind: input, shape index: {}]
  %s5 = inlined_call_operand.vmem [shape: f32[1,80], index: 5, kind: input, shape index: {}]
  %s6 = inlined_call_operand.vmem [shape: bf16[80,40], index: 6, kind: input, shape index: {}]
  %s7 = inlined_call_operand.vmem [shape: f32[1,40], index: 7, kind: input, shape index: {}]
  %s8 = inlined_call_operand.vmem [shape: bf16[40,20], index: 8, kind: input, shape index: {}]
  %s9 = inlined_call_operand.vmem [shape: f32[1,20], index: 9, kind: input, shape index: {}]
  %s10 = inlined_call_operand.vmem [shape: f32[32,20], index: 10, kind: output, shape index: {}]
  %s11 = sld [smem:[#allocation0]]
  $region76: #{run.3} parent=0
    _
  %s13 = ssub.s32 1, %s11
  %s14 = scalar_select 0, %s13, %s11
  %s15 = sshll.u32 %s0, 4
  %s16 = int_to_ptr.vmem [resolvable:$true] %s15
  %18 = dma.vmem_to_smem %s16, 16, [#allocation3], [#allocation2]
  %s19 = sshll.u32 %s1, 4
  %s20 = int_to_ptr.vmem [resolvable:$true] %s19
  %22 = dma.vmem_to_smem %s20, 16, [#allocation4], [#allocation2]
  %23 = dma.done [#allocation2], 32
  %24 = sfence
  loop: start=0, step=1, limit=4
  $region2: #{run.3} parent=0 // loop_pre_header
    _
  $region3: #{run.3} parent=0 // loop_header
    %s26 = sphi 0, %s30
    %p27 = scmp.ge.s32.totalorder %s26, 4
    %s33 = sphi 0, %s45
    %s34 = sphi 0, %s41
    %s35 = sphi 0, %s33
    %s36 = sphi 0, %s34
    %s37 = sphi 0, %s35
    %s38 = sphi 0, %s36
    %s50 = sphi 0, %s52
    %s53 = sphi 0, %s50
    %s54 = sphi 0, %s53
    %s70 = sphi 0, %s54
    %s78 = sphi 0, %s80
    %s81 = sphi 0, %s78
    %s82 = sphi 0, %s81
    %s98 = sphi 0, %s82
    %s102 = sphi 0, %s102
    %s104 = sphi 0, %s102
    %s105 = sphi 0, %s104
    %s119 = sphi 0, %s105
    %s123 = sphi 0, %s123
    %s125 = sphi 0, %s123
    %s126 = sphi 0, %s125
    %s140 = sphi 0, %s126
    %s144 = sphi 0, %s144
    %s146 = sphi 0, %s144
    %s147 = sphi 0, %s146
    %s161 = sphi 0, %s147
    %s165 = sphi 0, %s165
    %s167 = sphi 0, %s165
    %s168 = sphi 0, %s167
    %s182 = sphi 0, %s168
    %s186 = sphi 0, %s186
    %s188 = sphi 0, %s186
    %s189 = sphi 0, %s188
    %s203 = sphi 0, %s189
    %s207 = sphi 0, %s207
    %s209 = sphi 0, %s207
    %s210 = sphi 0, %s209
    %s224 = sphi 0, %s210
    %s230 = sphi 0, %s232
    %s233 = sphi 0, %s230
    %s234 = sphi 0, %s233
    %s250 = sphi 0, %s234
  $region4: #{run.3} parent=0 // loop_header_branch
    %29 = sbr.rel (%p27) target = $region8
  $region5: #{run.3} parent=0 // loop_body
    %s31 = ssub.s32 %s26, 1
    %s32 = ssub.s32 %s26, 2
    %s39 = sadd.s32 1, %s34
    %p40 = scmp.ge.s32.totalorder %s39, 1
    %s41 = scalar_select %p40, 0, %s39
    %s42 = sadd.s32 1, %s33
    %s43 = scalar_select %p40, %s42, %s33
    %p44 = scmp.ge.s32.totalorder %s43, 2
    %s45 = scalar_select %p44, 0, %s43
    %s46 = sadd.s32 %s33, %s34
    %s47 = sadd.s32 %s45, %s41
    %s48 = ssub.s32 %s46, %s47
    %p49 = scmp.eq.s32.totalorder %s48, 0
    %s51 = sadd.s32 %s50, 1
    %s52 = scalar_select %p49, %s50, %s51
    %p55 = pneg %p49
    %p56 = scmp.eq.s32.totalorder %s26, 1
    %p57 = por %p55, %p56
    %p58 = scmp.ne.s32.totalorder %s50, %s53
    %p59 = scmp.eq.s32.totalorder %s26, 0
    %p60 = por %p58, %p59
    %p61 = scmp.ne.s32.totalorder %s50, %s53
    %p62 = scmp.eq.s32.totalorder %s31, 1
    %p63 = por %p61, %p62
    %p64 = scmp.ne.s32.totalorder %s53, %s54
    %p65 = scmp.eq.s32.totalorder %s31, 0
    %p66 = por %p64, %p65
    %p67 = scmp.ne.s32.totalorder %s53, %s54
    %p68 = scmp.eq.s32.totalorder %s32, 1
    %p69 = por %p67, %p68
    %p71 = scmp.ne.s32.totalorder %s54, %s70
    %p72 = scmp.eq.s32.totalorder %s32, 0
    %p73 = por %p71, %p72
    %s74 = sadd.s32 %s33, %s34
    %s75 = sadd.s32 %s45, %s41
    %s76 = ssub.s32 %s74, %s75
    %p77 = scmp.eq.s32.totalorder %s76, 0
    %s79 = sadd.s32 %s78, 1
    %s80 = scalar_select %p77, %s78, %s79
    %p83 = pneg %p77
    %p84 = scmp.eq.s32.totalorder %s26, 1
    %p85 = por %p83, %p84
    %p86 = scmp.ne.s32.totalorder %s78, %s81
    %p87 = scmp.eq.s32.totalorder %s26, 0
    %p88 = por %p86, %p87
    %p89 = scmp.ne.s32.totalorder %s78, %s81
    %p90 = scmp.eq.s32.totalorder %s31, 1
    %p91 = por %p89, %p90
    %p92 = scmp.ne.s32.totalorder %s81, %s82
    %p93 = scmp.eq.s32.totalorder %s31, 0
    %p94 = por %p92, %p93
    %p95 = scmp.ne.s32.totalorder %s81, %s82
    %p96 = scmp.eq.s32.totalorder %s32, 1
    %p97 = por %p95, %p96
    %p99 = scmp.ne.s32.totalorder %s82, %s98
    %p100 = scmp.eq.s32.totalorder %s32, 0
    %p101 = por %p99, %p100
    %s103 = sadd.s32 %s102, 1
    %p106 = scmp.eq.s32.totalorder %s26, 1
    %p107 = scmp.ne.s32.totalorder %s102, %s104
    %p108 = scmp.eq.s32.totalorder %s26, 0
    %p109 = por %p107, %p108
    %p110 = scmp.ne.s32.totalorder %s102, %s104
    %p111 = scmp.eq.s32.totalorder %s31, 1
    %p112 = por %p110, %p111
    %p113 = scmp.ne.s32.totalorder %s104, %s105
    %p114 = scmp.eq.s32.totalorder %s31, 0
    %p115 = por %p113, %p114
    %p116 = scmp.ne.s32.totalorder %s104, %s105
    %p117 = scmp.eq.s32.totalorder %s32, 1
    %p118 = por %p116, %p117
    %p120 = scmp.ne.s32.totalorder %s105, %s119
    %p121 = scmp.eq.s32.totalorder %s32, 0
    %p122 = por %p120, %p121
    %s124 = sadd.s32 %s123, 1
    %p127 = scmp.eq.s32.totalorder %s26, 1
    %p128 = scmp.ne.s32.totalorder %s123, %s125
    %p129 = scmp.eq.s32.totalorder %s26, 0
    %p130 = por %p128, %p129
    %p131 = scmp.ne.s32.totalorder %s123, %s125
    %p132 = scmp.eq.s32.totalorder %s31, 1
    %p133 = por %p131, %p132
    %p134 = scmp.ne.s32.totalorder %s125, %s126
    %p135 = scmp.eq.s32.totalorder %s31, 0
    %p136 = por %p134, %p135
    %p137 = scmp.ne.s32.totalorder %s125, %s126
    %p138 = scmp.eq.s32.totalorder %s32, 1
    %p139 = por %p137, %p138
    %p141 = scmp.ne.s32.totalorder %s126, %s140
    %p142 = scmp.eq.s32.totalorder %s32, 0
    %p143 = por %p141, %p142
    %s145 = sadd.s32 %s144, 1
    %p148 = scmp.eq.s32.totalorder %s26, 1
    %p149 = scmp.ne.s32.totalorder %s144, %s146
    %p150 = scmp.eq.s32.totalorder %s26, 0
    %p151 = por %p149, %p150
    %p152 = scmp.ne.s32.totalorder %s144, %s146
    %p153 = scmp.eq.s32.totalorder %s31, 1
    %p154 = por %p152, %p153
    %p155 = scmp.ne.s32.totalorder %s146, %s147
    %p156 = scmp.eq.s32.totalorder %s31, 0
    %p157 = por %p155, %p156
    %p158 = scmp.ne.s32.totalorder %s146, %s147
    %p159 = scmp.eq.s32.totalorder %s32, 1
    %p160 = por %p158, %p159
    %p162 = scmp.ne.s32.totalorder %s147, %s161
    %p163 = scmp.eq.s32.totalorder %s32, 0
    %p164 = por %p162, %p163
    %s166 = sadd.s32 %s165, 1
    %p169 = scmp.eq.s32.totalorder %s26, 1
    %p170 = scmp.ne.s32.totalorder %s165, %s167
    %p171 = scmp.eq.s32.totalorder %s26, 0
    %p172 = por %p170, %p171
    %p173 = scmp.ne.s32.totalorder %s165, %s167
    %p174 = scmp.eq.s32.totalorder %s31, 1
    %p175 = por %p173, %p174
    %p176 = scmp.ne.s32.totalorder %s167, %s168
    %p177 = scmp.eq.s32.totalorder %s31, 0
    %p178 = por %p176, %p177
    %p179 = scmp.ne.s32.totalorder %s167, %s168
    %p180 = scmp.eq.s32.totalorder %s32, 1
    %p181 = por %p179, %p180
    %p183 = scmp.ne.s32.totalorder %s168, %s182
    %p184 = scmp.eq.s32.totalorder %s32, 0
    %p185 = por %p183, %p184
    %s187 = sadd.s32 %s186, 1
    %p190 = scmp.eq.s32.totalorder %s26, 1
    %p191 = scmp.ne.s32.totalorder %s186, %s188
    %p192 = scmp.eq.s32.totalorder %s26, 0
    %p193 = por %p191, %p192
    %p194 = scmp.ne.s32.totalorder %s186, %s188
    %p195 = scmp.eq.s32.totalorder %s31, 1
    %p196 = por %p194, %p195
    %p197 = scmp.ne.s32.totalorder %s188, %s189
    %p198 = scmp.eq.s32.totalorder %s31, 0
    %p199 = por %p197, %p198
    %p200 = scmp.ne.s32.totalorder %s188, %s189
    %p201 = scmp.eq.s32.totalorder %s32, 1
    %p202 = por %p200, %p201
    %p204 = scmp.ne.s32.totalorder %s189, %s203
    %p205 = scmp.eq.s32.totalorder %s32, 0
    %p206 = por %p204, %p205
    %s208 = sadd.s32 %s207, 1
    %p211 = scmp.eq.s32.totalorder %s26, 1
    %p212 = scmp.ne.s32.totalorder %s207, %s209
    %p213 = scmp.eq.s32.totalorder %s26, 0
    %p214 = por %p212, %p213
    %p215 = scmp.ne.s32.totalorder %s207, %s209
    %p216 = scmp.eq.s32.totalorder %s31, 1
    %p217 = por %p215, %p216
    %p218 = scmp.ne.s32.totalorder %s209, %s210
    %p219 = scmp.eq.s32.totalorder %s31, 0
    %p220 = por %p218, %p219
    %p221 = scmp.ne.s32.totalorder %s209, %s210
    %p222 = scmp.eq.s32.totalorder %s32, 1
    %p223 = por %p221, %p222
    %p225 = scmp.ne.s32.totalorder %s210, %s224
    %p226 = scmp.eq.s32.totalorder %s32, 0
    %p227 = por %p225, %p226
    %s228 = ssub.s32 %s33, %s45
    %p229 = scmp.eq.s32.totalorder %s228, 0
    %s231 = sadd.s32 %s230, 1
    %s232 = scalar_select %p229, %s230, %s231
    %p235 = pneg %p229
    %p236 = scmp.eq.s32.totalorder %s26, 1
    %p237 = por %p235, %p236
    %p238 = scmp.ne.s32.totalorder %s230, %s233
    %p239 = scmp.eq.s32.totalorder %s26, 0
    %p240 = por %p238, %p239
    %p241 = scmp.ne.s32.totalorder %s230, %s233
    %p242 = scmp.eq.s32.totalorder %s31, 1
    %p243 = por %p241, %p242
    %p244 = scmp.ne.s32.totalorder %s233, %s234
    %p245 = scmp.eq.s32.totalorder %s31, 0
    %p246 = por %p244, %p245
    %p247 = scmp.ne.s32.totalorder %s233, %s234
    %p248 = scmp.eq.s32.totalorder %s32, 1
    %p249 = por %p247, %p248
    %p251 = scmp.ne.s32.totalorder %s234, %s250
    %p252 = scmp.eq.s32.totalorder %s32, 0
    %p253 = por %p251, %p252
    %p254 = scmp.le.s32.totalorder 1, %s26
    %p255 = scmp.lt.s32.totalorder %s26, 3
    %p256 = pnand %p254, %p255
    %p257 = pneg %p256
    // Predicated region
    $region9: #{run.3} parent=5 // pred_check
      _
    $region10: #{run.3} parent=5 // pred_check_branch
      %259 = sbr.rel (%p256) target = $region12
    $region11: #{run.3} parent=5 // pred_region
      %s260 = ssub.s32 %s26, 1
      // Predicated region
      $region13: #{run.3} parent=11 // pred_check
        %p261 = pneg %p115
      $region14: #{run.3} parent=11 // pred_check_branch
        %263 = sbr.rel (%p261) target = $region16
      $region15: #{run.3} parent=11 // pred_region
        _
      $region16: #{run.3} parent=11 // pred_fallthru
        _
      // Predicated region
      $region17: #{run.3} parent=11 // pred_check
        %p264 = pneg %p136
      $region18: #{run.3} parent=11 // pred_check_branch
        %266 = sbr.rel (%p264) target = $region20
      $region19: #{run.3} parent=11 // pred_region
        _
      $region20: #{run.3} parent=11 // pred_fallthru
        _
      // Predicated region
      $region21: #{run.3} parent=11 // pred_check
        %p267 = pneg %p157
      $region22: #{run.3} parent=11 // pred_check_branch
        %269 = sbr.rel (%p267) target = $region24
      $region23: #{run.3} parent=11 // pred_region
        _
      $region24: #{run.3} parent=11 // pred_fallthru
        _
      // Predicated region
      $region25: #{run.3} parent=11 // pred_check
        %p270 = pneg %p178
      $region26: #{run.3} parent=11 // pred_check_branch
        %272 = sbr.rel (%p270) target = $region28
      $region27: #{run.3} parent=11 // pred_region
        _
      $region28: #{run.3} parent=11 // pred_fallthru
        _
      // Predicated region
      $region29: #{run.3} parent=11 // pred_check
        %p273 = pneg %p199
      $region30: #{run.3} parent=11 // pred_check_branch
        %275 = sbr.rel (%p273) target = $region32
      $region31: #{run.3} parent=11 // pred_region
        _
      $region32: #{run.3} parent=11 // pred_fallthru
        _
      // Predicated region
      $region33: #{run.3} parent=11 // pred_check
        %p276 = pneg %p220
      $region34: #{run.3} parent=11 // pred_check_branch
        %278 = sbr.rel (%p276) target = $region36
      $region35: #{run.3} parent=11 // pred_region
        _
      $region36: #{run.3} parent=11 // pred_fallthru
        _
    $region12: #{run.3} parent=5 // pred_fallthru
      _
    %p279 = scmp.lt.s32.totalorder %s26, 2
    // Predicated region
    $region37: #{run.3} parent=5 // pred_check
      %p280 = pneg %p279
    $region38: #{run.3} parent=5 // pred_check_branch
      %282 = sbr.rel (%p280) target = $region40
    $region39: #{run.3} parent=5 // pred_region
      // Predicated region
      $region41: #{run.3} parent=39 // pred_check
        %p283 = pneg %p60
      $region42: #{run.3} parent=39 // pred_check_branch
        %285 = sbr.rel (%p283) target = $region44
      $region43: #{run.3} parent=39 // pred_region
        %s286 = sadd.s32 %s33, %s34
        %s287 = smul.u32 8, %s286
        %p288 = scmp.lt.s32.totalorder %s287, 15
        %s289 = scalar_select %p288, %s287, 15
        %s290 = smul.addr %s289, 8
        %s291 = scalar_lea.vmem %s2, %s290
        %s292 = sadd.s32 %s33, %s34
        %s293 = smul.u32 8, %s292
      $region44: #{run.3} parent=39 // pred_fallthru
        _
      // Predicated region
      $region45: #{run.3} parent=39 // pred_check
        %p294 = pneg %p88
      $region46: #{run.3} parent=39 // pred_check_branch
        %296 = sbr.rel (%p294) target = $region48
      $region47: #{run.3} parent=39 // pred_region
        %s297 = sadd.s32 %s33, %s34
        %s298 = smul.u32 8, %s297
        %p299 = scmp.lt.s32.totalorder %s298, 15
        %s300 = scalar_select %p299, %s298, 15
        %s301 = smul.addr %s300, 8
        %s302 = scalar_lea.vmem %s3, %s301
        %s303 = sadd.s32 %s33, %s34
        %s304 = smul.u32 8, %s303
      $region48: #{run.3} parent=39 // pred_fallthru
        _
    $region40: #{run.3} parent=5 // pred_fallthru
      _
    %p305 = scmp.le.s32.totalorder 1, %s26
    %p306 = scmp.lt.s32.totalorder %s26, 3
    %p307 = pnand %p305, %p306
    %p308 = pneg %p307
    // Predicated region
    $region49: #{run.3} parent=5 // pred_check
      _
    $region50: #{run.3} parent=5 // pred_check_branch
      %310 = sbr.rel (%p307) target = $region52
    $region51: #{run.3} parent=5 // pred_region
      %s311 = ssub.s32 %s26, 1
      %s312 = sadd.s32 %s35, %s36
      %s313 = smul.u32 8, %s312
      %p314 = scmp.lt.s32.totalorder %s313, 15
      %s315 = scalar_select %p314, %s313, 15
      %s316 = smul.addr %s315, 8
      %s317 = scalar_lea.vmem %s2, %s316
      %p318 = pneg %p66
      %p319 = pneg %p63
      %s320 = sadd.s32 %s35, %s36
      %s321 = smul.u32 8, %s320
      %p322 = scmp.lt.s32.totalorder %s321, 15
      %s323 = scalar_select %p322, %s321, 15
      %s324 = smul.addr %s323, 8
      %s325 = scalar_lea.vmem %s3, %s324
      %p326 = pneg %p94
      %p327 = pneg %p91
      %p328 = pneg %p115
      %p329 = pneg %p112
      %p330 = pneg %p136
      %p331 = pneg %p133
      %p332 = pneg %p157
      %p333 = pneg %p154
      %p334 = pneg %p178
      %p335 = pneg %p175
      %p336 = pneg %p199
      %p337 = pneg %p196
      %p338 = pneg %p220
      %p339 = pneg %p217
      %p340 = pneg %p246
      %p341 = pneg %p243
      %s342 = smul.u32 2, %s35
      %p343 = scmp.lt.s32.totalorder %s342, 3
      %s344 = scalar_select %p343, %s342, 3
      %s345 = smul.addr %s344, 8
      %s346 = scalar_lea.vmem %s10, %s345
      %s347 = sadd.s32 %s35, %s36
      %s348 = smul.u32 8, %s347
      %p349 = scmp.lt.s32.totalorder %s348, 15
      %s350 = scalar_select %p349, %s348, 15
      %s351 = smul.addr %s350, 8
      %s352 = scalar_lea.vmem %s2, %s351
      %s353 = sadd.s32 %s35, %s36
      %s354 = smul.u32 8, %s353
      %s355 = sadd.s32 %s35, %s36
      %s356 = smul.u32 8, %s355
      %p357 = scmp.lt.s32.totalorder %s356, 15
      %s358 = scalar_select %p357, %s356, 15
      %s359 = smul.addr %s358, 8
      %s360 = scalar_lea.vmem %s3, %s359
      %s361 = sadd.s32 %s35, %s36
      %s362 = smul.u32 8, %s361
      %s363 = smul.u32 2, %s35
      %p364 = scmp.lt.s32.totalorder %s363, 3
      %s365 = scalar_select %p364, %s363, 3
      %s366 = smul.addr %s365, 8
      %s367 = scalar_lea.vmem %s10, %s366
      %s368 = smul.u32 2, %s35
      %p370 = scmp.eq.s32.totalorder %s36, 0
      // Predicated region
      $region53: #{run.3} parent=51 // pred_check
        %p371 = pneg %p370
      $region54: #{run.3} parent=51 // pred_check_branch
        %373 = sbr.rel (%p371) target = $region56
      $region55: #{run.3} parent=51 // pred_region
        %vm374 = vcmask 162816
        %375 = vst.msk [vmem:[%s367] sm:$0xff] %vm374, -3e+38
        %376 = vst.msk [vmem:[%s367 + $0x8] sm:$0xff] %vm374, -3e+38
      $region56: #{run.3} parent=51 // pred_fallthru
        _
      %v377 = vld [vmem:[%s352] sm:$0xff]
      %v378 = vld [vmem:[%s352 + $0x8] sm:$0xff]
      %v379 = vld [vmem:[%s352 + $0x10] sm:$0xff]
      %v380 = vld [vmem:[%s352 + $0x18] sm:$0xff]
      %v381 = vld [vmem:[%s352 + $0x20] sm:$0xff]
      %v382 = vld [vmem:[%s352 + $0x28] sm:$0xff]
      %v383 = vld [vmem:[%s352 + $0x30] sm:$0xff]
      %v384 = vld [vmem:[%s352 + $0x38] sm:$0xff]
      %v385 = vld [vmem:[%s4] sm:$0x3]
      %v386 = vunpack.c.l.bf16 %v385
      %388 = vset.pattern.permute.xlu0 0
      %389 = vperm.xlu0 %388, %v377
      %v390 = vpop.permute.xlu0 %389
      %393 = vset.pattern.permute.xlu0 0
      %394 = vperm.xlu0 %393, %v378
      %v395 = vpop.permute.xlu0 %394
      %398 = vset.pattern.permute.xlu0 0
      %399 = vperm.xlu0 %398, %v379
      %v400 = vpop.permute.xlu0 %399
      %403 = vset.pattern.permute.xlu0 0
      %404 = vperm.xlu0 %403, %v380
      %v405 = vpop.permute.xlu0 %404
      %408 = vset.pattern.permute.xlu0 0
      %409 = vperm.xlu0 %408, %v381
      %v410 = vpop.permute.xlu0 %409
      %413 = vset.pattern.permute.xlu0 0
      %414 = vperm.xlu0 %413, %v382
      %v415 = vpop.permute.xlu0 %414
      %418 = vset.pattern.permute.xlu0 0
      %419 = vperm.xlu0 %418, %v383
      %v420 = vpop.permute.xlu0 %419
      %423 = vset.pattern.permute.xlu0 0
      %424 = vperm.xlu0 %423, %v384
      %v425 = vpop.permute.xlu0 %424
      %v427 = vlaneseq
      %v428 = vshrl.u32 %v427, 7
      %v429 = vsub.s32 0, %v428
      %v430 = vrot.slane %v386, %v429
      %v431 = vmul.f32 %v390, %v430
      %v432 = vmul.f32 %v395, %v430
      %v433 = vmul.f32 %v400, %v430
      %v434 = vmul.f32 %v405, %v430
      %v435 = vmul.f32 %v410, %v430
      %v436 = vmul.f32 %v415, %v430
      %v437 = vmul.f32 %v420, %v430
      %v438 = vmul.f32 %v425, %v430
      %439 = vset.pattern.permute.xlu0 1
      %440 = vperm.xlu0 %439, %v377
      %v441 = vpop.permute.xlu0 %440
      %443 = vset.pattern.permute.xlu0 1
      %444 = vperm.xlu0 %443, %v378
      %v445 = vpop.permute.xlu0 %444
      %447 = vset.pattern.permute.xlu0 1
      %448 = vperm.xlu0 %447, %v379
      %v449 = vpop.permute.xlu0 %448
      %451 = vset.pattern.permute.xlu0 1
      %452 = vperm.xlu0 %451, %v380
      %v453 = vpop.permute.xlu0 %452
      %455 = vset.pattern.permute.xlu0 1
      %456 = vperm.xlu0 %455, %v381
      %v457 = vpop.permute.xlu0 %456
      %459 = vset.pattern.permute.xlu0 1
      %460 = vperm.xlu0 %459, %v382
      %v461 = vpop.permute.xlu0 %460
      %463 = vset.pattern.permute.xlu0 1
      %464 = vperm.xlu0 %463, %v383
      %v465 = vpop.permute.xlu0 %464
      %467 = vset.pattern.permute.xlu0 1
      %468 = vperm.xlu0 %467, %v384
      %v469 = vpop.permute.xlu0 %468
      %v471 = vlaneseq
      %v472 = vshrl.u32 %v471, 7
      %v473 = vsub.s32 1, %v472
      %v474 = vrot.slane %v386, %v473
      %v475 = vmul.f32 %v441, %v474
      %v476 = vmul.f32 %v445, %v474
      %v477 = vmul.f32 %v449, %v474
      %v478 = vmul.f32 %v453, %v474
      %v479 = vmul.f32 %v457, %v474
      %v480 = vmul.f32 %v461, %v474
      %v481 = vmul.f32 %v465, %v474
      %v482 = vmul.f32 %v469, %v474
      %v483 = vadd.f32 %v431, %v475
      %v484 = vadd.f32 %v432, %v476
      %v485 = vadd.f32 %v433, %v477
      %v486 = vadd.f32 %v434, %v478
      %v487 = vadd.f32 %v435, %v479
      %v488 = vadd.f32 %v436, %v480
      %v489 = vadd.f32 %v437, %v481
      %v490 = vadd.f32 %v438, %v482
      %491 = vset.pattern.permute.xlu0 2
      %492 = vperm.xlu0 %491, %v377
      %v493 = vpop.permute.xlu0 %492
      %495 = vset.pattern.permute.xlu0 2
      %496 = vperm.xlu0 %495, %v378
      %v497 = vpop.permute.xlu0 %496
      %499 = vset.pattern.permute.xlu0 2
      %500 = vperm.xlu0 %499, %v379
      %v501 = vpop.permute.xlu0 %500
      %503 = vset.pattern.permute.xlu0 2
      %504 = vperm.xlu0 %503, %v380
      %v505 = vpop.permute.xlu0 %504
      %507 = vset.pattern.permute.xlu0 2
      %508 = vperm.xlu0 %507, %v381
      %v509 = vpop.permute.xlu0 %508
      %511 = vset.pattern.permute.xlu0 2
      %512 = vperm.xlu0 %511, %v382
      %v513 = vpop.permute.xlu0 %512
      %515 = vset.pattern.permute.xlu0 2
      %516 = vperm.xlu0 %515, %v383
      %v517 = vpop.permute.xlu0 %516
      %519 = vset.pattern.permute.xlu0 2
      %520 = vperm.xlu0 %519, %v384
      %v521 = vpop.permute.xlu0 %520
      %v523 = vlaneseq
      %v524 = vshrl.u32 %v523, 7
      %v525 = vsub.s32 2, %v524
      %v526 = vrot.slane %v386, %v525
      %v527 = vmul.f32 %v493, %v526
      %v528 = vmul.f32 %v497, %v526
      %v529 = vmul.f32 %v501, %v526
      %v530 = vmul.f32 %v505, %v526
      %v531 = vmul.f32 %v509, %v526
      %v532 = vmul.f32 %v513, %v526
      %v533 = vmul.f32 %v517, %v526
      %v534 = vmul.f32 %v521, %v526
      %v535 = vadd.f32 %v483, %v527
      %v536 = vadd.f32 %v484, %v528
      %v537 = vadd.f32 %v485, %v529
      %v538 = vadd.f32 %v486, %v530
      %v539 = vadd.f32 %v487, %v531
      %v540 = vadd.f32 %v488, %v532
      %v541 = vadd.f32 %v489, %v533
      %v542 = vadd.f32 %v490, %v534
      %v543 = vld [vmem:[%s5] sm:$0x1]
      %v545 = vlaneseq
      %v546 = vshrl.u32 %v545, 7
      %v547 = vsub.s32 0, %v546
      %v548 = vrot.slane %v543, %v547
      %v550 = vadd.f32 %v535, %v548
      %v551 = vadd.f32 %v536, %v548
      %v552 = vadd.f32 %v537, %v548
      %v553 = vadd.f32 %v538, %v548
      %v554 = vadd.f32 %v539, %v548
      %v555 = vadd.f32 %v540, %v548
      %v556 = vadd.f32 %v541, %v548
      %v557 = vadd.f32 %v542, %v548
      %v558 = vmax.f32 %v550, 0.0
      %v559 = vmax.f32 %v551, 0.0
      %v560 = vmax.f32 %v552, 0.0
      %v561 = vmax.f32 %v553, 0.0
      %v562 = vmax.f32 %v554, 0.0
      %v563 = vmax.f32 %v555, 0.0
      %v564 = vmax.f32 %v556, 0.0
      %v565 = vmax.f32 %v557, 0.0
      %v566 = vpack.c.bf16 %v559, %v558
      %v567 = vpack.c.bf16 %v561, %v560
      %v568 = vpack.c.bf16 %v563, %v562
      %v569 = vpack.c.bf16 %v565, %v564
      %v570 = vld [vmem:[%s6] sm:$0xf]
      %v571 = vld [vmem:[%s6 + $0x4] sm:$0xf]
      %v572 = vld [vmem:[%s6 + $0x8] sm:$0xf]
      %v573 = vld [vmem:[%s6 + $0xc] sm:$0xf]
      %v574 = vld [vmem:[%s6 + $0x10] sm:$0xf]
      %v575 = vld [vmem:[%s6 + $0x14] sm:$0xf]
      %v576 = vld [vmem:[%s6 + $0x18] sm:$0xf]
      %v577 = vld [vmem:[%s6 + $0x1c] sm:$0xf]
      %v578 = vld [vmem:[%s6 + $0x20] sm:$0xf]
      %v579 = vld [vmem:[%s6 + $0x24] sm:$0xf]
      %v580 = vld [vmem:[%s7] sm:$0x1]
      %v582 = vlaneseq
      %v583 = vshrl.u32 %v582, 7
      %v584 = vsub.s32 0, %v583
      %v585 = vrot.slane %v580, %v584
      %v597 = vunpack.c.l.b16 %v570
      %v598 = vunpack.c.l.b16 %v571
      %v599 = vunpack.c.l.b16 %v572
      %v600 = vunpack.c.l.b16 %v573
      %v601 = vunpack.c.l.b16 %v574
      %v602 = vunpack.c.l.b16 %v575
      %v603 = vunpack.c.l.b16 %v576
      %v604 = vunpack.c.l.b16 %v577
      %v605 = vunpack.c.l.b16 %v578
      %v606 = vunpack.c.l.b16 %v579
      %v607 = vpack.c.b16 %v598, %v597
      %v608 = vpack.c.b16 %v600, %v599
      %v609 = vpack.c.b16 %v602, %v601
      %v610 = vpack.c.b16 %v604, %v603
      %v611 = vpack.c.b16 %v606, %v605
      %vm617 = vcmask 654336
      %v619 = vsel %vm617, %v566, 0
      %v622 = vsel %vm617, %v567, 0
      %v625 = vsel %vm617, %v568, 0
      %v628 = vsel %vm617, %v569, 0
      %630 = vmatprep.subr.bf16.mxu0 0
      %631 = vmatpush1.bf16.msra.mxu0 0
      %632 = vmatprep.subr.bf16.mxu0 0
      %633 = vmatpush1.bf16.msra.mxu0 0
      %634 = vmatprep.subr.bf16.mxu0 0
      %635 = vmatpush1.bf16.msra.mxu0 0
      %636 = vmatprep.subr.bf16.mxu0 0
      %637 = vmatpush1.bf16.msra.mxu0 %v611
      %638 = vmatprep.subr.bf16.mxu0 0
      %639 = vmatpush1.bf16.msra.mxu0 %v610
      %640 = vmatprep.subr.bf16.mxu0 0
      %641 = vmatpush1.bf16.msra.mxu0 %v609
      %642 = vmatprep.subr.bf16.mxu0 0
      %643 = vmatpush1.bf16.msra.mxu0 %v608
      %644 = vmatprep.subr.bf16.mxu0 0
      %645 = vmatpush1.bf16.msra.mxu0 %v607
      %646 = vmatprep.subr.bf16.mxu0 0
      %647 = vmatpush2.bf16.msra.mxu0 0
      %648 = vmatprep.subr.bf16.mxu0 0
      %649 = vmatpush2.bf16.msra.mxu0 0
      %650 = vmatprep.subr.bf16.mxu0 0
      %651 = vmatpush2.bf16.msra.mxu0 0
      %652 = vmatprep.subr.bf16.mxu0 0
      %653 = vmatpush2.bf16.msra.mxu0 0
      %654 = vmatprep.subr.bf16.mxu0 0
      %655 = vmatpush2.bf16.msra.mxu0 0
      %656 = vmatprep.subr.bf16.mxu0 0
      %657 = vmatpush2.bf16.msra.mxu0 0
      %658 = vmatprep.subr.bf16.mxu0 0
      %659 = vmatpush2.bf16.msra.mxu0 0
      %660 = vmatprep.subr.bf16.mxu0 0
      %661 = vmatpush2.bf16.msra.mxu0 0
      %662 = vmatprep.mubr.bf16.mxu0 0
      %663 = vmatmul.mubr.bf16.gmra.mxu0 %v619
      %v664 = vpop.f32.mrf.mxu0
      %v665 = vadd.f32 %v585, %v664
      %v666 = vpop.f32.mrf.mxu0
      %v667 = vpop.f32.mrf.mxu0
      %v668 = vadd.f32 %v585, %v667
      %v669 = vpop.f32.mrf.mxu0
      %670 = vmatprep.mubr.bf16.mxu0 0
      %671 = vmatmul.mubr.bf16.gmra.mxu0 %v622
      %v672 = vpop.f32.mrf.mxu0
      %v673 = vadd.f32 %v585, %v672
      %v674 = vpop.f32.mrf.mxu0
      %v675 = vpop.f32.mrf.mxu0
      %v676 = vadd.f32 %v585, %v675
      %v677 = vpop.f32.mrf.mxu0
      %678 = vmatprep.mubr.bf16.mxu0 0
      %679 = vmatmul.mubr.bf16.gmra.mxu0 %v625
      %v680 = vpop.f32.mrf.mxu0
      %v681 = vadd.f32 %v585, %v680
      %v682 = vpop.f32.mrf.mxu0
      %v683 = vpop.f32.mrf.mxu0
      %v684 = vadd.f32 %v585, %v683
      %v685 = vpop.f32.mrf.mxu0
      %686 = vmatprep.mubr.bf16.mxu0 0
      %687 = vmatmul.mubr.bf16.gmra.mxu0 %v628
      %v688 = vpop.f32.mrf.mxu0
      %v689 = vadd.f32 %v585, %v688
      %v690 = vpop.f32.mrf.mxu0
      %v691 = vpop.f32.mrf.mxu0
      %v692 = vadd.f32 %v585, %v691
      %v693 = vpop.f32.mrf.mxu0
      %694 = vdwg.mxu0
      %v695 = vmax.f32 %v665, 0.0
      %v696 = vmax.f32 %v668, 0.0
      %v697 = vmax.f32 %v673, 0.0
      %v698 = vmax.f32 %v676, 0.0
      %v699 = vmax.f32 %v681, 0.0
      %v700 = vmax.f32 %v684, 0.0
      %v701 = vmax.f32 %v689, 0.0
      %v702 = vmax.f32 %v692, 0.0
      %v703 = vpack.c.bf16 %v696, %v695
      %v704 = vpack.c.bf16 %v698, %v697
      %v705 = vpack.c.bf16 %v700, %v699
      %v706 = vpack.c.bf16 %v702, %v701
      %v707 = vld [vmem:[%s8] sm:$0xf]
      %v708 = vld [vmem:[%s8 + $0x4] sm:$0xf]
      %v709 = vld [vmem:[%s8 + $0x8] sm:$0xf]
      %v710 = vld [vmem:[%s8 + $0xc] sm:$0xf]
      %v711 = vld [vmem:[%s8 + $0x10] sm:$0xf]
      %v712 = vld [vmem:[%s9] sm:$0x1]
      %v714 = vlaneseq
      %v715 = vshrl.u32 %v714, 7
      %v716 = vsub.s32 0, %v715
      %v717 = vrot.slane %v712, %v716
      %v724 = vunpack.c.l.b16 %v707
      %v725 = vunpack.c.l.b16 %v708
      %v726 = vunpack.c.l.b16 %v709
      %v727 = vunpack.c.l.b16 %v710
      %v728 = vunpack.c.l.b16 %v711
      %v729 = vpack.c.b16 %v725, %v724
      %v730 = vpack.c.b16 %v727, %v726
      %v731 = vpack.c.b16 %v728, %v728
      %vm734 = vcmask 326656
      %v736 = vsel %vm734, %v703, 0
      %v739 = vsel %vm734, %v704, 0
      %v742 = vsel %vm734, %v705, 0
      %v745 = vsel %vm734, %v706, 0
      %vm747 = vcmask 1043456
      %v749 = vsel %vm747, %v731, 0
      %751 = vmatprep.subr.bf16.mxu0 0
      %752 = vmatpush1.bf16.msra.mxu0 0
      %753 = vmatprep.subr.bf16.mxu0 0
      %754 = vmatpush1.bf16.msra.mxu0 0
      %755 = vmatprep.subr.bf16.mxu0 0
      %756 = vmatpush1.bf16.msra.mxu0 0
      %757 = vmatprep.subr.bf16.mxu0 0
      %758 = vmatpush1.bf16.msra.mxu0 0
      %759 = vmatprep.subr.bf16.mxu0 0
      %760 = vmatpush1.bf16.msra.mxu0 0
      %761 = vmatprep.subr.bf16.mxu0 0
      %762 = vmatpush1.bf16.msra.mxu0 %v749
      %763 = vmatprep.subr.bf16.mxu0 0
      %764 = vmatpush1.bf16.msra.mxu0 %v730
      %765 = vmatprep.subr.bf16.mxu0 0
      %766 = vmatpush1.bf16.msra.mxu0 %v729
      %767 = vmatprep.subr.bf16.mxu0 0
      %768 = vmatpush2.bf16.msra.mxu0 0
      %769 = vmatprep.subr.bf16.mxu0 0
      %770 = vmatpush2.bf16.msra.mxu0 0
      %771 = vmatprep.subr.bf16.mxu0 0
      %772 = vmatpush2.bf16.msra.mxu0 0
      %773 = vmatprep.subr.bf16.mxu0 0
      %774 = vmatpush2.bf16.msra.mxu0 0
      %775 = vmatprep.subr.bf16.mxu0 0
      %776 = vmatpush2.bf16.msra.mxu0 0
      %777 = vmatprep.subr.bf16.mxu0 0
      %778 = vmatpush2.bf16.msra.mxu0 0
      %779 = vmatprep.subr.bf16.mxu0 0
      %780 = vmatpush2.bf16.msra.mxu0 0
      %781 = vmatprep.subr.bf16.mxu0 0
      %782 = vmatpush2.bf16.msra.mxu0 0
      %783 = vmatprep.mubr.bf16.mxu0 0
      %784 = vmatmul.mubr.bf16.gmra.mxu0 %v736
      %v785 = vpop.f32.mrf.mxu0
      %v786 = vadd.f32 %v717, %v785
      %v787 = vpop.f32.mrf.mxu0
      %v788 = vpop.f32.mrf.mxu0
      %v789 = vadd.f32 %v717, %v788
      %v790 = vpop.f32.mrf.mxu0
      %791 = vmatprep.mubr.bf16.mxu0 0
      %792 = vmatmul.mubr.bf16.gmra.mxu0 %v739
      %v793 = vpop.f32.mrf.mxu0
      %v794 = vadd.f32 %v717, %v793
      %v795 = vpop.f32.mrf.mxu0
      %v796 = vpop.f32.mrf.mxu0
      %v797 = vadd.f32 %v717, %v796
      %v798 = vpop.f32.mrf.mxu0
      %799 = vmatprep.mubr.bf16.mxu0 0
      %800 = vmatmul.mubr.bf16.gmra.mxu0 %v742
      %v801 = vpop.f32.mrf.mxu0
      %v802 = vadd.f32 %v717, %v801
      %v803 = vpop.f32.mrf.mxu0
      %v804 = vpop.f32.mrf.mxu0
      %v805 = vadd.f32 %v717, %v804
      %v806 = vpop.f32.mrf.mxu0
      %807 = vmatprep.mubr.bf16.mxu0 0
      %808 = vmatmul.mubr.bf16.gmra.mxu0 %v745
      %v809 = vpop.f32.mrf.mxu0
      %v810 = vadd.f32 %v717, %v809
      %v811 = vpop.f32.mrf.mxu0
      %v812 = vpop.f32.mrf.mxu0
      %v813 = vadd.f32 %v717, %v812
      %v814 = vpop.f32.mrf.mxu0
      %815 = vdwg.mxu0
      %v816 = vmax.f32 %v786, 0.0
      %v817 = vmax.f32 %v789, 0.0
      %v818 = vmax.f32 %v794, 0.0
      %v819 = vmax.f32 %v797, 0.0
      %v820 = vmax.f32 %v802, 0.0
      %v821 = vmax.f32 %v805, 0.0
      %v822 = vmax.f32 %v810, 0.0
      %v823 = vmax.f32 %v813, 0.0
      %v824 = vld [vmem:[%s360] sm:$0xff]
      %v825 = vld [vmem:[%s360 + $0x8] sm:$0xff]
      %v826 = vld [vmem:[%s360 + $0x10] sm:$0xff]
      %v827 = vld [vmem:[%s360 + $0x18] sm:$0xff]
      %v828 = vld [vmem:[%s360 + $0x20] sm:$0xff]
      %v829 = vld [vmem:[%s360 + $0x28] sm:$0xff]
      %v830 = vld [vmem:[%s360 + $0x30] sm:$0xff]
      %v831 = vld [vmem:[%s360 + $0x38] sm:$0xff]
      %s832 = sadd.s32 %s35, %s36
      %s833 = sld [smem:[#allocation3 + %s832]]
      %s834 = sld [smem:[#allocation4 + %s832]]
      %s835 = sadd.s32 %s833, 1
      // While loop
      $region57: #{run.3} parent=51 // loop_pre_header
        _
      $region58: #{run.3} parent=51 // loop_header
        %s837 = sphi %s835, %s839
        %p838 = scmp.ge.s32.totalorder %s837, %s834
      $region59: #{run.3} parent=51 // loop_header_branch
        %841 = sbr.rel (%p838) target = $region63
      $region60: #{run.3} parent=51 // loop_body
        %v842 = vstv %s837
        %vm843 = vcmp.eq.s32.totalorder %v824, %v842
        %vm844 = vcmp.eq.s32.totalorder %v825, %v842
        %vm845 = vcmp.eq.s32.totalorder %v826, %v842
        %vm846 = vcmp.eq.s32.totalorder %v827, %v842
        %vm847 = vcmp.eq.s32.totalorder %v828, %v842
        %vm848 = vcmp.eq.s32.totalorder %v829, %v842
        %vm849 = vcmp.eq.s32.totalorder %v830, %v842
        %vm850 = vcmp.eq.s32.totalorder %v831, %v842
        %v851 = vsel %vm843, 1, 0
        %v852 = vsel %vm844, 1, 0
        %v853 = vsel %vm845, 1, 0
        %v854 = vsel %vm846, 1, 0
        %v855 = vsel %vm847, 1, 0
        %v856 = vsel %vm848, 1, 0
        %v857 = vsel %vm849, 1, 0
        %v858 = vsel %vm850, 1, 0
        %859 = vset.pattern.permute.xlu0 0
        %860 = vperm.xlu0 %859, %v851
        %v861 = vpop.permute.xlu0 %860
        %862 = vset.pattern.permute.xlu0 0
        %863 = vperm.xlu0 %862, %v852
        %v864 = vpop.permute.xlu0 %863
        %865 = vset.pattern.permute.xlu0 0
        %866 = vperm.xlu0 %865, %v853
        %v867 = vpop.permute.xlu0 %866
        %868 = vset.pattern.permute.xlu0 0
        %869 = vperm.xlu0 %868, %v854
        %v870 = vpop.permute.xlu0 %869
        %871 = vset.pattern.permute.xlu0 0
        %872 = vperm.xlu0 %871, %v855
        %v873 = vpop.permute.xlu0 %872
        %874 = vset.pattern.permute.xlu0 0
        %875 = vperm.xlu0 %874, %v856
        %v876 = vpop.permute.xlu0 %875
        %877 = vset.pattern.permute.xlu0 0
        %878 = vperm.xlu0 %877, %v857
        %v879 = vpop.permute.xlu0 %878
        %880 = vset.pattern.permute.xlu0 0
        %881 = vperm.xlu0 %880, %v858
        %v882 = vpop.permute.xlu0 %881
        %vm883 = vcmp.eq.s32.totalorder %v861, 1
        %vm884 = vcmp.eq.s32.totalorder %v864, 1
        %vm885 = vcmp.eq.s32.totalorder %v867, 1
        %vm886 = vcmp.eq.s32.totalorder %v870, 1
        %vm887 = vcmp.eq.s32.totalorder %v873, 1
        %vm888 = vcmp.eq.s32.totalorder %v876, 1
        %vm889 = vcmp.eq.s32.totalorder %v879, 1
        %vm890 = vcmp.eq.s32.totalorder %v882, 1
        %v891 = vsel %vm883, %v816, -3e+38
        %v892 = vsel %vm884, %v817, -3e+38
        %v893 = vsel %vm885, %v818, -3e+38
        %v894 = vsel %vm886, %v819, -3e+38
        %v895 = vsel %vm887, %v820, -3e+38
        %v896 = vsel %vm888, %v821, -3e+38
        %v897 = vsel %vm889, %v822, -3e+38
        %v898 = vsel %vm890, %v823, -3e+38
        %vm899 = vcmask 162816
        %v900 = vsel %vm899, %v891, -inf
        %v901 = vsel %vm899, %v892, -inf
        %v902 = vsel %vm899, %v893, -inf
        %v903 = vsel %vm899, %v894, -inf
        %v904 = vsel %vm899, %v895, -inf
        %v905 = vmax.f32 %v900, %v904
        %v906 = vsel %vm899, %v896, -inf
        %v907 = vmax.f32 %v901, %v906
        %v908 = vsel %vm899, %v897, -inf
        %v909 = vmax.f32 %v902, %v908
        %v910 = vsel %vm899, %v898, -inf
        %v911 = vmax.f32 %v903, %v910
        %v912 = vmax.f32 %v905, %v907
        %v913 = vmax.f32 %v909, %v911
        %v914 = vmax.f32 %v912, %v913
        %v915 = vrot.slane %v914, 4
        %v916 = vmax.f32 %v914, %v915
        %v917 = vrot.slane %v916, 2
        %v918 = vmax.f32 %v916, %v917
        %v919 = vrot.slane %v918, 1
        %v920 = vmax.f32 %v918, %v919
        %s921 = scalar_lea.vmem %s367, %s837
        %vm922 = vcmask 155648
        %923 = vst.msk [vmem:[%s921] sm:$0x1] %vm922, %v920
      $region61: #{run.3} parent=51 // loop_footer
        %s839 = sadd.s32 %s837, 1
      $region62: #{run.3} parent=51 // loop_footer_branch
        %836 = sbr.rel target = $region58
      $region63: #{run.3} parent=51 // loop_exit
        _
      %s924 = scalar_lea.vmem %s367, %s833
      %v925 = vld [vmem:[%s924] sm:$0x1]
      %v926 = vstv %s833
      %vm927 = vcmp.eq.s32.totalorder %v824, %v926
      %vm928 = vcmp.eq.s32.totalorder %v825, %v926
      %vm929 = vcmp.eq.s32.totalorder %v826, %v926
      %vm930 = vcmp.eq.s32.totalorder %v827, %v926
      %vm931 = vcmp.eq.s32.totalorder %v828, %v926
      %vm932 = vcmp.eq.s32.totalorder %v829, %v926
      %vm933 = vcmp.eq.s32.totalorder %v830, %v926
      %vm934 = vcmp.eq.s32.totalorder %v831, %v926
      %v935 = vsel %vm927, 1, 0
      %v936 = vsel %vm928, 1, 0
      %v937 = vsel %vm929, 1, 0
      %v938 = vsel %vm930, 1, 0
      %v939 = vsel %vm931, 1, 0
      %v940 = vsel %vm932, 1, 0
      %v941 = vsel %vm933, 1, 0
      %v942 = vsel %vm934, 1, 0
      %943 = vset.pattern.permute.xlu0 0
      %944 = vperm.xlu0 %943, %v935
      %v945 = vpop.permute.xlu0 %944
      %946 = vset.pattern.permute.xlu0 0
      %947 = vperm.xlu0 %946, %v936
      %v948 = vpop.permute.xlu0 %947
      %949 = vset.pattern.permute.xlu0 0
      %950 = vperm.xlu0 %949, %v937
      %v951 = vpop.permute.xlu0 %950
      %952 = vset.pattern.permute.xlu0 0
      %953 = vperm.xlu0 %952, %v938
      %v954 = vpop.permute.xlu0 %953
      %955 = vset.pattern.permute.xlu0 0
      %956 = vperm.xlu0 %955, %v939
      %v957 = vpop.permute.xlu0 %956
      %958 = vset.pattern.permute.xlu0 0
      %959 = vperm.xlu0 %958, %v940
      %v960 = vpop.permute.xlu0 %959
      %961 = vset.pattern.permute.xlu0 0
      %962 = vperm.xlu0 %961, %v941
      %v963 = vpop.permute.xlu0 %962
      %964 = vset.pattern.permute.xlu0 0
      %965 = vperm.xlu0 %964, %v942
      %v966 = vpop.permute.xlu0 %965
      %vm967 = vcmp.eq.s32.totalorder %v945, 1
      %vm968 = vcmp.eq.s32.totalorder %v948, 1
      %vm969 = vcmp.eq.s32.totalorder %v951, 1
      %vm970 = vcmp.eq.s32.totalorder %v954, 1
      %vm971 = vcmp.eq.s32.totalorder %v957, 1
      %vm972 = vcmp.eq.s32.totalorder %v960, 1
      %vm973 = vcmp.eq.s32.totalorder %v963, 1
      %vm974 = vcmp.eq.s32.totalorder %v966, 1
      %v975 = vsel %vm967, %v816, -3e+38
      %v976 = vsel %vm968, %v817, -3e+38
      %v977 = vsel %vm969, %v818, -3e+38
      %v978 = vsel %vm970, %v819, -3e+38
      %v979 = vsel %vm971, %v820, -3e+38
      %v980 = vsel %vm972, %v821, -3e+38
      %v981 = vsel %vm973, %v822, -3e+38
      %v982 = vsel %vm974, %v823, -3e+38
      %vm983 = vcmask 162816
      %v984 = vsel %vm983, %v975, -inf
      %v985 = vsel %vm983, %v976, -inf
      %v986 = vsel %vm983, %v977, -inf
      %v987 = vsel %vm983, %v978, -inf
      %v988 = vsel %vm983, %v979, -inf
      %v989 = vmax.f32 %v984, %v988
      %v990 = vsel %vm983, %v980, -inf
      %v991 = vmax.f32 %v985, %v990
      %v992 = vsel %vm983, %v981, -inf
      %v993 = vmax.f32 %v986, %v992
      %v994 = vsel %vm983, %v982, -inf
      %v995 = vmax.f32 %v987, %v994
      %v996 = vmax.f32 %v989, %v991
      %v997 = vmax.f32 %v993, %v995
      %v998 = vmax.f32 %v996, %v997
      %v999 = vrot.slane %v998, 4
      %v1000 = vmax.f32 %v998, %v999
      %v1001 = vrot.slane %v1000, 2
      %v1002 = vmax.f32 %v1000, %v1001
      %v1003 = vrot.slane %v1002, 1
      %v1004 = vmax.f32 %v1002, %v1003
      %v1005 = vmax.f32 %v925, %v1004
      %vm1006 = vcmask 155648
      %1007 = vst.msk [vmem:[%s924] sm:$0x1] %vm1006, %v1005
      %s1008 = scalar_lea.vmem %s367, %s834
      %v1009 = vld [vmem:[%s1008] sm:$0x1]
      %v1010 = vstv %s834
      %vm1011 = vcmp.eq.s32.totalorder %v824, %v1010
      %vm1012 = vcmp.eq.s32.totalorder %v825, %v1010
      %vm1013 = vcmp.eq.s32.totalorder %v826, %v1010
      %vm1014 = vcmp.eq.s32.totalorder %v827, %v1010
      %vm1015 = vcmp.eq.s32.totalorder %v828, %v1010
      %vm1016 = vcmp.eq.s32.totalorder %v829, %v1010
      %vm1017 = vcmp.eq.s32.totalorder %v830, %v1010
      %vm1018 = vcmp.eq.s32.totalorder %v831, %v1010
      %v1019 = vsel %vm1011, 1, 0
      %v1020 = vsel %vm1012, 1, 0
      %v1021 = vsel %vm1013, 1, 0
      %v1022 = vsel %vm1014, 1, 0
      %v1023 = vsel %vm1015, 1, 0
      %v1024 = vsel %vm1016, 1, 0
      %v1025 = vsel %vm1017, 1, 0
      %v1026 = vsel %vm1018, 1, 0
      %1027 = vset.pattern.permute.xlu0 0
      %1028 = vperm.xlu0 %1027, %v1019
      %v1029 = vpop.permute.xlu0 %1028
      %1030 = vset.pattern.permute.xlu0 0
      %1031 = vperm.xlu0 %1030, %v1020
      %v1032 = vpop.permute.xlu0 %1031
      %1033 = vset.pattern.permute.xlu0 0
      %1034 = vperm.xlu0 %1033, %v1021
      %v1035 = vpop.permute.xlu0 %1034
      %1036 = vset.pattern.permute.xlu0 0
      %1037 = vperm.xlu0 %1036, %v1022
      %v1038 = vpop.permute.xlu0 %1037
      %1039 = vset.pattern.permute.xlu0 0
      %1040 = vperm.xlu0 %1039, %v1023
      %v1041 = vpop.permute.xlu0 %1040
      %1042 = vset.pattern.permute.xlu0 0
      %1043 = vperm.xlu0 %1042, %v1024
      %v1044 = vpop.permute.xlu0 %1043
      %1045 = vset.pattern.permute.xlu0 0
      %1046 = vperm.xlu0 %1045, %v1025
      %v1047 = vpop.permute.xlu0 %1046
      %1048 = vset.pattern.permute.xlu0 0
      %1049 = vperm.xlu0 %1048, %v1026
      %v1050 = vpop.permute.xlu0 %1049
      %vm1051 = vcmp.eq.s32.totalorder %v1029, 1
      %vm1052 = vcmp.eq.s32.totalorder %v1032, 1
      %vm1053 = vcmp.eq.s32.totalorder %v1035, 1
      %vm1054 = vcmp.eq.s32.totalorder %v1038, 1
      %vm1055 = vcmp.eq.s32.totalorder %v1041, 1
      %vm1056 = vcmp.eq.s32.totalorder %v1044, 1
      %vm1057 = vcmp.eq.s32.totalorder %v1047, 1
      %vm1058 = vcmp.eq.s32.totalorder %v1050, 1
      %v1059 = vsel %vm1051, %v816, -3e+38
      %v1060 = vsel %vm1052, %v817, -3e+38
      %v1061 = vsel %vm1053, %v818, -3e+38
      %v1062 = vsel %vm1054, %v819, -3e+38
      %v1063 = vsel %vm1055, %v820, -3e+38
      %v1064 = vsel %vm1056, %v821, -3e+38
      %v1065 = vsel %vm1057, %v822, -3e+38
      %v1066 = vsel %vm1058, %v823, -3e+38
      %v1067 = vsel %vm983, %v1059, -inf
      %v1068 = vsel %vm983, %v1060, -inf
      %v1069 = vsel %vm983, %v1061, -inf
      %v1070 = vsel %vm983, %v1062, -inf
      %v1071 = vsel %vm983, %v1063, -inf
      %v1072 = vmax.f32 %v1067, %v1071
      %v1073 = vsel %vm983, %v1064, -inf
      %v1074 = vmax.f32 %v1068, %v1073
      %v1075 = vsel %vm983, %v1065, -inf
      %v1076 = vmax.f32 %v1069, %v1075
      %v1077 = vsel %vm983, %v1066, -inf
      %v1078 = vmax.f32 %v1070, %v1077
      %v1079 = vmax.f32 %v1072, %v1074
      %v1080 = vmax.f32 %v1076, %v1078
      %v1081 = vmax.f32 %v1079, %v1080
      %v1082 = vrot.slane %v1081, 4
      %v1083 = vmax.f32 %v1081, %v1082
      %v1084 = vrot.slane %v1083, 2
      %v1085 = vmax.f32 %v1083, %v1084
      %v1086 = vrot.slane %v1085, 1
      %v1087 = vmax.f32 %v1085, %v1086
      %v1088 = vmax.f32 %v1009, %v1087
      %1089 = vst.msk [vmem:[%s1008] sm:$0x1] %vm1006, %v1088
      %s1090 = smul.u32 2, %s35
      %p1091 = scmp.lt.s32.totalorder %s1090, 3
      %s1092 = scalar_select %p1091, %s1090, 3
      %s1093 = smul.addr %s1092, 8
      %s1094 = scalar_lea.vmem %s10, %s1093
      // Predicated region
      $region64: #{run.3} parent=51 // pred_check
        %p1095 = pneg %p243
      $region65: #{run.3} parent=51 // pred_check_branch
        %1097 = sbr.rel (%p1095) target = $region67
      $region66: #{run.3} parent=51 // pred_region
        %s1098 = smul.u32 2, %s35
      $region67: #{run.3} parent=51 // pred_fallthru
        _
    $region52: #{run.3} parent=5 // pred_fallthru
      _
    %p1099 = scmp.le.s32.totalorder 2, %s26
    // Predicated region
    $region68: #{run.3} parent=5 // pred_check
      %p1100 = pneg %p1099
    $region69: #{run.3} parent=5 // pred_check_branch
      %1102 = sbr.rel (%p1100) target = $region71
    $region70: #{run.3} parent=5 // pred_region
      %s1103 = ssub.s32 %s26, 2
      // Predicated region
      $region72: #{run.3} parent=70 // pred_check
        %p1104 = pneg %p249
      $region73: #{run.3} parent=70 // pred_check_branch
        %1106 = sbr.rel (%p1104) target = $region75
      $region74: #{run.3} parent=70 // pred_region
        %s1107 = smul.u32 2, %s37
        %p1108 = scmp.lt.s32.totalorder %s1107, 3
        %s1109 = scalar_select %p1108, %s1107, 3
        %s1110 = smul.addr %s1109, 8
        %s1111 = scalar_lea.vmem %s10, %s1110
      $region75: #{run.3} parent=70 // pred_fallthru
        _
    $region71: #{run.3} parent=5 // pred_fallthru
      _
  $region6: #{run.3} parent=0 // loop_footer
    %s30 = sadd.s32 1, %s26
  $region7: #{run.3} parent=0 // loop_footer_branch
    %25 = sbr.rel target = $region3
  $region8: #{run.3} parent=0 // loop_exit
    _

// kernel: run.4
$region0: #{run.4}
  #allocation0 [shape = 'u32[]', space=smem, size = 0x4, offset = 0x4, fixed_abs, tag = 'smem constant byte address 0x4 - core index']
  #allocation1 [shape = 'u32[144,128]{1,0:T(1,128)}', space=vmem, size = 0x12000, scoped, tag = 'internal scratch']
  #allocation2 [shape = 's32[1]{0}', space=sflag, size = 0x4, scoped, tag = 'scoped memory for run.4']
  #allocation3 [shape = 'u8[512]{0}', space=smem, size = 0x200, scoped, tag = 'prefetched SMEM operand 0']
  #allocation4 [shape = 'u8[512]{0}', space=smem, size = 0x200, scoped, tag = 'prefetched SMEM operand 1']
  %s0 = inlined_call_operand.vmem [shape: s32[2], index: 0, kind: input, shape index: {}]
  %s1 = inlined_call_operand.vmem [shape: s32[2], index: 1, kind: input, shape index: {}]
  %s2 = inlined_call_operand.vmem [shape: f32[64,3], index: 2, kind: input, shape index: {}]
  %s3 = inlined_call_operand.vmem [shape: bf16[64,20], index: 3, kind: input, shape index: {}]
  %s4 = inlined_call_operand.vmem [shape: s32[64,1], index: 4, kind: input, shape index: {}]
  %s5 = inlined_call_operand.vmem [shape: bf16[3,80], index: 5, kind: input, shape index: {}]
  %s6 = inlined_call_operand.vmem [shape: f32[1,80], index: 6, kind: input, shape index: {}]
  %s7 = inlined_call_operand.vmem [shape: bf16[80,40], index: 7, kind: input, shape index: {}]
  %s8 = inlined_call_operand.vmem [shape: f32[1,40], index: 8, kind: input, shape index: {}]
  %s9 = inlined_call_operand.vmem [shape: bf16[40,20], index: 9, kind: input, shape index: {}]
  %s10 = inlined_call_operand.vmem [shape: f32[1,20], index: 10, kind: input, shape index: {}]
  %s11 = inlined_call_operand.vmem [shape: bf16[40,30], index: 11, kind: input, shape index: {}]
  %s12 = inlined_call_operand.vmem [shape: f32[1,30], index: 12, kind: input, shape index: {}]
  %s13 = inlined_call_operand.vmem [shape: f32[16,30], index: 13, kind: output, shape index: {0}]
  %s14 = inlined_call_operand.vmem [shape: f32[16,20], index: 14, kind: output, shape index: {1}]
  %15 = xla_tuple %s13, %s14
  %s16 = sld [smem:[#allocation0]]
  $region96: #{run.4} parent=0
    _
  %s18 = ssub.s32 1, %s16
  %s19 = scalar_select 0, %s18, %s16
  %s20 = sshll.u32 %s0, 4
  %s21 = int_to_ptr.vmem [resolvable:$true] %s20
  %23 = dma.vmem_to_smem %s21, 16, [#allocation3], [#allocation2]
  %s24 = sshll.u32 %s1, 4
  %s25 = int_to_ptr.vmem [resolvable:$true] %s24
  %27 = dma.vmem_to_smem %s25, 16, [#allocation4], [#allocation2]
  %28 = dma.done [#allocation2], 32
  %29 = sfence
  loop: start=0, step=1, limit=4
  $region2: #{run.4} parent=0 // loop_pre_header
    _
  $region3: #{run.4} parent=0 // loop_header
    %s31 = sphi 0, %s35
    %p32 = scmp.ge.s32.totalorder %s31, 4
    %s38 = sphi 0, %s50
    %s39 = sphi 0, %s46
    %s40 = sphi 0, %s38
    %s41 = sphi 0, %s39
    %s42 = sphi 0, %s40
    %s43 = sphi 0, %s41
    %s55 = sphi 0, %s57
    %s58 = sphi 0, %s55
    %s59 = sphi 0, %s58
    %s75 = sphi 0, %s59
    %s83 = sphi 0, %s85
    %s86 = sphi 0, %s83
    %s87 = sphi 0, %s86
    %s103 = sphi 0, %s87
    %s111 = sphi 0, %s113
    %s114 = sphi 0, %s111
    %s115 = sphi 0, %s114
    %s131 = sphi 0, %s115
    %s135 = sphi 0, %s135
    %s137 = sphi 0, %s135
    %s138 = sphi 0, %s137
    %s152 = sphi 0, %s138
    %s156 = sphi 0, %s156
    %s158 = sphi 0, %s156
    %s159 = sphi 0, %s158
    %s173 = sphi 0, %s159
    %s177 = sphi 0, %s177
    %s179 = sphi 0, %s177
    %s180 = sphi 0, %s179
    %s194 = sphi 0, %s180
    %s198 = sphi 0, %s198
    %s200 = sphi 0, %s198
    %s201 = sphi 0, %s200
    %s215 = sphi 0, %s201
    %s219 = sphi 0, %s219
    %s221 = sphi 0, %s219
    %s222 = sphi 0, %s221
    %s236 = sphi 0, %s222
    %s240 = sphi 0, %s240
    %s242 = sphi 0, %s240
    %s243 = sphi 0, %s242
    %s257 = sphi 0, %s243
    %s261 = sphi 0, %s261
    %s263 = sphi 0, %s261
    %s264 = sphi 0, %s263
    %s278 = sphi 0, %s264
    %s282 = sphi 0, %s282
    %s284 = sphi 0, %s282
    %s285 = sphi 0, %s284
    %s299 = sphi 0, %s285
    %s305 = sphi 0, %s307
    %s308 = sphi 0, %s305
    %s309 = sphi 0, %s308
    %s325 = sphi 0, %s309
    %s331 = sphi 0, %s333
    %s334 = sphi 0, %s331
    %s335 = sphi 0, %s334
    %s351 = sphi 0, %s335
  $region4: #{run.4} parent=0 // loop_header_branch
    %34 = sbr.rel (%p32) target = $region8
  $region5: #{run.4} parent=0 // loop_body
    %s36 = ssub.s32 %s31, 1
    %s37 = ssub.s32 %s31, 2
    %s44 = sadd.s32 1, %s39
    %p45 = scmp.ge.s32.totalorder %s44, 1
    %s46 = scalar_select %p45, 0, %s44
    %s47 = sadd.s32 1, %s38
    %s48 = scalar_select %p45, %s47, %s38
    %p49 = scmp.ge.s32.totalorder %s48, 2
    %s50 = scalar_select %p49, 0, %s48
    %s51 = sadd.s32 %s38, %s39
    %s52 = sadd.s32 %s50, %s46
    %s53 = ssub.s32 %s51, %s52
    %p54 = scmp.eq.s32.totalorder %s53, 0
    %s56 = sadd.s32 %s55, 1
    %s57 = scalar_select %p54, %s55, %s56
    %p60 = pneg %p54
    %p61 = scmp.eq.s32.totalorder %s31, 1
    %p62 = por %p60, %p61
    %p63 = scmp.ne.s32.totalorder %s55, %s58
    %p64 = scmp.eq.s32.totalorder %s31, 0
    %p65 = por %p63, %p64
    %p66 = scmp.ne.s32.totalorder %s55, %s58
    %p67 = scmp.eq.s32.totalorder %s36, 1
    %p68 = por %p66, %p67
    %p69 = scmp.ne.s32.totalorder %s58, %s59
    %p70 = scmp.eq.s32.totalorder %s36, 0
    %p71 = por %p69, %p70
    %p72 = scmp.ne.s32.totalorder %s58, %s59
    %p73 = scmp.eq.s32.totalorder %s37, 1
    %p74 = por %p72, %p73
    %p76 = scmp.ne.s32.totalorder %s59, %s75
    %p77 = scmp.eq.s32.totalorder %s37, 0
    %p78 = por %p76, %p77
    %s79 = sadd.s32 %s38, %s39
    %s80 = sadd.s32 %s50, %s46
    %s81 = ssub.s32 %s79, %s80
    %p82 = scmp.eq.s32.totalorder %s81, 0
    %s84 = sadd.s32 %s83, 1
    %s85 = scalar_select %p82, %s83, %s84
    %p88 = pneg %p82
    %p89 = scmp.eq.s32.totalorder %s31, 1
    %p90 = por %p88, %p89
    %p91 = scmp.ne.s32.totalorder %s83, %s86
    %p92 = scmp.eq.s32.totalorder %s31, 0
    %p93 = por %p91, %p92
    %p94 = scmp.ne.s32.totalorder %s83, %s86
    %p95 = scmp.eq.s32.totalorder %s36, 1
    %p96 = por %p94, %p95
    %p97 = scmp.ne.s32.totalorder %s86, %s87
    %p98 = scmp.eq.s32.totalorder %s36, 0
    %p99 = por %p97, %p98
    %p100 = scmp.ne.s32.totalorder %s86, %s87
    %p101 = scmp.eq.s32.totalorder %s37, 1
    %p102 = por %p100, %p101
    %p104 = scmp.ne.s32.totalorder %s87, %s103
    %p105 = scmp.eq.s32.totalorder %s37, 0
    %p106 = por %p104, %p105
    %s107 = sadd.s32 %s38, %s39
    %s108 = sadd.s32 %s50, %s46
    %s109 = ssub.s32 %s107, %s108
    %p110 = scmp.eq.s32.totalorder %s109, 0
    %s112 = sadd.s32 %s111, 1
    %s113 = scalar_select %p110, %s111, %s112
    %p116 = pneg %p110
    %p117 = scmp.eq.s32.totalorder %s31, 1
    %p118 = por %p116, %p117
    %p119 = scmp.ne.s32.totalorder %s111, %s114
    %p120 = scmp.eq.s32.totalorder %s31, 0
    %p121 = por %p119, %p120
    %p122 = scmp.ne.s32.totalorder %s111, %s114
    %p123 = scmp.eq.s32.totalorder %s36, 1
    %p124 = por %p122, %p123
    %p125 = scmp.ne.s32.totalorder %s114, %s115
    %p126 = scmp.eq.s32.totalorder %s36, 0
    %p127 = por %p125, %p126
    %p128 = scmp.ne.s32.totalorder %s114, %s115
    %p129 = scmp.eq.s32.totalorder %s37, 1
    %p130 = por %p128, %p129
    %p132 = scmp.ne.s32.totalorder %s115, %s131
    %p133 = scmp.eq.s32.totalorder %s37, 0
    %p134 = por %p132, %p133
    %s136 = sadd.s32 %s135, 1
    %p139 = scmp.eq.s32.totalorder %s31, 1
    %p140 = scmp.ne.s32.totalorder %s135, %s137
    %p141 = scmp.eq.s32.totalorder %s31, 0
    %p142 = por %p140, %p141
    %p143 = scmp.ne.s32.totalorder %s135, %s137
    %p144 = scmp.eq.s32.totalorder %s36, 1
    %p145 = por %p143, %p144
    %p146 = scmp.ne.s32.totalorder %s137, %s138
    %p147 = scmp.eq.s32.totalorder %s36, 0
    %p148 = por %p146, %p147
    %p149 = scmp.ne.s32.totalorder %s137, %s138
    %p150 = scmp.eq.s32.totalorder %s37, 1
    %p151 = por %p149, %p150
    %p153 = scmp.ne.s32.totalorder %s138, %s152
    %p154 = scmp.eq.s32.totalorder %s37, 0
    %p155 = por %p153, %p154
    %s157 = sadd.s32 %s156, 1
    %p160 = scmp.eq.s32.totalorder %s31, 1
    %p161 = scmp.ne.s32.totalorder %s156, %s158
    %p162 = scmp.eq.s32.totalorder %s31, 0
    %p163 = por %p161, %p162
    %p164 = scmp.ne.s32.totalorder %s156, %s158
    %p165 = scmp.eq.s32.totalorder %s36, 1
    %p166 = por %p164, %p165
    %p167 = scmp.ne.s32.totalorder %s158, %s159
    %p168 = scmp.eq.s32.totalorder %s36, 0
    %p169 = por %p167, %p168
    %p170 = scmp.ne.s32.totalorder %s158, %s159
    %p171 = scmp.eq.s32.totalorder %s37, 1
    %p172 = por %p170, %p171
    %p174 = scmp.ne.s32.totalorder %s159, %s173
    %p175 = scmp.eq.s32.totalorder %s37, 0
    %p176 = por %p174, %p175
    %s178 = sadd.s32 %s177, 1
    %p181 = scmp.eq.s32.totalorder %s31, 1
    %p182 = scmp.ne.s32.totalorder %s177, %s179
    %p183 = scmp.eq.s32.totalorder %s31, 0
    %p184 = por %p182, %p183
    %p185 = scmp.ne.s32.totalorder %s177, %s179
    %p186 = scmp.eq.s32.totalorder %s36, 1
    %p187 = por %p185, %p186
    %p188 = scmp.ne.s32.totalorder %s179, %s180
    %p189 = scmp.eq.s32.totalorder %s36, 0
    %p190 = por %p188, %p189
    %p191 = scmp.ne.s32.totalorder %s179, %s180
    %p192 = scmp.eq.s32.totalorder %s37, 1
    %p193 = por %p191, %p192
    %p195 = scmp.ne.s32.totalorder %s180, %s194
    %p196 = scmp.eq.s32.totalorder %s37, 0
    %p197 = por %p195, %p196
    %s199 = sadd.s32 %s198, 1
    %p202 = scmp.eq.s32.totalorder %s31, 1
    %p203 = scmp.ne.s32.totalorder %s198, %s200
    %p204 = scmp.eq.s32.totalorder %s31, 0
    %p205 = por %p203, %p204
    %p206 = scmp.ne.s32.totalorder %s198, %s200
    %p207 = scmp.eq.s32.totalorder %s36, 1
    %p208 = por %p206, %p207
    %p209 = scmp.ne.s32.totalorder %s200, %s201
    %p210 = scmp.eq.s32.totalorder %s36, 0
    %p211 = por %p209, %p210
    %p212 = scmp.ne.s32.totalorder %s200, %s201
    %p213 = scmp.eq.s32.totalorder %s37, 1
    %p214 = por %p212, %p213
    %p216 = scmp.ne.s32.totalorder %s201, %s215
    %p217 = scmp.eq.s32.totalorder %s37, 0
    %p218 = por %p216, %p217
    %s220 = sadd.s32 %s219, 1
    %p223 = scmp.eq.s32.totalorder %s31, 1
    %p224 = scmp.ne.s32.totalorder %s219, %s221
    %p225 = scmp.eq.s32.totalorder %s31, 0
    %p226 = por %p224, %p225
    %p227 = scmp.ne.s32.totalorder %s219, %s221
    %p228 = scmp.eq.s32.totalorder %s36, 1
    %p229 = por %p227, %p228
    %p230 = scmp.ne.s32.totalorder %s221, %s222
    %p231 = scmp.eq.s32.totalorder %s36, 0
    %p232 = por %p230, %p231
    %p233 = scmp.ne.s32.totalorder %s221, %s222
    %p234 = scmp.eq.s32.totalorder %s37, 1
    %p235 = por %p233, %p234
    %p237 = scmp.ne.s32.totalorder %s222, %s236
    %p238 = scmp.eq.s32.totalorder %s37, 0
    %p239 = por %p237, %p238
    %s241 = sadd.s32 %s240, 1
    %p244 = scmp.eq.s32.totalorder %s31, 1
    %p245 = scmp.ne.s32.totalorder %s240, %s242
    %p246 = scmp.eq.s32.totalorder %s31, 0
    %p247 = por %p245, %p246
    %p248 = scmp.ne.s32.totalorder %s240, %s242
    %p249 = scmp.eq.s32.totalorder %s36, 1
    %p250 = por %p248, %p249
    %p251 = scmp.ne.s32.totalorder %s242, %s243
    %p252 = scmp.eq.s32.totalorder %s36, 0
    %p253 = por %p251, %p252
    %p254 = scmp.ne.s32.totalorder %s242, %s243
    %p255 = scmp.eq.s32.totalorder %s37, 1
    %p256 = por %p254, %p255
    %p258 = scmp.ne.s32.totalorder %s243, %s257
    %p259 = scmp.eq.s32.totalorder %s37, 0
    %p260 = por %p258, %p259
    %s262 = sadd.s32 %s261, 1
    %p265 = scmp.eq.s32.totalorder %s31, 1
    %p266 = scmp.ne.s32.totalorder %s261, %s263
    %p267 = scmp.eq.s32.totalorder %s31, 0
    %p268 = por %p266, %p267
    %p269 = scmp.ne.s32.totalorder %s261, %s263
    %p270 = scmp.eq.s32.totalorder %s36, 1
    %p271 = por %p269, %p270
    %p272 = scmp.ne.s32.totalorder %s263, %s264
    %p273 = scmp.eq.s32.totalorder %s36, 0
    %p274 = por %p272, %p273
    %p275 = scmp.ne.s32.totalorder %s263, %s264
    %p276 = scmp.eq.s32.totalorder %s37, 1
    %p277 = por %p275, %p276
    %p279 = scmp.ne.s32.totalorder %s264, %s278
    %p280 = scmp.eq.s32.totalorder %s37, 0
    %p281 = por %p279, %p280
    %s283 = sadd.s32 %s282, 1
    %p286 = scmp.eq.s32.totalorder %s31, 1
    %p287 = scmp.ne.s32.totalorder %s282, %s284
    %p288 = scmp.eq.s32.totalorder %s31, 0
    %p289 = por %p287, %p288
    %p290 = scmp.ne.s32.totalorder %s282, %s284
    %p291 = scmp.eq.s32.totalorder %s36, 1
    %p292 = por %p290, %p291
    %p293 = scmp.ne.s32.totalorder %s284, %s285
    %p294 = scmp.eq.s32.totalorder %s36, 0
    %p295 = por %p293, %p294
    %p296 = scmp.ne.s32.totalorder %s284, %s285
    %p297 = scmp.eq.s32.totalorder %s37, 1
    %p298 = por %p296, %p297
    %p300 = scmp.ne.s32.totalorder %s285, %s299
    %p301 = scmp.eq.s32.totalorder %s37, 0
    %p302 = por %p300, %p301
    %s303 = ssub.s32 %s38, %s50
    %p304 = scmp.eq.s32.totalorder %s303, 0
    %s306 = sadd.s32 %s305, 1
    %s307 = scalar_select %p304, %s305, %s306
    %p310 = pneg %p304
    %p311 = scmp.eq.s32.totalorder %s31, 1
    %p312 = por %p310, %p311
    %p313 = scmp.ne.s32.totalorder %s305, %s308
    %p314 = scmp.eq.s32.totalorder %s31, 0
    %p315 = por %p313, %p314
    %p316 = scmp.ne.s32.totalorder %s305, %s308
    %p317 = scmp.eq.s32.totalorder %s36, 1
    %p318 = por %p316, %p317
    %p319 = scmp.ne.s32.totalorder %s308, %s309
    %p320 = scmp.eq.s32.totalorder %s36, 0
    %p321 = por %p319, %p320
    %p322 = scmp.ne.s32.totalorder %s308, %s309
    %p323 = scmp.eq.s32.totalorder %s37, 1
    %p324 = por %p322, %p323
    %p326 = scmp.ne.s32.totalorder %s309, %s325
    %p327 = scmp.eq.s32.totalorder %s37, 0
    %p328 = por %p326, %p327
    %s329 = ssub.s32 %s38, %s50
    %p330 = scmp.eq.s32.totalorder %s329, 0
    %s332 = sadd.s32 %s331, 1
    %s333 = scalar_select %p330, %s331, %s332
    %p336 = pneg %p330
    %p337 = scmp.eq.s32.totalorder %s31, 1
    %p338 = por %p336, %p337
    %p339 = scmp.ne.s32.totalorder %s331, %s334
    %p340 = scmp.eq.s32.totalorder %s31, 0
    %p341 = por %p339, %p340
    %p342 = scmp.ne.s32.totalorder %s331, %s334
    %p343 = scmp.eq.s32.totalorder %s36, 1
    %p344 = por %p342, %p343
    %p345 = scmp.ne.s32.totalorder %s334, %s335
    %p346 = scmp.eq.s32.totalorder %s36, 0
    %p347 = por %p345, %p346
    %p348 = scmp.ne.s32.totalorder %s334, %s335
    %p349 = scmp.eq.s32.totalorder %s37, 1
    %p350 = por %p348, %p349
    %p352 = scmp.ne.s32.totalorder %s335, %s351
    %p353 = scmp.eq.s32.totalorder %s37, 0
    %p354 = por %p352, %p353
    %p355 = scmp.le.s32.totalorder 1, %s31
    %p356 = scmp.lt.s32.totalorder %s31, 3
    %p357 = pnand %p355, %p356
    %p358 = pneg %p357
    // Predicated region
    $region9: #{run.4} parent=5 // pred_check
      _
    $region10: #{run.4} parent=5 // pred_check_branch
      %360 = sbr.rel (%p357) target = $region12
    $region11: #{run.4} parent=5 // pred_region
      %s361 = ssub.s32 %s31, 1
      // Predicated region
      $region13: #{run.4} parent=11 // pred_check
        %p362 = pneg %p148
      $region14: #{run.4} parent=11 // pred_check_branch
        %364 = sbr.rel (%p362) target = $region16
      $region15: #{run.4} parent=11 // pred_region
        _
      $region16: #{run.4} parent=11 // pred_fallthru
        _
      // Predicated region
      $region17: #{run.4} parent=11 // pred_check
        %p365 = pneg %p169
      $region18: #{run.4} parent=11 // pred_check_branch
        %367 = sbr.rel (%p365) target = $region20
      $region19: #{run.4} parent=11 // pred_region
        _
      $region20: #{run.4} parent=11 // pred_fallthru
        _
      // Predicated region
      $region21: #{run.4} parent=11 // pred_check
        %p368 = pneg %p190
      $region22: #{run.4} parent=11 // pred_check_branch
        %370 = sbr.rel (%p368) target = $region24
      $region23: #{run.4} parent=11 // pred_region
        _
      $region24: #{run.4} parent=11 // pred_fallthru
        _
      // Predicated region
      $region25: #{run.4} parent=11 // pred_check
        %p371 = pneg %p211
      $region26: #{run.4} parent=11 // pred_check_branch
        %373 = sbr.rel (%p371) target = $region28
      $region27: #{run.4} parent=11 // pred_region
        _
      $region28: #{run.4} parent=11 // pred_fallthru
        _
      // Predicated region
      $region29: #{run.4} parent=11 // pred_check
        %p374 = pneg %p232
      $region30: #{run.4} parent=11 // pred_check_branch
        %376 = sbr.rel (%p374) target = $region32
      $region31: #{run.4} parent=11 // pred_region
        _
      $region32: #{run.4} parent=11 // pred_fallthru
        _
      // Predicated region
      $region33: #{run.4} parent=11 // pred_check
        %p377 = pneg %p253
      $region34: #{run.4} parent=11 // pred_check_branch
        %379 = sbr.rel (%p377) target = $region36
      $region35: #{run.4} parent=11 // pred_region
        _
      $region36: #{run.4} parent=11 // pred_fallthru
        _
      // Predicated region
      $region37: #{run.4} parent=11 // pred_check
        %p380 = pneg %p274
      $region38: #{run.4} parent=11 // pred_check_branch
        %382 = sbr.rel (%p380) target = $region40
      $region39: #{run.4} parent=11 // pred_region
        _
      $region40: #{run.4} parent=11 // pred_fallthru
        _
      // Predicated region
      $region41: #{run.4} parent=11 // pred_check
        %p383 = pneg %p295
      $region42: #{run.4} parent=11 // pred_check_branch
        %385 = sbr.rel (%p383) target = $region44
      $region43: #{run.4} parent=11 // pred_region
        _
      $region44: #{run.4} parent=11 // pred_fallthru
        _
    $region12: #{run.4} parent=5 // pred_fallthru
      _
    %p386 = scmp.lt.s32.totalorder %s31, 2
    // Predicated region
    $region45: #{run.4} parent=5 // pred_check
      %p387 = pneg %p386
    $region46: #{run.4} parent=5 // pred_check_branch
      %389 = sbr.rel (%p387) target = $region48
    $region47: #{run.4} parent=5 // pred_region
      // Predicated region
      $region49: #{run.4} parent=47 // pred_check
        %p390 = pneg %p65
      $region50: #{run.4} parent=47 // pred_check_branch
        %392 = sbr.rel (%p390) target = $region52
      $region51: #{run.4} parent=47 // pred_region
        %s393 = sadd.s32 %s38, %s39
        %s394 = smul.u32 4, %s393
        %p395 = scmp.lt.s32.totalorder %s394, 7
        %s396 = scalar_select %p395, %s394, 7
        %s397 = smul.addr %s396, 8
        %s398 = scalar_lea.vmem %s2, %s397
        %s399 = sadd.s32 %s38, %s39
        %s400 = smul.u32 4, %s399
      $region52: #{run.4} parent=47 // pred_fallthru
        _
      // Predicated region
      $region53: #{run.4} parent=47 // pred_check
        %p401 = pneg %p93
      $region54: #{run.4} parent=47 // pred_check_branch
        %403 = sbr.rel (%p401) target = $region56
      $region55: #{run.4} parent=47 // pred_region
        %s404 = sadd.s32 %s38, %s39
        %s405 = smul.u32 4, %s404
        %p406 = scmp.lt.s32.totalorder %s405, 7
        %s407 = scalar_select %p406, %s405, 7
        %s408 = smul.addr %s407, 4
        %s409 = scalar_lea.vmem %s3, %s408
        %s410 = sadd.s32 %s38, %s39
        %s411 = smul.u32 4, %s410
      $region56: #{run.4} parent=47 // pred_fallthru
        _
      // Predicated region
      $region57: #{run.4} parent=47 // pred_check
        %p412 = pneg %p121
      $region58: #{run.4} parent=47 // pred_check_branch
        %414 = sbr.rel (%p412) target = $region60
      $region59: #{run.4} parent=47 // pred_region
        %s415 = sadd.s32 %s38, %s39
        %s416 = smul.u32 4, %s415
        %p417 = scmp.lt.s32.totalorder %s416, 7
        %s418 = scalar_select %p417, %s416, 7
        %s419 = smul.addr %s418, 8
        %s420 = scalar_lea.vmem %s4, %s419
        %s421 = sadd.s32 %s38, %s39
        %s422 = smul.u32 4, %s421
      $region60: #{run.4} parent=47 // pred_fallthru
        _
    $region48: #{run.4} parent=5 // pred_fallthru
      _
    %p423 = scmp.le.s32.totalorder 1, %s31
    %p424 = scmp.lt.s32.totalorder %s31, 3
    %p425 = pnand %p423, %p424
    %p426 = pneg %p425
    // Predicated region
    $region61: #{run.4} parent=5 // pred_check
      _
    $region62: #{run.4} parent=5 // pred_check_branch
      %428 = sbr.rel (%p425) target = $region64
    $region63: #{run.4} parent=5 // pred_region
      %s429 = ssub.s32 %s31, 1
      %s430 = sadd.s32 %s40, %s41
      %s431 = smul.u32 4, %s430
      %p432 = scmp.lt.s32.totalorder %s431, 7
      %s433 = scalar_select %p432, %s431, 7
      %s434 = smul.addr %s433, 8
      %s435 = scalar_lea.vmem %s2, %s434
      %p436 = pneg %p71
      %p437 = pneg %p68
      %s438 = sadd.s32 %s40, %s41
      %s439 = smul.u32 4, %s438
      %p440 = scmp.lt.s32.totalorder %s439, 7
      %s441 = scalar_select %p440, %s439, 7
      %s442 = smul.addr %s441, 4
      %s443 = scalar_lea.vmem %s3, %s442
      %p444 = pneg %p99
      %p445 = pneg %p96
      %s446 = sadd.s32 %s40, %s41
      %s447 = smul.u32 4, %s446
      %p448 = scmp.lt.s32.totalorder %s447, 7
      %s449 = scalar_select %p448, %s447, 7
      %s450 = smul.addr %s449, 8
      %s451 = scalar_lea.vmem %s4, %s450
      %p452 = pneg %p127
      %p453 = pneg %p124
      %p454 = pneg %p148
      %p455 = pneg %p145
      %p456 = pneg %p169
      %p457 = pneg %p166
      %p458 = pneg %p190
      %p459 = pneg %p187
      %p460 = pneg %p211
      %p461 = pneg %p208
      %p462 = pneg %p232
      %p463 = pneg %p229
      %p464 = pneg %p253
      %p465 = pneg %p250
      %p466 = pneg %p274
      %p467 = pneg %p271
      %p468 = pneg %p295
      %p469 = pneg %p292
      %p470 = pneg %p321
      %p471 = pneg %p318
      %p472 = scmp.lt.s32.totalorder %s40, 1
      %s473 = scalar_select %p472, %s40, 1
      %s474 = smul.addr %s473, 8
      %s475 = scalar_lea.vmem %s13, %s474
      %p476 = pneg %p347
      %p477 = pneg %p344
      %p478 = scmp.lt.s32.totalorder %s40, 1
      %s479 = scalar_select %p478, %s40, 1
      %s480 = smul.addr %s479, 8
      %s481 = scalar_lea.vmem %s14, %s480
      %s482 = sadd.s32 %s40, %s41
      %s483 = smul.u32 4, %s482
      %p484 = scmp.lt.s32.totalorder %s483, 7
      %s485 = scalar_select %p484, %s483, 7
      %s486 = smul.addr %s485, 8
      %s487 = scalar_lea.vmem %s2, %s486
      %s488 = sadd.s32 %s40, %s41
      %s489 = smul.u32 4, %s488
      %s490 = sadd.s32 %s40, %s41
      %s491 = smul.u32 4, %s490
      %p492 = scmp.lt.s32.totalorder %s491, 7
      %s493 = scalar_select %p492, %s491, 7
      %s494 = smul.addr %s493, 4
      %s495 = scalar_lea.vmem %s3, %s494
      %s496 = sadd.s32 %s40, %s41
      %s497 = smul.u32 4, %s496
      %s498 = sadd.s32 %s40, %s41
      %s499 = smul.u32 4, %s498
      %p500 = scmp.lt.s32.totalorder %s499, 7
      %s501 = scalar_select %p500, %s499, 7
      %s502 = smul.addr %s501, 8
      %s503 = scalar_lea.vmem %s4, %s502
      %s504 = sadd.s32 %s40, %s41
      %s505 = smul.u32 4, %s504
      %p506 = scmp.lt.s32.totalorder %s40, 1
      %s507 = scalar_select %p506, %s40, 1
      %s508 = smul.addr %s507, 8
      %s509 = scalar_lea.vmem %s13, %s508
      %p510 = scmp.lt.s32.totalorder %s40, 1
      %s511 = scalar_select %p510, %s40, 1
      %s512 = smul.addr %s511, 8
      %s513 = scalar_lea.vmem %s14, %s512
      %p515 = scmp.eq.s32.totalorder %s41, 0
      // Predicated region
      $region65: #{run.4} parent=63 // pred_check
        %p516 = pneg %p515
      $region66: #{run.4} parent=63 // pred_check_branch
        %518 = sbr.rel (%p516) target = $region68
      $region67: #{run.4} parent=63 // pred_region
        %vm519 = vcmask 244736
        %520 = vst.msk [vmem:[%s509] sm:$0xff] %vm519, -3e+38
        %vm521 = vcmask 162816
        %522 = vst.msk [vmem:[%s513] sm:$0xff] %vm521, -3e+38
      $region68: #{run.4} parent=63 // pred_fallthru
        _
      %v523 = vld [vmem:[%s487] sm:$0xff]
      %v524 = vld [vmem:[%s487 + $0x8] sm:$0xff]
      %v525 = vld [vmem:[%s487 + $0x10] sm:$0xff]
      %v526 = vld [vmem:[%s487 + $0x18] sm:$0xff]
      %v527 = vld [vmem:[%s5] sm:$0x3]
      %v528 = vunpack.c.l.bf16 %v527
      %530 = vset.pattern.permute.xlu0 0
      %531 = vperm.xlu0 %530, %v523
      %v532 = vpop.permute.xlu0 %531
      %535 = vset.pattern.permute.xlu0 0
      %536 = vperm.xlu0 %535, %v524
      %v537 = vpop.permute.xlu0 %536
      %540 = vset.pattern.permute.xlu0 0
      %541 = vperm.xlu0 %540, %v525
      %v542 = vpop.permute.xlu0 %541
      %545 = vset.pattern.permute.xlu0 0
      %546 = vperm.xlu0 %545, %v526
      %v547 = vpop.permute.xlu0 %546
      %v549 = vlaneseq
      %v550 = vshrl.u32 %v549, 7
      %v551 = vsub.s32 0, %v550
      %v552 = vrot.slane %v528, %v551
      %v553 = vmul.f32 %v532, %v552
      %v554 = vmul.f32 %v537, %v552
      %v555 = vmul.f32 %v542, %v552
      %v556 = vmul.f32 %v547, %v552
      %557 = vset.pattern.permute.xlu0 1
      %558 = vperm.xlu0 %557, %v523
      %v559 = vpop.permute.xlu0 %558
      %561 = vset.pattern.permute.xlu0 1
      %562 = vperm.xlu0 %561, %v524
      %v563 = vpop.permute.xlu0 %562
      %565 = vset.pattern.permute.xlu0 1
      %566 = vperm.xlu0 %565, %v525
      %v567 = vpop.permute.xlu0 %566
      %569 = vset.pattern.permute.xlu0 1
      %570 = vperm.xlu0 %569, %v526
      %v571 = vpop.permute.xlu0 %570
      %v573 = vlaneseq
      %v574 = vshrl.u32 %v573, 7
      %v575 = vsub.s32 1, %v574
      %v576 = vrot.slane %v528, %v575
      %v577 = vmul.f32 %v559, %v576
      %v578 = vmul.f32 %v563, %v576
      %v579 = vmul.f32 %v567, %v576
      %v580 = vmul.f32 %v571, %v576
      %v581 = vadd.f32 %v553, %v577
      %v582 = vadd.f32 %v554, %v578
      %v583 = vadd.f32 %v555, %v579
      %v584 = vadd.f32 %v556, %v580
      %585 = vset.pattern.permute.xlu0 2
      %586 = vperm.xlu0 %585, %v523
      %v587 = vpop.permute.xlu0 %586
      %589 = vset.pattern.permute.xlu0 2
      %590 = vperm.xlu0 %589, %v524
      %v591 = vpop.permute.xlu0 %590
      %593 = vset.pattern.permute.xlu0 2
      %594 = vperm.xlu0 %593, %v525
      %v595 = vpop.permute.xlu0 %594
      %597 = vset.pattern.permute.xlu0 2
      %598 = vperm.xlu0 %597, %v526
      %v599 = vpop.permute.xlu0 %598
      %v601 = vlaneseq
      %v602 = vshrl.u32 %v601, 7
      %v603 = vsub.s32 2, %v602
      %v604 = vrot.slane %v528, %v603
      %v605 = vmul.f32 %v587, %v604
      %v606 = vmul.f32 %v591, %v604
      %v607 = vmul.f32 %v595, %v604
      %v608 = vmul.f32 %v599, %v604
      %v609 = vadd.f32 %v581, %v605
      %v610 = vadd.f32 %v582, %v606
      %v611 = vadd.f32 %v583, %v607
      %v612 = vadd.f32 %v584, %v608
      %v613 = vld [vmem:[%s6] sm:$0x1]
      %v615 = vlaneseq
      %v616 = vshrl.u32 %v615, 7
      %v617 = vsub.s32 0, %v616
      %v618 = vrot.slane %v613, %v617
      %v620 = vadd.f32 %v609, %v618
      %v621 = vadd.f32 %v610, %v618
      %v622 = vadd.f32 %v611, %v618
      %v623 = vadd.f32 %v612, %v618
      %v624 = vmax.f32 %v620, 0.0
      %v625 = vmax.f32 %v621, 0.0
      %v626 = vmax.f32 %v622, 0.0
      %v627 = vmax.f32 %v623, 0.0
      %v628 = vpack.c.bf16 %v625, %v624
      %v629 = vpack.c.bf16 %v627, %v626
      %v630 = vld [vmem:[%s7] sm:$0xf]
      %v631 = vld [vmem:[%s7 + $0x4] sm:$0xf]
      %v632 = vld [vmem:[%s7 + $0x8] sm:$0xf]
      %v633 = vld [vmem:[%s7 + $0xc] sm:$0xf]
      %v634 = vld [vmem:[%s7 + $0x10] sm:$0xf]
      %v635 = vld [vmem:[%s7 + $0x14] sm:$0xf]
      %v636 = vld [vmem:[%s7 + $0x18] sm:$0xf]
      %v637 = vld [vmem:[%s7 + $0x1c] sm:$0xf]
      %v638 = vld [vmem:[%s7 + $0x20] sm:$0xf]
      %v639 = vld [vmem:[%s7 + $0x24] sm:$0xf]
      %v640 = vld [vmem:[%s8] sm:$0x1]
      %v642 = vlaneseq
      %v643 = vshrl.u32 %v642, 7
      %v644 = vsub.s32 0, %v643
      %v645 = vrot.slane %v640, %v644
      %v657 = vunpack.c.l.b16 %v630
      %v658 = vunpack.c.l.b16 %v631
      %v659 = vunpack.c.l.b16 %v632
      %v660 = vunpack.c.l.b16 %v633
      %v661 = vunpack.c.l.b16 %v634
      %v662 = vunpack.c.l.b16 %v635
      %v663 = vunpack.c.l.b16 %v636
      %v664 = vunpack.c.l.b16 %v637
      %v665 = vunpack.c.l.b16 %v638
      %v666 = vunpack.c.l.b16 %v639
      %v667 = vpack.c.b16 %v658, %v657
      %v668 = vpack.c.b16 %v660, %v659
      %v669 = vpack.c.b16 %v662, %v661
      %v670 = vpack.c.b16 %v664, %v663
      %v671 = vpack.c.b16 %v666, %v665
      %vm677 = vcmask 654336
      %v679 = vsel %vm677, %v628, 0
      %v682 = vsel %vm677, %v629, 0
      %684 = vmatprep.subr.bf16.mxu0 0
      %685 = vmatpush1.bf16.msra.mxu0 0
      %686 = vmatprep.subr.bf16.mxu0 0
      %687 = vmatpush1.bf16.msra.mxu0 0
      %688 = vmatprep.subr.bf16.mxu0 0
      %689 = vmatpush1.bf16.msra.mxu0 0
      %690 = vmatprep.subr.bf16.mxu0 0
      %691 = vmatpush1.bf16.msra.mxu0 %v671
      %692 = vmatprep.subr.bf16.mxu0 0
      %693 = vmatpush1.bf16.msra.mxu0 %v670
      %694 = vmatprep.subr.bf16.mxu0 0
      %695 = vmatpush1.bf16.msra.mxu0 %v669
      %696 = vmatprep.subr.bf16.mxu0 0
      %697 = vmatpush1.bf16.msra.mxu0 %v668
      %698 = vmatprep.subr.bf16.mxu0 0
      %699 = vmatpush1.bf16.msra.mxu0 %v667
      %700 = vmatprep.subr.bf16.mxu0 0
      %701 = vmatpush2.bf16.msra.mxu0 0
      %702 = vmatprep.subr.bf16.mxu0 0
      %703 = vmatpush2.bf16.msra.mxu0 0
      %704 = vmatprep.subr.bf16.mxu0 0
      %705 = vmatpush2.bf16.msra.mxu0 0
      %706 = vmatprep.subr.bf16.mxu0 0
      %707 = vmatpush2.bf16.msra.mxu0 0
      %708 = vmatprep.subr.bf16.mxu0 0
      %709 = vmatpush2.bf16.msra.mxu0 0
      %710 = vmatprep.subr.bf16.mxu0 0
      %711 = vmatpush2.bf16.msra.mxu0 0
      %712 = vmatprep.subr.bf16.mxu0 0
      %713 = vmatpush2.bf16.msra.mxu0 0
      %714 = vmatprep.subr.bf16.mxu0 0
      %715 = vmatpush2.bf16.msra.mxu0 0
      %716 = vmatprep.mubr.bf16.mxu0 0
      %717 = vmatmul.mubr.bf16.gmra.mxu0 %v679
      %v718 = vpop.f32.mrf.mxu0
      %v719 = vadd.f32 %v645, %v718
      %v720 = vpop.f32.mrf.mxu0
      %v721 = vpop.f32.mrf.mxu0
      %v722 = vadd.f32 %v645, %v721
      %v723 = vpop.f32.mrf.mxu0
      %724 = vmatprep.mubr.bf16.mxu0 0
      %725 = vmatmul.mubr.bf16.gmra.mxu0 %v682
      %v726 = vpop.f32.mrf.mxu0
      %v727 = vadd.f32 %v645, %v726
      %v728 = vpop.f32.mrf.mxu0
      %v729 = vpop.f32.mrf.mxu0
      %v730 = vadd.f32 %v645, %v729
      %v731 = vpop.f32.mrf.mxu0
      %732 = vdwg.mxu0
      %v733 = vmax.f32 %v719, 0.0
      %v734 = vmax.f32 %v722, 0.0
      %v735 = vmax.f32 %v727, 0.0
      %v736 = vmax.f32 %v730, 0.0
      %v737 = vpack.c.bf16 %v734, %v733
      %v738 = vpack.c.bf16 %v736, %v735
      %v739 = vld [vmem:[%s9] sm:$0xf]
      %v740 = vld [vmem:[%s9 + $0x4] sm:$0xf]
      %v741 = vld [vmem:[%s9 + $0x8] sm:$0xf]
      %v742 = vld [vmem:[%s9 + $0xc] sm:$0xf]
      %v743 = vld [vmem:[%s9 + $0x10] sm:$0xf]
      %v744 = vld [vmem:[%s10] sm:$0x1]
      %v746 = vlaneseq
      %v747 = vshrl.u32 %v746, 7
      %v748 = vsub.s32 0, %v747
      %v749 = vrot.slane %v744, %v748
      %v756 = vunpack.c.l.b16 %v739
      %v757 = vunpack.c.l.b16 %v740
      %v758 = vunpack.c.l.b16 %v741
      %v759 = vunpack.c.l.b16 %v742
      %v760 = vunpack.c.l.b16 %v743
      %v761 = vpack.c.b16 %v757, %v756
      %v762 = vpack.c.b16 %v759, %v758
      %v763 = vpack.c.b16 %v760, %v760
      %vm766 = vcmask 326656
      %v768 = vsel %vm766, %v737, 0
      %v771 = vsel %vm766, %v738, 0
      %vm773 = vcmask 1043456
      %v775 = vsel %vm773, %v763, 0
      %777 = vmatprep.subr.bf16.mxu0 0
      %778 = vmatpush1.bf16.msra.mxu0 0
      %779 = vmatprep.subr.bf16.mxu0 0
      %780 = vmatpush1.bf16.msra.mxu0 0
      %781 = vmatprep.subr.bf16.mxu0 0
      %782 = vmatpush1.bf16.msra.mxu0 0
      %783 = vmatprep.subr.bf16.mxu0 0
      %784 = vmatpush1.bf16.msra.mxu0 0
      %785 = vmatprep.subr.bf16.mxu0 0
      %786 = vmatpush1.bf16.msra.mxu0 0
      %787 = vmatprep.subr.bf16.mxu0 0
      %788 = vmatpush1.bf16.msra.mxu0 %v775
      %789 = vmatprep.subr.bf16.mxu0 0
      %790 = vmatpush1.bf16.msra.mxu0 %v762
      %791 = vmatprep.subr.bf16.mxu0 0
      %792 = vmatpush1.bf16.msra.mxu0 %v761
      %793 = vmatprep.subr.bf16.mxu0 0
      %794 = vmatpush2.bf16.msra.mxu0 0
      %795 = vmatprep.subr.bf16.mxu0 0
      %796 = vmatpush2.bf16.msra.mxu0 0
      %797 = vmatprep.subr.bf16.mxu0 0
      %798 = vmatpush2.bf16.msra.mxu0 0
      %799 = vmatprep.subr.bf16.mxu0 0
      %800 = vmatpush2.bf16.msra.mxu0 0
      %801 = vmatprep.subr.bf16.mxu0 0
      %802 = vmatpush2.bf16.msra.mxu0 0
      %803 = vmatprep.subr.bf16.mxu0 0
      %804 = vmatpush2.bf16.msra.mxu0 0
      %805 = vmatprep.subr.bf16.mxu0 0
      %806 = vmatpush2.bf16.msra.mxu0 0
      %807 = vmatprep.subr.bf16.mxu0 0
      %808 = vmatpush2.bf16.msra.mxu0 0
      %809 = vmatprep.mubr.bf16.mxu0 0
      %810 = vmatmul.mubr.bf16.gmra.mxu0 %v768
      %v811 = vpop.f32.mrf.mxu0
      %v812 = vadd.f32 %v749, %v811
      %v813 = vpop.f32.mrf.mxu0
      %v814 = vpop.f32.mrf.mxu0
      %v815 = vadd.f32 %v749, %v814
      %v816 = vpop.f32.mrf.mxu0
      %817 = vmatprep.mubr.bf16.mxu0 0
      %818 = vmatmul.mubr.bf16.gmra.mxu0 %v771
      %v819 = vpop.f32.mrf.mxu0
      %v820 = vadd.f32 %v749, %v819
      %v821 = vpop.f32.mrf.mxu0
      %v822 = vpop.f32.mrf.mxu0
      %v823 = vadd.f32 %v749, %v822
      %v824 = vpop.f32.mrf.mxu0
      %825 = vdwg.mxu0
      %v826 = vmax.f32 %v812, 0.0
      %v827 = vmax.f32 %v815, 0.0
      %v828 = vmax.f32 %v820, 0.0
      %v829 = vmax.f32 %v823, 0.0
      %v830 = vld [vmem:[%s495] sm:$0xf]
      %v831 = vld [vmem:[%s495 + $0x4] sm:$0xf]
      %v832 = vld [vmem:[%s495 + $0x8] sm:$0xf]
      %v833 = vld [vmem:[%s495 + $0xc] sm:$0xf]
      %v834 = vpack.c.bf16 %v827, %v826
      %v835 = vpack.c.bf16 %v829, %v828
      %v840 = vunpack.c.l.b16 %v830
      %v841 = vunpack.c.l.b16 %v831
      %v842 = vunpack.c.l.b16 %v832
      %v843 = vunpack.c.l.b16 %v833
      %v844 = vpack.c.b16 %v841, %v840
      %v845 = vpack.c.b16 %v843, %v842
      %846 = vrot.lane.b32.xlu0 %v844, 20
      %v847 = vpop.permute.xlu0 %846
      %848 = vrot.lane.b32.xlu0 %v845, 20
      %v849 = vpop.permute.xlu0 %848
      %vm850 = vcmask 162816
      %v853 = vsel %vm850, %v834, %v847
      %v856 = vsel %vm850, %v835, %v849
      %v857 = vld [vmem:[%s11] sm:$0xf]
      %v858 = vld [vmem:[%s11 + $0x4] sm:$0xf]
      %v859 = vld [vmem:[%s11 + $0x8] sm:$0xf]
      %v860 = vld [vmem:[%s11 + $0xc] sm:$0xf]
      %v861 = vld [vmem:[%s11 + $0x10] sm:$0xf]
      %v862 = vld [vmem:[%s12] sm:$0x1]
      %v864 = vlaneseq
      %v865 = vshrl.u32 %v864, 7
      %v866 = vsub.s32 0, %v865
      %v867 = vrot.slane %v862, %v866
      %v874 = vunpack.c.l.b16 %v857
      %v875 = vunpack.c.l.b16 %v858
      %v876 = vunpack.c.l.b16 %v859
      %v877 = vunpack.c.l.b16 %v860
      %v878 = vunpack.c.l.b16 %v861
      %v879 = vpack.c.b16 %v875, %v874
      %v880 = vpack.c.b16 %v877, %v876
      %v881 = vpack.c.b16 %v878, %v878
      %v884 = vsel %vm766, %v853, 0
      %v886 = vsel %vm766, %v856, 0
      %v889 = vsel %vm773, %v881, 0
      %891 = vmatprep.subr.bf16.mxu0 0
      %892 = vmatpush1.bf16.msra.mxu0 0
      %893 = vmatprep.subr.bf16.mxu0 0
      %894 = vmatpush1.bf16.msra.mxu0 0
      %895 = vmatprep.subr.bf16.mxu0 0
      %896 = vmatpush1.bf16.msra.mxu0 0
      %897 = vmatprep.subr.bf16.mxu0 0
      %898 = vmatpush1.bf16.msra.mxu0 0
      %899 = vmatprep.subr.bf16.mxu0 0
      %900 = vmatpush1.bf16.msra.mxu0 0
      %901 = vmatprep.subr.bf16.mxu0 0
      %902 = vmatpush1.bf16.msra.mxu0 %v889
      %903 = vmatprep.subr.bf16.mxu0 0
      %904 = vmatpush1.bf16.msra.mxu0 %v880
      %905 = vmatprep.subr.bf16.mxu0 0
      %906 = vmatpush1.bf16.msra.mxu0 %v879
      %907 = vmatprep.subr.bf16.mxu0 0
      %908 = vmatpush2.bf16.msra.mxu0 0
      %909 = vmatprep.subr.bf16.mxu0 0
      %910 = vmatpush2.bf16.msra.mxu0 0
      %911 = vmatprep.subr.bf16.mxu0 0
      %912 = vmatpush2.bf16.msra.mxu0 0
      %913 = vmatprep.subr.bf16.mxu0 0
      %914 = vmatpush2.bf16.msra.mxu0 0
      %915 = vmatprep.subr.bf16.mxu0 0
      %916 = vmatpush2.bf16.msra.mxu0 0
      %917 = vmatprep.subr.bf16.mxu0 0
      %918 = vmatpush2.bf16.msra.mxu0 0
      %919 = vmatprep.subr.bf16.mxu0 0
      %920 = vmatpush2.bf16.msra.mxu0 0
      %921 = vmatprep.subr.bf16.mxu0 0
      %922 = vmatpush2.bf16.msra.mxu0 0
      %923 = vmatprep.mubr.bf16.mxu0 0
      %924 = vmatmul.mubr.bf16.gmra.mxu0 %v884
      %v925 = vpop.f32.mrf.mxu0
      %v926 = vadd.f32 %v867, %v925
      %v927 = vpop.f32.mrf.mxu0
      %v928 = vpop.f32.mrf.mxu0
      %v929 = vadd.f32 %v867, %v928
      %v930 = vpop.f32.mrf.mxu0
      %931 = vmatprep.mubr.bf16.mxu0 0
      %932 = vmatmul.mubr.bf16.gmra.mxu0 %v886
      %v933 = vpop.f32.mrf.mxu0
      %v934 = vadd.f32 %v867, %v933
      %v935 = vpop.f32.mrf.mxu0
      %v936 = vpop.f32.mrf.mxu0
      %v937 = vadd.f32 %v867, %v936
      %v938 = vpop.f32.mrf.mxu0
      %939 = vdwg.mxu0
      %v940 = vmax.f32 %v926, 0.0
      %v941 = vmax.f32 %v929, 0.0
      %v942 = vmax.f32 %v934, 0.0
      %v943 = vmax.f32 %v937, 0.0
      %v944 = vunpack.c.l.bf16 %v830
      %v945 = vunpack.c.l.bf16 %v831
      %v946 = vunpack.c.l.bf16 %v832
      %v947 = vunpack.c.l.bf16 %v833
      %v948 = vld [vmem:[%s503] sm:$0xff]
      %v949 = vld [vmem:[%s503 + $0x8] sm:$0xff]
      %v950 = vld [vmem:[%s503 + $0x10] sm:$0xff]
      %v951 = vld [vmem:[%s503 + $0x18] sm:$0xff]
      %s952 = sadd.s32 %s40, %s41
      %s953 = sld [smem:[#allocation3 + %s952]]
      %s954 = sld [smem:[#allocation4 + %s952]]
      %s955 = sadd.s32 %s953, 1
      // While loop
      $region69: #{run.4} parent=63 // loop_pre_header
        _
      $region70: #{run.4} parent=63 // loop_header
        %s957 = sphi %s955, %s959
        %p958 = scmp.ge.s32.totalorder %s957, %s954
      $region71: #{run.4} parent=63 // loop_header_branch
        %961 = sbr.rel (%p958) target = $region75
      $region72: #{run.4} parent=63 // loop_body
        %v962 = vstv %s957
        %vm963 = vcmp.eq.s32.totalorder %v948, %v962
        %vm964 = vcmp.eq.s32.totalorder %v949, %v962
        %vm965 = vcmp.eq.s32.totalorder %v950, %v962
        %vm966 = vcmp.eq.s32.totalorder %v951, %v962
        %v967 = vsel %vm963, 1, 0
        %v968 = vsel %vm964, 1, 0
        %v969 = vsel %vm965, 1, 0
        %v970 = vsel %vm966, 1, 0
        %971 = vset.pattern.permute.xlu0 0
        %972 = vperm.xlu0 %971, %v967
        %v973 = vpop.permute.xlu0 %972
        %974 = vset.pattern.permute.xlu0 0
        %975 = vperm.xlu0 %974, %v968
        %v976 = vpop.permute.xlu0 %975
        %977 = vset.pattern.permute.xlu0 0
        %978 = vperm.xlu0 %977, %v969
        %v979 = vpop.permute.xlu0 %978
        %980 = vset.pattern.permute.xlu0 0
        %981 = vperm.xlu0 %980, %v970
        %v982 = vpop.permute.xlu0 %981
        %vm983 = vcmp.eq.s32.totalorder %v973, 1
        %vm984 = vcmp.eq.s32.totalorder %v976, 1
        %vm985 = vcmp.eq.s32.totalorder %v979, 1
        %vm986 = vcmp.eq.s32.totalorder %v982, 1
        %v987 = vsel %vm983, %v940, -3e+38
        %v988 = vsel %vm984, %v941, -3e+38
        %v989 = vsel %vm985, %v942, -3e+38
        %v990 = vsel %vm986, %v943, -3e+38
        %vm991 = vcmask 244736
        %v992 = vsel %vm991, %v987, -inf
        %v993 = vsel %vm991, %v988, -inf
        %v994 = vsel %vm991, %v989, -inf
        %v995 = vsel %vm991, %v990, -inf
        %v996 = vmax.f32 %v992, %v993
        %v997 = vmax.f32 %v994, %v995
        %v998 = vmax.f32 %v996, %v997
        %v999 = vrot.slane %v998, 4
        %v1000 = vmax.f32 %v998, %v999
        %v1001 = vrot.slane %v1000, 2
        %v1002 = vmax.f32 %v1000, %v1001
        %v1003 = vrot.slane %v1002, 1
        %v1004 = vmax.f32 %v1002, %v1003
        %s1005 = scalar_lea.vmem %s509, %s957
        %vm1006 = vcmask 237568
        %1007 = vst.msk [vmem:[%s1005] sm:$0x1] %vm1006, %v1004
        %v1008 = vsel %vm983, %v944, -3e+38
        %v1009 = vsel %vm984, %v945, -3e+38
        %v1010 = vsel %vm985, %v946, -3e+38
        %v1011 = vsel %vm986, %v947, -3e+38
        %v1012 = vsel %vm850, %v1008, -inf
        %v1013 = vsel %vm850, %v1009, -inf
        %v1014 = vsel %vm850, %v1010, -inf
        %v1015 = vsel %vm850, %v1011, -inf
        %v1016 = vmax.f32 %v1012, %v1013
        %v1017 = vmax.f32 %v1014, %v1015
        %v1018 = vmax.f32 %v1016, %v1017
        %v1019 = vrot.slane %v1018, 4
        %v1020 = vmax.f32 %v1018, %v1019
        %v1021 = vrot.slane %v1020, 2
        %v1022 = vmax.f32 %v1020, %v1021
        %v1023 = vrot.slane %v1022, 1
        %v1024 = vmax.f32 %v1022, %v1023
        %s1025 = scalar_lea.vmem %s513, %s957
        %vm1026 = vcmask 155648
        %1027 = vst.msk [vmem:[%s1025] sm:$0x1] %vm1026, %v1024
      $region73: #{run.4} parent=63 // loop_footer
        %s959 = sadd.s32 %s957, 1
      $region74: #{run.4} parent=63 // loop_footer_branch
        %956 = sbr.rel target = $region70
      $region75: #{run.4} parent=63 // loop_exit
        _
      %s1028 = scalar_lea.vmem %s509, %s953
      %v1029 = vld [vmem:[%s1028] sm:$0x1]
      %v1030 = vstv %s953
      %vm1031 = vcmp.eq.s32.totalorder %v948, %v1030
      %vm1032 = vcmp.eq.s32.totalorder %v949, %v1030
      %vm1033 = vcmp.eq.s32.totalorder %v950, %v1030
      %vm1034 = vcmp.eq.s32.totalorder %v951, %v1030
      %v1035 = vsel %vm1031, 1, 0
      %v1036 = vsel %vm1032, 1, 0
      %v1037 = vsel %vm1033, 1, 0
      %v1038 = vsel %vm1034, 1, 0
      %1039 = vset.pattern.permute.xlu0 0
      %1040 = vperm.xlu0 %1039, %v1035
      %v1041 = vpop.permute.xlu0 %1040
      %1042 = vset.pattern.permute.xlu0 0
      %1043 = vperm.xlu0 %1042, %v1036
      %v1044 = vpop.permute.xlu0 %1043
      %1045 = vset.pattern.permute.xlu0 0
      %1046 = vperm.xlu0 %1045, %v1037
      %v1047 = vpop.permute.xlu0 %1046
      %1048 = vset.pattern.permute.xlu0 0
      %1049 = vperm.xlu0 %1048, %v1038
      %v1050 = vpop.permute.xlu0 %1049
      %vm1051 = vcmp.eq.s32.totalorder %v1041, 1
      %vm1052 = vcmp.eq.s32.totalorder %v1044, 1
      %vm1053 = vcmp.eq.s32.totalorder %v1047, 1
      %vm1054 = vcmp.eq.s32.totalorder %v1050, 1
      %v1055 = vsel %vm1051, %v940, -3e+38
      %v1056 = vsel %vm1052, %v941, -3e+38
      %v1057 = vsel %vm1053, %v942, -3e+38
      %v1058 = vsel %vm1054, %v943, -3e+38
      %vm1059 = vcmask 244736
      %v1060 = vsel %vm1059, %v1055, -inf
      %v1061 = vsel %vm1059, %v1056, -inf
      %v1062 = vsel %vm1059, %v1057, -inf
      %v1063 = vsel %vm1059, %v1058, -inf
      %v1064 = vmax.f32 %v1060, %v1061
      %v1065 = vmax.f32 %v1062, %v1063
      %v1066 = vmax.f32 %v1064, %v1065
      %v1067 = vrot.slane %v1066, 4
      %v1068 = vmax.f32 %v1066, %v1067
      %v1069 = vrot.slane %v1068, 2
      %v1070 = vmax.f32 %v1068, %v1069
      %v1071 = vrot.slane %v1070, 1
      %v1072 = vmax.f32 %v1070, %v1071
      %v1073 = vmax.f32 %v1029, %v1072
      %vm1074 = vcmask 237568
      %1075 = vst.msk [vmem:[%s1028] sm:$0x1] %vm1074, %v1073
      %s1076 = scalar_lea.vmem %s513, %s953
      %v1077 = vld [vmem:[%s1076] sm:$0x1]
      %v1078 = vsel %vm1051, %v944, -3e+38
      %v1079 = vsel %vm1052, %v945, -3e+38
      %v1080 = vsel %vm1053, %v946, -3e+38
      %v1081 = vsel %vm1054, %v947, -3e+38
      %v1082 = vsel %vm850, %v1078, -inf
      %v1083 = vsel %vm850, %v1079, -inf
      %v1084 = vsel %vm850, %v1080, -inf
      %v1085 = vsel %vm850, %v1081, -inf
      %v1086 = vmax.f32 %v1082, %v1083
      %v1087 = vmax.f32 %v1084, %v1085
      %v1088 = vmax.f32 %v1086, %v1087
      %v1089 = vrot.slane %v1088, 4
      %v1090 = vmax.f32 %v1088, %v1089
      %v1091 = vrot.slane %v1090, 2
      %v1092 = vmax.f32 %v1090, %v1091
      %v1093 = vrot.slane %v1092, 1
      %v1094 = vmax.f32 %v1092, %v1093
      %v1095 = vmax.f32 %v1077, %v1094
      %vm1096 = vcmask 155648
      %1097 = vst.msk [vmem:[%s1076] sm:$0x1] %vm1096, %v1095
      %s1098 = scalar_lea.vmem %s509, %s954
      %v1099 = vld [vmem:[%s1098] sm:$0x1]
      %v1100 = vstv %s954
      %vm1101 = vcmp.eq.s32.totalorder %v948, %v1100
      %vm1102 = vcmp.eq.s32.totalorder %v949, %v1100
      %vm1103 = vcmp.eq.s32.totalorder %v950, %v1100
      %vm1104 = vcmp.eq.s32.totalorder %v951, %v1100
      %v1105 = vsel %vm1101, 1, 0
      %v1106 = vsel %vm1102, 1, 0
      %v1107 = vsel %vm1103, 1, 0
      %v1108 = vsel %vm1104, 1, 0
      %1109 = vset.pattern.permute.xlu0 0
      %1110 = vperm.xlu0 %1109, %v1105
      %v1111 = vpop.permute.xlu0 %1110
      %1112 = vset.pattern.permute.xlu0 0
      %1113 = vperm.xlu0 %1112, %v1106
      %v1114 = vpop.permute.xlu0 %1113
      %1115 = vset.pattern.permute.xlu0 0
      %1116 = vperm.xlu0 %1115, %v1107
      %v1117 = vpop.permute.xlu0 %1116
      %1118 = vset.pattern.permute.xlu0 0
      %1119 = vperm.xlu0 %1118, %v1108
      %v1120 = vpop.permute.xlu0 %1119
      %vm1121 = vcmp.eq.s32.totalorder %v1111, 1
      %vm1122 = vcmp.eq.s32.totalorder %v1114, 1
      %vm1123 = vcmp.eq.s32.totalorder %v1117, 1
      %vm1124 = vcmp.eq.s32.totalorder %v1120, 1
      %v1125 = vsel %vm1121, %v940, -3e+38
      %v1126 = vsel %vm1122, %v941, -3e+38
      %v1127 = vsel %vm1123, %v942, -3e+38
      %v1128 = vsel %vm1124, %v943, -3e+38
      %v1129 = vsel %vm1059, %v1125, -inf
      %v1130 = vsel %vm1059, %v1126, -inf
      %v1131 = vsel %vm1059, %v1127, -inf
      %v1132 = vsel %vm1059, %v1128, -inf
      %v1133 = vmax.f32 %v1129, %v1130
      %v1134 = vmax.f32 %v1131, %v1132
      %v1135 = vmax.f32 %v1133, %v1134
      %v1136 = vrot.slane %v1135, 4
      %v1137 = vmax.f32 %v1135, %v1136
      %v1138 = vrot.slane %v1137, 2
      %v1139 = vmax.f32 %v1137, %v1138
      %v1140 = vrot.slane %v1139, 1
      %v1141 = vmax.f32 %v1139, %v1140
      %v1142 = vmax.f32 %v1099, %v1141
      %1143 = vst.msk [vmem:[%s1098] sm:$0x1] %vm1074, %v1142
      %s1144 = scalar_lea.vmem %s513, %s954
      %v1145 = vld [vmem:[%s1144] sm:$0x1]
      %v1146 = vsel %vm1121, %v944, -3e+38
      %v1147 = vsel %vm1122, %v945, -3e+38
      %v1148 = vsel %vm1123, %v946, -3e+38
      %v1149 = vsel %vm1124, %v947, -3e+38
      %v1150 = vsel %vm850, %v1146, -inf
      %v1151 = vsel %vm850, %v1147, -inf
      %v1152 = vsel %vm850, %v1148, -inf
      %v1153 = vsel %vm850, %v1149, -inf
      %v1154 = vmax.f32 %v1150, %v1151
      %v1155 = vmax.f32 %v1152, %v1153
      %v1156 = vmax.f32 %v1154, %v1155
      %v1157 = vrot.slane %v1156, 4
      %v1158 = vmax.f32 %v1156, %v1157
      %v1159 = vrot.slane %v1158, 2
      %v1160 = vmax.f32 %v1158, %v1159
      %v1161 = vrot.slane %v1160, 1
      %v1162 = vmax.f32 %v1160, %v1161
      %v1163 = vmax.f32 %v1145, %v1162
      %1164 = vst.msk [vmem:[%s1144] sm:$0x1] %vm1096, %v1163
      %p1165 = scmp.lt.s32.totalorder %s40, 1
      %s1166 = scalar_select %p1165, %s40, 1
      %s1167 = smul.addr %s1166, 8
      %s1168 = scalar_lea.vmem %s13, %s1167
      %p1169 = scmp.lt.s32.totalorder %s40, 1
      %s1170 = scalar_select %p1169, %s40, 1
      %s1171 = smul.addr %s1170, 8
      %s1172 = scalar_lea.vmem %s14, %s1171
      // Predicated region
      $region76: #{run.4} parent=63 // pred_check
        %p1173 = pneg %p318
      $region77: #{run.4} parent=63 // pred_check_branch
        %1175 = sbr.rel (%p1173) target = $region79
      $region78: #{run.4} parent=63 // pred_region
        _
      $region79: #{run.4} parent=63 // pred_fallthru
        _
      // Predicated region
      $region80: #{run.4} parent=63 // pred_check
        %p1176 = pneg %p344
      $region81: #{run.4} parent=63 // pred_check_branch
        %1178 = sbr.rel (%p1176) target = $region83
      $region82: #{run.4} parent=63 // pred_region
        _
      $region83: #{run.4} parent=63 // pred_fallthru
        _
    $region64: #{run.4} parent=5 // pred_fallthru
      _
    %p1179 = scmp.le.s32.totalorder 2, %s31
    // Predicated region
    $region84: #{run.4} parent=5 // pred_check
      %p1180 = pneg %p1179
    $region85: #{run.4} parent=5 // pred_check_branch
      %1182 = sbr.rel (%p1180) target = $region87
    $region86: #{run.4} parent=5 // pred_region
      %s1183 = ssub.s32 %s31, 2
      // Predicated region
      $region88: #{run.4} parent=86 // pred_check
        %p1184 = pneg %p324
      $region89: #{run.4} parent=86 // pred_check_branch
        %1186 = sbr.rel (%p1184) target = $region91
      $region90: #{run.4} parent=86 // pred_region
        %p1187 = scmp.lt.s32.totalorder %s42, 1
        %s1188 = scalar_select %p1187, %s42, 1
        %s1189 = smul.addr %s1188, 8
        %s1190 = scalar_lea.vmem %s13, %s1189
      $region91: #{run.4} parent=86 // pred_fallthru
        _
      // Predicated region
      $region92: #{run.4} parent=86 // pred_check
        %p1191 = pneg %p350
      $region93: #{run.4} parent=86 // pred_check_branch
        %1193 = sbr.rel (%p1191) target = $region95
      $region94: #{run.4} parent=86 // pred_region
        %p1194 = scmp.lt.s32.totalorder %s42, 1
        %s1195 = scalar_select %p1194, %s42, 1
        %s1196 = smul.addr %s1195, 8
        %s1197 = scalar_lea.vmem %s14, %s1196
      $region95: #{run.4} parent=86 // pred_fallthru
        _
    $region87: #{run.4} parent=5 // pred_fallthru
      _
  $region6: #{run.4} parent=0 // loop_footer
    %s35 = sadd.s32 1, %s31
  $region7: #{run.4} parent=0 // loop_footer_branch
    %30 = sbr.rel target = $region3
  $region8: #{run.4} parent=0 // loop_exit
    _

// kernel: run.5
$region0: #{run.5}
  #allocation0 [shape = 'u32[]', space=smem, size = 0x4, offset = 0x4, fixed_abs, tag = 'smem constant byte address 0x4 - core index']
  #allocation1 [shape = 'u32[144,128]{1,0:T(1,128)}', space=vmem, size = 0x12000, scoped, tag = 'internal scratch']
  #allocation2 [shape = 's32[1]{0}', space=sflag, size = 0x4, scoped, tag = 'scoped memory for run.5']
  #allocation3 [shape = 'u8[512]{0}', space=smem, size = 0x200, scoped, tag = 'prefetched SMEM operand 0']
  #allocation4 [shape = 'u8[512]{0}', space=smem, size = 0x200, scoped, tag = 'prefetched SMEM operand 1']
  %s0 = inlined_call_operand.vmem [shape: s32[2], index: 0, kind: input, shape index: {}]
  %s1 = inlined_call_operand.vmem [shape: s32[2], index: 1, kind: input, shape index: {}]
  %s2 = inlined_call_operand.vmem [shape: f32[32,3], index: 2, kind: input, shape index: {}]
  %s3 = inlined_call_operand.vmem [shape: bf16[32,50], index: 3, kind: input, shape index: {}]
  %s4 = inlined_call_operand.vmem [shape: s32[32,1], index: 4, kind: input, shape index: {}]
  %s5 = inlined_call_operand.vmem [shape: bf16[3,80], index: 5, kind: input, shape index: {}]
  %s6 = inlined_call_operand.vmem [shape: f32[1,80], index: 6, kind: input, shape index: {}]
  %s7 = inlined_call_operand.vmem [shape: bf16[80,40], index: 7, kind: input, shape index: {}]
  %s8 = inlined_call_operand.vmem [shape: f32[1,40], index: 8, kind: input, shape index: {}]
  %s9 = inlined_call_operand.vmem [shape: bf16[40,20], index: 9, kind: input, shape index: {}]
  %s10 = inlined_call_operand.vmem [shape: f32[1,20], index: 10, kind: input, shape index: {}]
  %s11 = inlined_call_operand.vmem [shape: bf16[70,80], index: 11, kind: input, shape index: {}]
  %s12 = inlined_call_operand.vmem [shape: f32[1,80], index: 12, kind: input, shape index: {}]
  %s13 = inlined_call_operand.vmem [shape: f32[16,80], index: 13, kind: output, shape index: {0}]
  %s14 = inlined_call_operand.vmem [shape: f32[16,50], index: 14, kind: output, shape index: {1}]
  %15 = xla_tuple %s13, %s14
  %s16 = sld [smem:[#allocation0]]
  $region96: #{run.5} parent=0
    _
  %s18 = ssub.s32 1, %s16
  %s19 = scalar_select 0, %s18, %s16
  %s20 = sshll.u32 %s0, 4
  %s21 = int_to_ptr.vmem [resolvable:$true] %s20
  %23 = dma.vmem_to_smem %s21, 16, [#allocation3], [#allocation2]
  %s24 = sshll.u32 %s1, 4
  %s25 = int_to_ptr.vmem [resolvable:$true] %s24
  %27 = dma.vmem_to_smem %s25, 16, [#allocation4], [#allocation2]
  %28 = dma.done [#allocation2], 32
  %29 = sfence
  loop: start=0, step=1, limit=4
  $region2: #{run.5} parent=0 // loop_pre_header
    _
  $region3: #{run.5} parent=0 // loop_header
    %s31 = sphi 0, %s35
    %p32 = scmp.ge.s32.totalorder %s31, 4
    %s38 = sphi 0, %s50
    %s39 = sphi 0, %s46
    %s40 = sphi 0, %s38
    %s41 = sphi 0, %s39
    %s42 = sphi 0, %s40
    %s43 = sphi 0, %s41
    %s55 = sphi 0, %s57
    %s58 = sphi 0, %s55
    %s59 = sphi 0, %s58
    %s75 = sphi 0, %s59
    %s83 = sphi 0, %s85
    %s86 = sphi 0, %s83
    %s87 = sphi 0, %s86
    %s103 = sphi 0, %s87
    %s111 = sphi 0, %s113
    %s114 = sphi 0, %s111
    %s115 = sphi 0, %s114
    %s131 = sphi 0, %s115
    %s135 = sphi 0, %s135
    %s137 = sphi 0, %s135
    %s138 = sphi 0, %s137
    %s152 = sphi 0, %s138
    %s156 = sphi 0, %s156
    %s158 = sphi 0, %s156
    %s159 = sphi 0, %s158
    %s173 = sphi 0, %s159
    %s177 = sphi 0, %s177
    %s179 = sphi 0, %s177
    %s180 = sphi 0, %s179
    %s194 = sphi 0, %s180
    %s198 = sphi 0, %s198
    %s200 = sphi 0, %s198
    %s201 = sphi 0, %s200
    %s215 = sphi 0, %s201
    %s219 = sphi 0, %s219
    %s221 = sphi 0, %s219
    %s222 = sphi 0, %s221
    %s236 = sphi 0, %s222
    %s240 = sphi 0, %s240
    %s242 = sphi 0, %s240
    %s243 = sphi 0, %s242
    %s257 = sphi 0, %s243
    %s261 = sphi 0, %s261
    %s263 = sphi 0, %s261
    %s264 = sphi 0, %s263
    %s278 = sphi 0, %s264
    %s282 = sphi 0, %s282
    %s284 = sphi 0, %s282
    %s285 = sphi 0, %s284
    %s299 = sphi 0, %s285
    %s305 = sphi 0, %s307
    %s308 = sphi 0, %s305
    %s309 = sphi 0, %s308
    %s325 = sphi 0, %s309
    %s331 = sphi 0, %s333
    %s334 = sphi 0, %s331
    %s335 = sphi 0, %s334
    %s351 = sphi 0, %s335
  $region4: #{run.5} parent=0 // loop_header_branch
    %34 = sbr.rel (%p32) target = $region8
  $region5: #{run.5} parent=0 // loop_body
    %s36 = ssub.s32 %s31, 1
    %s37 = ssub.s32 %s31, 2
    %s44 = sadd.s32 1, %s39
    %p45 = scmp.ge.s32.totalorder %s44, 1
    %s46 = scalar_select %p45, 0, %s44
    %s47 = sadd.s32 1, %s38
    %s48 = scalar_select %p45, %s47, %s38
    %p49 = scmp.ge.s32.totalorder %s48, 2
    %s50 = scalar_select %p49, 0, %s48
    %s51 = sadd.s32 %s38, %s39
    %s52 = sadd.s32 %s50, %s46
    %s53 = ssub.s32 %s51, %s52
    %p54 = scmp.eq.s32.totalorder %s53, 0
    %s56 = sadd.s32 %s55, 1
    %s57 = scalar_select %p54, %s55, %s56
    %p60 = pneg %p54
    %p61 = scmp.eq.s32.totalorder %s31, 1
    %p62 = por %p60, %p61
    %p63 = scmp.ne.s32.totalorder %s55, %s58
    %p64 = scmp.eq.s32.totalorder %s31, 0
    %p65 = por %p63, %p64
    %p66 = scmp.ne.s32.totalorder %s55, %s58
    %p67 = scmp.eq.s32.totalorder %s36, 1
    %p68 = por %p66, %p67
    %p69 = scmp.ne.s32.totalorder %s58, %s59
    %p70 = scmp.eq.s32.totalorder %s36, 0
    %p71 = por %p69, %p70
    %p72 = scmp.ne.s32.totalorder %s58, %s59
    %p73 = scmp.eq.s32.totalorder %s37, 1
    %p74 = por %p72, %p73
    %p76 = scmp.ne.s32.totalorder %s59, %s75
    %p77 = scmp.eq.s32.totalorder %s37, 0
    %p78 = por %p76, %p77
    %s79 = sadd.s32 %s38, %s39
    %s80 = sadd.s32 %s50, %s46
    %s81 = ssub.s32 %s79, %s80
    %p82 = scmp.eq.s32.totalorder %s81, 0
    %s84 = sadd.s32 %s83, 1
    %s85 = scalar_select %p82, %s83, %s84
    %p88 = pneg %p82
    %p89 = scmp.eq.s32.totalorder %s31, 1
    %p90 = por %p88, %p89
    %p91 = scmp.ne.s32.totalorder %s83, %s86
    %p92 = scmp.eq.s32.totalorder %s31, 0
    %p93 = por %p91, %p92
    %p94 = scmp.ne.s32.totalorder %s83, %s86
    %p95 = scmp.eq.s32.totalorder %s36, 1
    %p96 = por %p94, %p95
    %p97 = scmp.ne.s32.totalorder %s86, %s87
    %p98 = scmp.eq.s32.totalorder %s36, 0
    %p99 = por %p97, %p98
    %p100 = scmp.ne.s32.totalorder %s86, %s87
    %p101 = scmp.eq.s32.totalorder %s37, 1
    %p102 = por %p100, %p101
    %p104 = scmp.ne.s32.totalorder %s87, %s103
    %p105 = scmp.eq.s32.totalorder %s37, 0
    %p106 = por %p104, %p105
    %s107 = sadd.s32 %s38, %s39
    %s108 = sadd.s32 %s50, %s46
    %s109 = ssub.s32 %s107, %s108
    %p110 = scmp.eq.s32.totalorder %s109, 0
    %s112 = sadd.s32 %s111, 1
    %s113 = scalar_select %p110, %s111, %s112
    %p116 = pneg %p110
    %p117 = scmp.eq.s32.totalorder %s31, 1
    %p118 = por %p116, %p117
    %p119 = scmp.ne.s32.totalorder %s111, %s114
    %p120 = scmp.eq.s32.totalorder %s31, 0
    %p121 = por %p119, %p120
    %p122 = scmp.ne.s32.totalorder %s111, %s114
    %p123 = scmp.eq.s32.totalorder %s36, 1
    %p124 = por %p122, %p123
    %p125 = scmp.ne.s32.totalorder %s114, %s115
    %p126 = scmp.eq.s32.totalorder %s36, 0
    %p127 = por %p125, %p126
    %p128 = scmp.ne.s32.totalorder %s114, %s115
    %p129 = scmp.eq.s32.totalorder %s37, 1
    %p130 = por %p128, %p129
    %p132 = scmp.ne.s32.totalorder %s115, %s131
    %p133 = scmp.eq.s32.totalorder %s37, 0
    %p134 = por %p132, %p133
    %s136 = sadd.s32 %s135, 1
    %p139 = scmp.eq.s32.totalorder %s31, 1
    %p140 = scmp.ne.s32.totalorder %s135, %s137
    %p141 = scmp.eq.s32.totalorder %s31, 0
    %p142 = por %p140, %p141
    %p143 = scmp.ne.s32.totalorder %s135, %s137
    %p144 = scmp.eq.s32.totalorder %s36, 1
    %p145 = por %p143, %p144
    %p146 = scmp.ne.s32.totalorder %s137, %s138
    %p147 = scmp.eq.s32.totalorder %s36, 0
    %p148 = por %p146, %p147
    %p149 = scmp.ne.s32.totalorder %s137, %s138
    %p150 = scmp.eq.s32.totalorder %s37, 1
    %p151 = por %p149, %p150
    %p153 = scmp.ne.s32.totalorder %s138, %s152
    %p154 = scmp.eq.s32.totalorder %s37, 0
    %p155 = por %p153, %p154
    %s157 = sadd.s32 %s156, 1
    %p160 = scmp.eq.s32.totalorder %s31, 1
    %p161 = scmp.ne.s32.totalorder %s156, %s158
    %p162 = scmp.eq.s32.totalorder %s31, 0
    %p163 = por %p161, %p162
    %p164 = scmp.ne.s32.totalorder %s156, %s158
    %p165 = scmp.eq.s32.totalorder %s36, 1
    %p166 = por %p164, %p165
    %p167 = scmp.ne.s32.totalorder %s158, %s159
    %p168 = scmp.eq.s32.totalorder %s36, 0
    %p169 = por %p167, %p168
    %p170 = scmp.ne.s32.totalorder %s158, %s159
    %p171 = scmp.eq.s32.totalorder %s37, 1
    %p172 = por %p170, %p171
    %p174 = scmp.ne.s32.totalorder %s159, %s173
    %p175 = scmp.eq.s32.totalorder %s37, 0
    %p176 = por %p174, %p175
    %s178 = sadd.s32 %s177, 1
    %p181 = scmp.eq.s32.totalorder %s31, 1
    %p182 = scmp.ne.s32.totalorder %s177, %s179
    %p183 = scmp.eq.s32.totalorder %s31, 0
    %p184 = por %p182, %p183
    %p185 = scmp.ne.s32.totalorder %s177, %s179
    %p186 = scmp.eq.s32.totalorder %s36, 1
    %p187 = por %p185, %p186
    %p188 = scmp.ne.s32.totalorder %s179, %s180
    %p189 = scmp.eq.s32.totalorder %s36, 0
    %p190 = por %p188, %p189
    %p191 = scmp.ne.s32.totalorder %s179, %s180
    %p192 = scmp.eq.s32.totalorder %s37, 1
    %p193 = por %p191, %p192
    %p195 = scmp.ne.s32.totalorder %s180, %s194
    %p196 = scmp.eq.s32.totalorder %s37, 0
    %p197 = por %p195, %p196
    %s199 = sadd.s32 %s198, 1
    %p202 = scmp.eq.s32.totalorder %s31, 1
    %p203 = scmp.ne.s32.totalorder %s198, %s200
    %p204 = scmp.eq.s32.totalorder %s31, 0
    %p205 = por %p203, %p204
    %p206 = scmp.ne.s32.totalorder %s198, %s200
    %p207 = scmp.eq.s32.totalorder %s36, 1
    %p208 = por %p206, %p207
    %p209 = scmp.ne.s32.totalorder %s200, %s201
    %p210 = scmp.eq.s32.totalorder %s36, 0
    %p211 = por %p209, %p210
    %p212 = scmp.ne.s32.totalorder %s200, %s201
    %p213 = scmp.eq.s32.totalorder %s37, 1
    %p214 = por %p212, %p213
    %p216 = scmp.ne.s32.totalorder %s201, %s215
    %p217 = scmp.eq.s32.totalorder %s37, 0
    %p218 = por %p216, %p217
    %s220 = sadd.s32 %s219, 1
    %p223 = scmp.eq.s32.totalorder %s31, 1
    %p224 = scmp.ne.s32.totalorder %s219, %s221
    %p225 = scmp.eq.s32.totalorder %s31, 0
    %p226 = por %p224, %p225
    %p227 = scmp.ne.s32.totalorder %s219, %s221
    %p228 = scmp.eq.s32.totalorder %s36, 1
    %p229 = por %p227, %p228
    %p230 = scmp.ne.s32.totalorder %s221, %s222
    %p231 = scmp.eq.s32.totalorder %s36, 0
    %p232 = por %p230, %p231
    %p233 = scmp.ne.s32.totalorder %s221, %s222
    %p234 = scmp.eq.s32.totalorder %s37, 1
    %p235 = por %p233, %p234
    %p237 = scmp.ne.s32.totalorder %s222, %s236
    %p238 = scmp.eq.s32.totalorder %s37, 0
    %p239 = por %p237, %p238
    %s241 = sadd.s32 %s240, 1
    %p244 = scmp.eq.s32.totalorder %s31, 1
    %p245 = scmp.ne.s32.totalorder %s240, %s242
    %p246 = scmp.eq.s32.totalorder %s31, 0
    %p247 = por %p245, %p246
    %p248 = scmp.ne.s32.totalorder %s240, %s242
    %p249 = scmp.eq.s32.totalorder %s36, 1
    %p250 = por %p248, %p249
    %p251 = scmp.ne.s32.totalorder %s242, %s243
    %p252 = scmp.eq.s32.totalorder %s36, 0
    %p253 = por %p251, %p252
    %p254 = scmp.ne.s32.totalorder %s242, %s243
    %p255 = scmp.eq.s32.totalorder %s37, 1
    %p256 = por %p254, %p255
    %p258 = scmp.ne.s32.totalorder %s243, %s257
    %p259 = scmp.eq.s32.totalorder %s37, 0
    %p260 = por %p258, %p259
    %s262 = sadd.s32 %s261, 1
    %p265 = scmp.eq.s32.totalorder %s31, 1
    %p266 = scmp.ne.s32.totalorder %s261, %s263
    %p267 = scmp.eq.s32.totalorder %s31, 0
    %p268 = por %p266, %p267
    %p269 = scmp.ne.s32.totalorder %s261, %s263
    %p270 = scmp.eq.s32.totalorder %s36, 1
    %p271 = por %p269, %p270
    %p272 = scmp.ne.s32.totalorder %s263, %s264
    %p273 = scmp.eq.s32.totalorder %s36, 0
    %p274 = por %p272, %p273
    %p275 = scmp.ne.s32.totalorder %s263, %s264
    %p276 = scmp.eq.s32.totalorder %s37, 1
    %p277 = por %p275, %p276
    %p279 = scmp.ne.s32.totalorder %s264, %s278
    %p280 = scmp.eq.s32.totalorder %s37, 0
    %p281 = por %p279, %p280
    %s283 = sadd.s32 %s282, 1
    %p286 = scmp.eq.s32.totalorder %s31, 1
    %p287 = scmp.ne.s32.totalorder %s282, %s284
    %p288 = scmp.eq.s32.totalorder %s31, 0
    %p289 = por %p287, %p288
    %p290 = scmp.ne.s32.totalorder %s282, %s284
    %p291 = scmp.eq.s32.totalorder %s36, 1
    %p292 = por %p290, %p291
    %p293 = scmp.ne.s32.totalorder %s284, %s285
    %p294 = scmp.eq.s32.totalorder %s36, 0
    %p295 = por %p293, %p294
    %p296 = scmp.ne.s32.totalorder %s284, %s285
    %p297 = scmp.eq.s32.totalorder %s37, 1
    %p298 = por %p296, %p297
    %p300 = scmp.ne.s32.totalorder %s285, %s299
    %p301 = scmp.eq.s32.totalorder %s37, 0
    %p302 = por %p300, %p301
    %s303 = ssub.s32 %s38, %s50
    %p304 = scmp.eq.s32.totalorder %s303, 0
    %s306 = sadd.s32 %s305, 1
    %s307 = scalar_select %p304, %s305, %s306
    %p310 = pneg %p304
    %p311 = scmp.eq.s32.totalorder %s31, 1
    %p312 = por %p310, %p311
    %p313 = scmp.ne.s32.totalorder %s305, %s308
    %p314 = scmp.eq.s32.totalorder %s31, 0
    %p315 = por %p313, %p314
    %p316 = scmp.ne.s32.totalorder %s305, %s308
    %p317 = scmp.eq.s32.totalorder %s36, 1
    %p318 = por %p316, %p317
    %p319 = scmp.ne.s32.totalorder %s308, %s309
    %p320 = scmp.eq.s32.totalorder %s36, 0
    %p321 = por %p319, %p320
    %p322 = scmp.ne.s32.totalorder %s308, %s309
    %p323 = scmp.eq.s32.totalorder %s37, 1
    %p324 = por %p322, %p323
    %p326 = scmp.ne.s32.totalorder %s309, %s325
    %p327 = scmp.eq.s32.totalorder %s37, 0
    %p328 = por %p326, %p327
    %s329 = ssub.s32 %s38, %s50
    %p330 = scmp.eq.s32.totalorder %s329, 0
    %s332 = sadd.s32 %s331, 1
    %s333 = scalar_select %p330, %s331, %s332
    %p336 = pneg %p330
    %p337 = scmp.eq.s32.totalorder %s31, 1
    %p338 = por %p336, %p337
    %p339 = scmp.ne.s32.totalorder %s331, %s334
    %p340 = scmp.eq.s32.totalorder %s31, 0
    %p341 = por %p339, %p340
    %p342 = scmp.ne.s32.totalorder %s331, %s334
    %p343 = scmp.eq.s32.totalorder %s36, 1
    %p344 = por %p342, %p343
    %p345 = scmp.ne.s32.totalorder %s334, %s335
    %p346 = scmp.eq.s32.totalorder %s36, 0
    %p347 = por %p345, %p346
    %p348 = scmp.ne.s32.totalorder %s334, %s335
    %p349 = scmp.eq.s32.totalorder %s37, 1
    %p350 = por %p348, %p349
    %p352 = scmp.ne.s32.totalorder %s335, %s351
    %p353 = scmp.eq.s32.totalorder %s37, 0
    %p354 = por %p352, %p353
    %p355 = scmp.le.s32.totalorder 1, %s31
    %p356 = scmp.lt.s32.totalorder %s31, 3
    %p357 = pnand %p355, %p356
    %p358 = pneg %p357
    // Predicated region
    $region9: #{run.5} parent=5 // pred_check
      _
    $region10: #{run.5} parent=5 // pred_check_branch
      %360 = sbr.rel (%p357) target = $region12
    $region11: #{run.5} parent=5 // pred_region
      %s361 = ssub.s32 %s31, 1
      // Predicated region
      $region13: #{run.5} parent=11 // pred_check
        %p362 = pneg %p148
      $region14: #{run.5} parent=11 // pred_check_branch
        %364 = sbr.rel (%p362) target = $region16
      $region15: #{run.5} parent=11 // pred_region
        _
      $region16: #{run.5} parent=11 // pred_fallthru
        _
      // Predicated region
      $region17: #{run.5} parent=11 // pred_check
        %p365 = pneg %p169
      $region18: #{run.5} parent=11 // pred_check_branch
        %367 = sbr.rel (%p365) target = $region20
      $region19: #{run.5} parent=11 // pred_region
        _
      $region20: #{run.5} parent=11 // pred_fallthru
        _
      // Predicated region
      $region21: #{run.5} parent=11 // pred_check
        %p368 = pneg %p190
      $region22: #{run.5} parent=11 // pred_check_branch
        %370 = sbr.rel (%p368) target = $region24
      $region23: #{run.5} parent=11 // pred_region
        _
      $region24: #{run.5} parent=11 // pred_fallthru
        _
      // Predicated region
      $region25: #{run.5} parent=11 // pred_check
        %p371 = pneg %p211
      $region26: #{run.5} parent=11 // pred_check_branch
        %373 = sbr.rel (%p371) target = $region28
      $region27: #{run.5} parent=11 // pred_region
        _
      $region28: #{run.5} parent=11 // pred_fallthru
        _
      // Predicated region
      $region29: #{run.5} parent=11 // pred_check
        %p374 = pneg %p232
      $region30: #{run.5} parent=11 // pred_check_branch
        %376 = sbr.rel (%p374) target = $region32
      $region31: #{run.5} parent=11 // pred_region
        _
      $region32: #{run.5} parent=11 // pred_fallthru
        _
      // Predicated region
      $region33: #{run.5} parent=11 // pred_check
        %p377 = pneg %p253
      $region34: #{run.5} parent=11 // pred_check_branch
        %379 = sbr.rel (%p377) target = $region36
      $region35: #{run.5} parent=11 // pred_region
        _
      $region36: #{run.5} parent=11 // pred_fallthru
        _
      // Predicated region
      $region37: #{run.5} parent=11 // pred_check
        %p380 = pneg %p274
      $region38: #{run.5} parent=11 // pred_check_branch
        %382 = sbr.rel (%p380) target = $region40
      $region39: #{run.5} parent=11 // pred_region
        _
      $region40: #{run.5} parent=11 // pred_fallthru
        _
      // Predicated region
      $region41: #{run.5} parent=11 // pred_check
        %p383 = pneg %p295
      $region42: #{run.5} parent=11 // pred_check_branch
        %385 = sbr.rel (%p383) target = $region44
      $region43: #{run.5} parent=11 // pred_region
        _
      $region44: #{run.5} parent=11 // pred_fallthru
        _
    $region12: #{run.5} parent=5 // pred_fallthru
      _
    %p386 = scmp.lt.s32.totalorder %s31, 2
    // Predicated region
    $region45: #{run.5} parent=5 // pred_check
      %p387 = pneg %p386
    $region46: #{run.5} parent=5 // pred_check_branch
      %389 = sbr.rel (%p387) target = $region48
    $region47: #{run.5} parent=5 // pred_region
      // Predicated region
      $region49: #{run.5} parent=47 // pred_check
        %p390 = pneg %p65
      $region50: #{run.5} parent=47 // pred_check_branch
        %392 = sbr.rel (%p390) target = $region52
      $region51: #{run.5} parent=47 // pred_region
        %s393 = sadd.s32 %s38, %s39
        %s394 = smul.u32 2, %s393
        %p395 = scmp.lt.s32.totalorder %s394, 3
        %s396 = scalar_select %p395, %s394, 3
        %s397 = smul.addr %s396, 8
        %s398 = scalar_lea.vmem %s2, %s397
        %s399 = sadd.s32 %s38, %s39
        %s400 = smul.u32 2, %s399
      $region52: #{run.5} parent=47 // pred_fallthru
        _
      // Predicated region
      $region53: #{run.5} parent=47 // pred_check
        %p401 = pneg %p93
      $region54: #{run.5} parent=47 // pred_check_branch
        %403 = sbr.rel (%p401) target = $region56
      $region55: #{run.5} parent=47 // pred_region
        %s404 = sadd.s32 %s38, %s39
        %s405 = smul.u32 2, %s404
        %p406 = scmp.lt.s32.totalorder %s405, 3
        %s407 = scalar_select %p406, %s405, 3
        %s408 = smul.addr %s407, 4
        %s409 = scalar_lea.vmem %s3, %s408
        %s410 = sadd.s32 %s38, %s39
        %s411 = smul.u32 2, %s410
      $region56: #{run.5} parent=47 // pred_fallthru
        _
      // Predicated region
      $region57: #{run.5} parent=47 // pred_check
        %p412 = pneg %p121
      $region58: #{run.5} parent=47 // pred_check_branch
        %414 = sbr.rel (%p412) target = $region60
      $region59: #{run.5} parent=47 // pred_region
        %s415 = sadd.s32 %s38, %s39
        %s416 = smul.u32 2, %s415
        %p417 = scmp.lt.s32.totalorder %s416, 3
        %s418 = scalar_select %p417, %s416, 3
        %s419 = smul.addr %s418, 8
        %s420 = scalar_lea.vmem %s4, %s419
        %s421 = sadd.s32 %s38, %s39
        %s422 = smul.u32 2, %s421
      $region60: #{run.5} parent=47 // pred_fallthru
        _
    $region48: #{run.5} parent=5 // pred_fallthru
      _
    %p423 = scmp.le.s32.totalorder 1, %s31
    %p424 = scmp.lt.s32.totalorder %s31, 3
    %p425 = pnand %p423, %p424
    %p426 = pneg %p425
    // Predicated region
    $region61: #{run.5} parent=5 // pred_check
      _
    $region62: #{run.5} parent=5 // pred_check_branch
      %428 = sbr.rel (%p425) target = $region64
    $region63: #{run.5} parent=5 // pred_region
      %s429 = ssub.s32 %s31, 1
      %s430 = sadd.s32 %s40, %s41
      %s431 = smul.u32 2, %s430
      %p432 = scmp.lt.s32.totalorder %s431, 3
      %s433 = scalar_select %p432, %s431, 3
      %s434 = smul.addr %s433, 8
      %s435 = scalar_lea.vmem %s2, %s434
      %p436 = pneg %p71
      %p437 = pneg %p68
      %s438 = sadd.s32 %s40, %s41
      %s439 = smul.u32 2, %s438
      %p440 = scmp.lt.s32.totalorder %s439, 3
      %s441 = scalar_select %p440, %s439, 3
      %s442 = smul.addr %s441, 4
      %s443 = scalar_lea.vmem %s3, %s442
      %p444 = pneg %p99
      %p445 = pneg %p96
      %s446 = sadd.s32 %s40, %s41
      %s447 = smul.u32 2, %s446
      %p448 = scmp.lt.s32.totalorder %s447, 3
      %s449 = scalar_select %p448, %s447, 3
      %s450 = smul.addr %s449, 8
      %s451 = scalar_lea.vmem %s4, %s450
      %p452 = pneg %p127
      %p453 = pneg %p124
      %p454 = pneg %p148
      %p455 = pneg %p145
      %p456 = pneg %p169
      %p457 = pneg %p166
      %p458 = pneg %p190
      %p459 = pneg %p187
      %p460 = pneg %p211
      %p461 = pneg %p208
      %p462 = pneg %p232
      %p463 = pneg %p229
      %p464 = pneg %p253
      %p465 = pneg %p250
      %p466 = pneg %p274
      %p467 = pneg %p271
      %p468 = pneg %p295
      %p469 = pneg %p292
      %p470 = pneg %p321
      %p471 = pneg %p318
      %p472 = scmp.lt.s32.totalorder %s40, 1
      %s473 = scalar_select %p472, %s40, 1
      %s474 = smul.addr %s473, 8
      %s475 = scalar_lea.vmem %s13, %s474
      %p476 = pneg %p347
      %p477 = pneg %p344
      %p478 = scmp.lt.s32.totalorder %s40, 1
      %s479 = scalar_select %p478, %s40, 1
      %s480 = smul.addr %s479, 8
      %s481 = scalar_lea.vmem %s14, %s480
      %s482 = sadd.s32 %s40, %s41
      %s483 = smul.u32 2, %s482
      %p484 = scmp.lt.s32.totalorder %s483, 3
      %s485 = scalar_select %p484, %s483, 3
      %s486 = smul.addr %s485, 8
      %s487 = scalar_lea.vmem %s2, %s486
      %s488 = sadd.s32 %s40, %s41
      %s489 = smul.u32 2, %s488
      %s490 = sadd.s32 %s40, %s41
      %s491 = smul.u32 2, %s490
      %p492 = scmp.lt.s32.totalorder %s491, 3
      %s493 = scalar_select %p492, %s491, 3
      %s494 = smul.addr %s493, 4
      %s495 = scalar_lea.vmem %s3, %s494
      %s496 = sadd.s32 %s40, %s41
      %s497 = smul.u32 2, %s496
      %s498 = sadd.s32 %s40, %s41
      %s499 = smul.u32 2, %s498
      %p500 = scmp.lt.s32.totalorder %s499, 3
      %s501 = scalar_select %p500, %s499, 3
      %s502 = smul.addr %s501, 8
      %s503 = scalar_lea.vmem %s4, %s502
      %s504 = sadd.s32 %s40, %s41
      %s505 = smul.u32 2, %s504
      %p506 = scmp.lt.s32.totalorder %s40, 1
      %s507 = scalar_select %p506, %s40, 1
      %s508 = smul.addr %s507, 8
      %s509 = scalar_lea.vmem %s13, %s508
      %p510 = scmp.lt.s32.totalorder %s40, 1
      %s511 = scalar_select %p510, %s40, 1
      %s512 = smul.addr %s511, 8
      %s513 = scalar_lea.vmem %s14, %s512
      %p515 = scmp.eq.s32.totalorder %s41, 0
      // Predicated region
      $region65: #{run.5} parent=63 // pred_check
        %p516 = pneg %p515
      $region66: #{run.5} parent=63 // pred_check_branch
        %518 = sbr.rel (%p516) target = $region68
      $region67: #{run.5} parent=63 // pred_region
        %vm519 = vcmask 654336
        %520 = vst.msk [vmem:[%s509] sm:$0xff] %vm519, -3e+38
        %vm521 = vcmask 408576
        %522 = vst.msk [vmem:[%s513] sm:$0xff] %vm521, -3e+38
      $region68: #{run.5} parent=63 // pred_fallthru
        _
      %v523 = vld [vmem:[%s487] sm:$0xff]
      %v524 = vld [vmem:[%s487 + $0x8] sm:$0xff]
      %v525 = vld [vmem:[%s5] sm:$0x3]
      %v526 = vunpack.c.l.bf16 %v525
      %528 = vset.pattern.permute.xlu0 0
      %529 = vperm.xlu0 %528, %v523
      %v530 = vpop.permute.xlu0 %529
      %533 = vset.pattern.permute.xlu0 0
      %534 = vperm.xlu0 %533, %v524
      %v535 = vpop.permute.xlu0 %534
      %v537 = vlaneseq
      %v538 = vshrl.u32 %v537, 7
      %v539 = vsub.s32 0, %v538
      %v540 = vrot.slane %v526, %v539
      %v541 = vmul.f32 %v530, %v540
      %v542 = vmul.f32 %v535, %v540
      %543 = vset.pattern.permute.xlu0 1
      %544 = vperm.xlu0 %543, %v523
      %v545 = vpop.permute.xlu0 %544
      %547 = vset.pattern.permute.xlu0 1
      %548 = vperm.xlu0 %547, %v524
      %v549 = vpop.permute.xlu0 %548
      %v551 = vlaneseq
      %v552 = vshrl.u32 %v551, 7
      %v553 = vsub.s32 1, %v552
      %v554 = vrot.slane %v526, %v553
      %v555 = vmul.f32 %v545, %v554
      %v556 = vmul.f32 %v549, %v554
      %v557 = vadd.f32 %v541, %v555
      %v558 = vadd.f32 %v542, %v556
      %559 = vset.pattern.permute.xlu0 2
      %560 = vperm.xlu0 %559, %v523
      %v561 = vpop.permute.xlu0 %560
      %563 = vset.pattern.permute.xlu0 2
      %564 = vperm.xlu0 %563, %v524
      %v565 = vpop.permute.xlu0 %564
      %v567 = vlaneseq
      %v568 = vshrl.u32 %v567, 7
      %v569 = vsub.s32 2, %v568
      %v570 = vrot.slane %v526, %v569
      %v571 = vmul.f32 %v561, %v570
      %v572 = vmul.f32 %v565, %v570
      %v573 = vadd.f32 %v557, %v571
      %v574 = vadd.f32 %v558, %v572
      %v575 = vld [vmem:[%s6] sm:$0x1]
      %v577 = vlaneseq
      %v578 = vshrl.u32 %v577, 7
      %v579 = vsub.s32 0, %v578
      %v580 = vrot.slane %v575, %v579
      %v582 = vadd.f32 %v573, %v580
      %v583 = vadd.f32 %v574, %v580
      %v584 = vmax.f32 %v582, 0.0
      %v585 = vmax.f32 %v583, 0.0
      %v586 = vpack.c.bf16 %v585, %v584
      %v587 = vld [vmem:[%s7] sm:$0xf]
      %v588 = vld [vmem:[%s7 + $0x4] sm:$0xf]
      %v589 = vld [vmem:[%s7 + $0x8] sm:$0xf]
      %v590 = vld [vmem:[%s7 + $0xc] sm:$0xf]
      %v591 = vld [vmem:[%s7 + $0x10] sm:$0xf]
      %v592 = vld [vmem:[%s7 + $0x14] sm:$0xf]
      %v593 = vld [vmem:[%s7 + $0x18] sm:$0xf]
      %v594 = vld [vmem:[%s7 + $0x1c] sm:$0xf]
      %v595 = vld [vmem:[%s7 + $0x20] sm:$0xf]
      %v596 = vld [vmem:[%s7 + $0x24] sm:$0xf]
      %v597 = vld [vmem:[%s8] sm:$0x1]
      %v599 = vlaneseq
      %v600 = vshrl.u32 %v599, 7
      %v601 = vsub.s32 0, %v600
      %v602 = vrot.slane %v597, %v601
      %v614 = vunpack.c.l.b16 %v587
      %v615 = vunpack.c.l.b16 %v588
      %v616 = vunpack.c.l.b16 %v589
      %v617 = vunpack.c.l.b16 %v590
      %v618 = vunpack.c.l.b16 %v591
      %v619 = vunpack.c.l.b16 %v592
      %v620 = vunpack.c.l.b16 %v593
      %v621 = vunpack.c.l.b16 %v594
      %v622 = vunpack.c.l.b16 %v595
      %v623 = vunpack.c.l.b16 %v596
      %v624 = vpack.c.b16 %v615, %v614
      %v625 = vpack.c.b16 %v617, %v616
      %v626 = vpack.c.b16 %v619, %v618
      %v627 = vpack.c.b16 %v621, %v620
      %v628 = vpack.c.b16 %v623, %v622
      %vm634 = vcmask 654336
      %v636 = vsel %vm634, %v586, 0
      %638 = vmatprep.subr.bf16.mxu0 0
      %639 = vmatpush1.bf16.msra.mxu0 0
      %640 = vmatprep.subr.bf16.mxu0 0
      %641 = vmatpush1.bf16.msra.mxu0 0
      %642 = vmatprep.subr.bf16.mxu0 0
      %643 = vmatpush1.bf16.msra.mxu0 0
      %644 = vmatprep.subr.bf16.mxu0 0
      %645 = vmatpush1.bf16.msra.mxu0 %v628
      %646 = vmatprep.subr.bf16.mxu0 0
      %647 = vmatpush1.bf16.msra.mxu0 %v627
      %648 = vmatprep.subr.bf16.mxu0 0
      %649 = vmatpush1.bf16.msra.mxu0 %v626
      %650 = vmatprep.subr.bf16.mxu0 0
      %651 = vmatpush1.bf16.msra.mxu0 %v625
      %652 = vmatprep.subr.bf16.mxu0 0
      %653 = vmatpush1.bf16.msra.mxu0 %v624
      %654 = vmatprep.subr.bf16.mxu0 0
      %655 = vmatpush2.bf16.msra.mxu0 0
      %656 = vmatprep.subr.bf16.mxu0 0
      %657 = vmatpush2.bf16.msra.mxu0 0
      %658 = vmatprep.subr.bf16.mxu0 0
      %659 = vmatpush2.bf16.msra.mxu0 0
      %660 = vmatprep.subr.bf16.mxu0 0
      %661 = vmatpush2.bf16.msra.mxu0 0
      %662 = vmatprep.subr.bf16.mxu0 0
      %663 = vmatpush2.bf16.msra.mxu0 0
      %664 = vmatprep.subr.bf16.mxu0 0
      %665 = vmatpush2.bf16.msra.mxu0 0
      %666 = vmatprep.subr.bf16.mxu0 0
      %667 = vmatpush2.bf16.msra.mxu0 0
      %668 = vmatprep.subr.bf16.mxu0 0
      %669 = vmatpush2.bf16.msra.mxu0 0
      %670 = vmatprep.mubr.bf16.mxu0 0
      %671 = vmatmul.mubr.bf16.gmra.mxu0 %v636
      %v672 = vpop.f32.mrf.mxu0
      %v673 = vadd.f32 %v602, %v672
      %v674 = vpop.f32.mrf.mxu0
      %v675 = vpop.f32.mrf.mxu0
      %v676 = vadd.f32 %v602, %v675
      %v677 = vpop.f32.mrf.mxu0
      %678 = vdwg.mxu0
      %v679 = vmax.f32 %v673, 0.0
      %v680 = vmax.f32 %v676, 0.0
      %v681 = vpack.c.bf16 %v680, %v679
      %v682 = vld [vmem:[%s9] sm:$0xf]
      %v683 = vld [vmem:[%s9 + $0x4] sm:$0xf]
      %v684 = vld [vmem:[%s9 + $0x8] sm:$0xf]
      %v685 = vld [vmem:[%s9 + $0xc] sm:$0xf]
      %v686 = vld [vmem:[%s9 + $0x10] sm:$0xf]
      %v687 = vld [vmem:[%s10] sm:$0x1]
      %v689 = vlaneseq
      %v690 = vshrl.u32 %v689, 7
      %v691 = vsub.s32 0, %v690
      %v692 = vrot.slane %v687, %v691
      %v699 = vunpack.c.l.b16 %v682
      %v700 = vunpack.c.l.b16 %v683
      %v701 = vunpack.c.l.b16 %v684
      %v702 = vunpack.c.l.b16 %v685
      %v703 = vunpack.c.l.b16 %v686
      %v704 = vpack.c.b16 %v700, %v699
      %v705 = vpack.c.b16 %v702, %v701
      %v706 = vpack.c.b16 %v703, %v703
      %vm709 = vcmask 326656
      %v711 = vsel %vm709, %v681, 0
      %vm713 = vcmask 1043456
      %v715 = vsel %vm713, %v706, 0
      %717 = vmatprep.subr.bf16.mxu0 0
      %718 = vmatpush1.bf16.msra.mxu0 0
      %719 = vmatprep.subr.bf16.mxu0 0
      %720 = vmatpush1.bf16.msra.mxu0 0
      %721 = vmatprep.subr.bf16.mxu0 0
      %722 = vmatpush1.bf16.msra.mxu0 0
      %723 = vmatprep.subr.bf16.mxu0 0
      %724 = vmatpush1.bf16.msra.mxu0 0
      %725 = vmatprep.subr.bf16.mxu0 0
      %726 = vmatpush1.bf16.msra.mxu0 0
      %727 = vmatprep.subr.bf16.mxu0 0
      %728 = vmatpush1.bf16.msra.mxu0 %v715
      %729 = vmatprep.subr.bf16.mxu0 0
      %730 = vmatpush1.bf16.msra.mxu0 %v705
      %731 = vmatprep.subr.bf16.mxu0 0
      %732 = vmatpush1.bf16.msra.mxu0 %v704
      %733 = vmatprep.subr.bf16.mxu0 0
      %734 = vmatpush2.bf16.msra.mxu0 0
      %735 = vmatprep.subr.bf16.mxu0 0
      %736 = vmatpush2.bf16.msra.mxu0 0
      %737 = vmatprep.subr.bf16.mxu0 0
      %738 = vmatpush2.bf16.msra.mxu0 0
      %739 = vmatprep.subr.bf16.mxu0 0
      %740 = vmatpush2.bf16.msra.mxu0 0
      %741 = vmatprep.subr.bf16.mxu0 0
      %742 = vmatpush2.bf16.msra.mxu0 0
      %743 = vmatprep.subr.bf16.mxu0 0
      %744 = vmatpush2.bf16.msra.mxu0 0
      %745 = vmatprep.subr.bf16.mxu0 0
      %746 = vmatpush2.bf16.msra.mxu0 0
      %747 = vmatprep.subr.bf16.mxu0 0
      %748 = vmatpush2.bf16.msra.mxu0 0
      %749 = vmatprep.mubr.bf16.mxu0 0
      %750 = vmatmul.mubr.bf16.gmra.mxu0 %v711
      %v751 = vpop.f32.mrf.mxu0
      %v752 = vadd.f32 %v692, %v751
      %v753 = vpop.f32.mrf.mxu0
      %v754 = vpop.f32.mrf.mxu0
      %v755 = vadd.f32 %v692, %v754
      %v756 = vpop.f32.mrf.mxu0
      %757 = vdwg.mxu0
      %v758 = vmax.f32 %v752, 0.0
      %v759 = vmax.f32 %v755, 0.0
      %v760 = vld [vmem:[%s495] sm:$0xf]
      %v761 = vld [vmem:[%s495 + $0x4] sm:$0xf]
      %v762 = vpack.c.bf16 %v759, %v758
      %v765 = vunpack.c.l.b16 %v760
      %v766 = vunpack.c.l.b16 %v761
      %v767 = vpack.c.b16 %v766, %v765
      %768 = vrot.lane.b32.xlu0 %v767, 20
      %v769 = vpop.permute.xlu0 %768
      %vm770 = vcmask 162816
      %v773 = vsel %vm770, %v762, %v769
      %v774 = vld [vmem:[%s11] sm:$0xf]
      %v775 = vld [vmem:[%s11 + $0x4] sm:$0xf]
      %v776 = vld [vmem:[%s11 + $0x8] sm:$0xf]
      %v777 = vld [vmem:[%s11 + $0xc] sm:$0xf]
      %v778 = vld [vmem:[%s11 + $0x10] sm:$0xf]
      %v779 = vld [vmem:[%s11 + $0x14] sm:$0xf]
      %v780 = vld [vmem:[%s11 + $0x18] sm:$0xf]
      %v781 = vld [vmem:[%s11 + $0x1c] sm:$0xf]
      %v782 = vld [vmem:[%s11 + $0x20] sm:$0x7]
      %v783 = vld [vmem:[%s12] sm:$0x1]
      %v785 = vlaneseq
      %v786 = vshrl.u32 %v785, 7
      %v787 = vsub.s32 0, %v786
      %v788 = vrot.slane %v783, %v787
      %v799 = vunpack.c.l.b16 %v774
      %v800 = vunpack.c.l.b16 %v775
      %v801 = vunpack.c.l.b16 %v776
      %v802 = vunpack.c.l.b16 %v777
      %v803 = vunpack.c.l.b16 %v778
      %v804 = vunpack.c.l.b16 %v779
      %v805 = vunpack.c.l.b16 %v780
      %v806 = vunpack.c.l.b16 %v781
      %v807 = vunpack.c.l.b16 %v782
      %v808 = vpack.c.b16 %v800, %v799
      %v809 = vpack.c.b16 %v802, %v801
      %v810 = vpack.c.b16 %v804, %v803
      %v811 = vpack.c.b16 %v806, %v805
      %v812 = vpack.c.b16 %v807, %v807
      %vm817 = vcmask 572416
      %v818 = vsel %vm817, %v773, 0
      %vm820 = vcmask 1042432
      %v822 = vsel %vm820, %v812, 0
      %824 = vmatprep.subr.bf16.mxu0 0
      %825 = vmatpush1.bf16.msra.mxu0 0
      %826 = vmatprep.subr.bf16.mxu0 0
      %827 = vmatpush1.bf16.msra.mxu0 0
      %828 = vmatprep.subr.bf16.mxu0 0
      %829 = vmatpush1.bf16.msra.mxu0 0
      %830 = vmatprep.subr.bf16.mxu0 0
      %831 = vmatpush1.bf16.msra.mxu0 %v822
      %832 = vmatprep.subr.bf16.mxu0 0
      %833 = vmatpush1.bf16.msra.mxu0 %v811
      %834 = vmatprep.subr.bf16.mxu0 0
      %835 = vmatpush1.bf16.msra.mxu0 %v810
      %836 = vmatprep.subr.bf16.mxu0 0
      %837 = vmatpush1.bf16.msra.mxu0 %v809
      %838 = vmatprep.subr.bf16.mxu0 0
      %839 = vmatpush1.bf16.msra.mxu0 %v808
      %840 = vmatprep.subr.bf16.mxu0 0
      %841 = vmatpush2.bf16.msra.mxu0 0
      %842 = vmatprep.subr.bf16.mxu0 0
      %843 = vmatpush2.bf16.msra.mxu0 0
      %844 = vmatprep.subr.bf16.mxu0 0
      %845 = vmatpush2.bf16.msra.mxu0 0
      %846 = vmatprep.subr.bf16.mxu0 0
      %847 = vmatpush2.bf16.msra.mxu0 0
      %848 = vmatprep.subr.bf16.mxu0 0
      %849 = vmatpush2.bf16.msra.mxu0 0
      %850 = vmatprep.subr.bf16.mxu0 0
      %851 = vmatpush2.bf16.msra.mxu0 0
      %852 = vmatprep.subr.bf16.mxu0 0
      %853 = vmatpush2.bf16.msra.mxu0 0
      %854 = vmatprep.subr.bf16.mxu0 0
      %855 = vmatpush2.bf16.msra.mxu0 0
      %856 = vmatprep.mubr.bf16.mxu0 0
      %857 = vmatmul.mubr.bf16.gmra.mxu0 %v818
      %v858 = vpop.f32.mrf.mxu0
      %v859 = vadd.f32 %v788, %v858
      %v860 = vpop.f32.mrf.mxu0
      %v861 = vpop.f32.mrf.mxu0
      %v862 = vadd.f32 %v788, %v861
      %v863 = vpop.f32.mrf.mxu0
      %864 = vdwg.mxu0
      %v865 = vmax.f32 %v859, 0.0
      %v866 = vmax.f32 %v862, 0.0
      %v867 = vunpack.c.l.bf16 %v760
      %v868 = vunpack.c.l.bf16 %v761
      %v869 = vld [vmem:[%s503] sm:$0xff]
      %v870 = vld [vmem:[%s503 + $0x8] sm:$0xff]
      %s871 = sadd.s32 %s40, %s41
      %s872 = sld [smem:[#allocation3 + %s871]]
      %s873 = sld [smem:[#allocation4 + %s871]]
      %s874 = sadd.s32 %s872, 1
      // While loop
      $region69: #{run.5} parent=63 // loop_pre_header
        _
      $region70: #{run.5} parent=63 // loop_header
        %s876 = sphi %s874, %s878
        %p877 = scmp.ge.s32.totalorder %s876, %s873
      $region71: #{run.5} parent=63 // loop_header_branch
        %880 = sbr.rel (%p877) target = $region75
      $region72: #{run.5} parent=63 // loop_body
        %v881 = vstv %s876
        %vm882 = vcmp.eq.s32.totalorder %v869, %v881
        %vm883 = vcmp.eq.s32.totalorder %v870, %v881
        %v884 = vsel %vm882, 1, 0
        %v885 = vsel %vm883, 1, 0
        %886 = vset.pattern.permute.xlu0 0
        %887 = vperm.xlu0 %886, %v884
        %v888 = vpop.permute.xlu0 %887
        %889 = vset.pattern.permute.xlu0 0
        %890 = vperm.xlu0 %889, %v885
        %v891 = vpop.permute.xlu0 %890
        %vm892 = vcmp.eq.s32.totalorder %v888, 1
        %vm893 = vcmp.eq.s32.totalorder %v891, 1
        %v894 = vsel %vm892, %v865, -3e+38
        %v895 = vsel %vm893, %v866, -3e+38
        %v896 = vsel %vm634, %v894, -inf
        %v897 = vsel %vm634, %v895, -inf
        %v898 = vmax.f32 %v896, %v897
        %v899 = vrot.slane %v898, 4
        %v900 = vmax.f32 %v898, %v899
        %v901 = vrot.slane %v900, 2
        %v902 = vmax.f32 %v900, %v901
        %v903 = vrot.slane %v902, 1
        %v904 = vmax.f32 %v902, %v903
        %s905 = scalar_lea.vmem %s509, %s876
        %vm906 = vcmask 647168
        %907 = vst.msk [vmem:[%s905] sm:$0x1] %vm906, %v904
        %v908 = vsel %vm892, %v867, -3e+38
        %v909 = vsel %vm893, %v868, -3e+38
        %vm910 = vcmask 408576
        %v911 = vsel %vm910, %v908, -inf
        %v912 = vsel %vm910, %v909, -inf
        %v913 = vmax.f32 %v911, %v912
        %v914 = vrot.slane %v913, 4
        %v915 = vmax.f32 %v913, %v914
        %v916 = vrot.slane %v915, 2
        %v917 = vmax.f32 %v915, %v916
        %v918 = vrot.slane %v917, 1
        %v919 = vmax.f32 %v917, %v918
        %s920 = scalar_lea.vmem %s513, %s876
        %vm921 = vcmask 401408
        %922 = vst.msk [vmem:[%s920] sm:$0x1] %vm921, %v919
      $region73: #{run.5} parent=63 // loop_footer
        %s878 = sadd.s32 %s876, 1
      $region74: #{run.5} parent=63 // loop_footer_branch
        %875 = sbr.rel target = $region70
      $region75: #{run.5} parent=63 // loop_exit
        _
      %s923 = scalar_lea.vmem %s509, %s872
      %v924 = vld [vmem:[%s923] sm:$0x1]
      %v925 = vstv %s872
      %vm926 = vcmp.eq.s32.totalorder %v869, %v925
      %vm927 = vcmp.eq.s32.totalorder %v870, %v925
      %v928 = vsel %vm926, 1, 0
      %v929 = vsel %vm927, 1, 0
      %930 = vset.pattern.permute.xlu0 0
      %931 = vperm.xlu0 %930, %v928
      %v932 = vpop.permute.xlu0 %931
      %933 = vset.pattern.permute.xlu0 0
      %934 = vperm.xlu0 %933, %v929
      %v935 = vpop.permute.xlu0 %934
      %vm936 = vcmp.eq.s32.totalorder %v932, 1
      %vm937 = vcmp.eq.s32.totalorder %v935, 1
      %v938 = vsel %vm936, %v865, -3e+38
      %v939 = vsel %vm937, %v866, -3e+38
      %v940 = vsel %vm634, %v938, -inf
      %v941 = vsel %vm634, %v939, -inf
      %v942 = vmax.f32 %v940, %v941
      %v943 = vrot.slane %v942, 4
      %v944 = vmax.f32 %v942, %v943
      %v945 = vrot.slane %v944, 2
      %v946 = vmax.f32 %v944, %v945
      %v947 = vrot.slane %v946, 1
      %v948 = vmax.f32 %v946, %v947
      %v949 = vmax.f32 %v924, %v948
      %vm950 = vcmask 647168
      %951 = vst.msk [vmem:[%s923] sm:$0x1] %vm950, %v949
      %s952 = scalar_lea.vmem %s513, %s872
      %v953 = vld [vmem:[%s952] sm:$0x1]
      %v954 = vsel %vm936, %v867, -3e+38
      %v955 = vsel %vm937, %v868, -3e+38
      %vm956 = vcmask 408576
      %v957 = vsel %vm956, %v954, -inf
      %v958 = vsel %vm956, %v955, -inf
      %v959 = vmax.f32 %v957, %v958
      %v960 = vrot.slane %v959, 4
      %v961 = vmax.f32 %v959, %v960
      %v962 = vrot.slane %v961, 2
      %v963 = vmax.f32 %v961, %v962
      %v964 = vrot.slane %v963, 1
      %v965 = vmax.f32 %v963, %v964
      %v966 = vmax.f32 %v953, %v965
      %vm967 = vcmask 401408
      %968 = vst.msk [vmem:[%s952] sm:$0x1] %vm967, %v966
      %s969 = scalar_lea.vmem %s509, %s873
      %v970 = vld [vmem:[%s969] sm:$0x1]
      %v971 = vstv %s873
      %vm972 = vcmp.eq.s32.totalorder %v869, %v971
      %vm973 = vcmp.eq.s32.totalorder %v870, %v971
      %v974 = vsel %vm972, 1, 0
      %v975 = vsel %vm973, 1, 0
      %976 = vset.pattern.permute.xlu0 0
      %977 = vperm.xlu0 %976, %v974
      %v978 = vpop.permute.xlu0 %977
      %979 = vset.pattern.permute.xlu0 0
      %980 = vperm.xlu0 %979, %v975
      %v981 = vpop.permute.xlu0 %980
      %vm982 = vcmp.eq.s32.totalorder %v978, 1
      %vm983 = vcmp.eq.s32.totalorder %v981, 1
      %v984 = vsel %vm982, %v865, -3e+38
      %v985 = vsel %vm983, %v866, -3e+38
      %v986 = vsel %vm634, %v984, -inf
      %v987 = vsel %vm634, %v985, -inf
      %v988 = vmax.f32 %v986, %v987
      %v989 = vrot.slane %v988, 4
      %v990 = vmax.f32 %v988, %v989
      %v991 = vrot.slane %v990, 2
      %v992 = vmax.f32 %v990, %v991
      %v993 = vrot.slane %v992, 1
      %v994 = vmax.f32 %v992, %v993
      %v995 = vmax.f32 %v970, %v994
      %996 = vst.msk [vmem:[%s969] sm:$0x1] %vm950, %v995
      %s997 = scalar_lea.vmem %s513, %s873
      %v998 = vld [vmem:[%s997] sm:$0x1]
      %v999 = vsel %vm982, %v867, -3e+38
      %v1000 = vsel %vm983, %v868, -3e+38
      %v1001 = vsel %vm956, %v999, -inf
      %v1002 = vsel %vm956, %v1000, -inf
      %v1003 = vmax.f32 %v1001, %v1002
      %v1004 = vrot.slane %v1003, 4
      %v1005 = vmax.f32 %v1003, %v1004
      %v1006 = vrot.slane %v1005, 2
      %v1007 = vmax.f32 %v1005, %v1006
      %v1008 = vrot.slane %v1007, 1
      %v1009 = vmax.f32 %v1007, %v1008
      %v1010 = vmax.f32 %v998, %v1009
      %1011 = vst.msk [vmem:[%s997] sm:$0x1] %vm967, %v1010
      %p1012 = scmp.lt.s32.totalorder %s40, 1
      %s1013 = scalar_select %p1012, %s40, 1
      %s1014 = smul.addr %s1013, 8
      %s1015 = scalar_lea.vmem %s13, %s1014
      %p1016 = scmp.lt.s32.totalorder %s40, 1
      %s1017 = scalar_select %p1016, %s40, 1
      %s1018 = smul.addr %s1017, 8
      %s1019 = scalar_lea.vmem %s14, %s1018
      // Predicated region
      $region76: #{run.5} parent=63 // pred_check
        %p1020 = pneg %p318
      $region77: #{run.5} parent=63 // pred_check_branch
        %1022 = sbr.rel (%p1020) target = $region79
      $region78: #{run.5} parent=63 // pred_region
        _
      $region79: #{run.5} parent=63 // pred_fallthru
        _
      // Predicated region
      $region80: #{run.5} parent=63 // pred_check
        %p1023 = pneg %p344
      $region81: #{run.5} parent=63 // pred_check_branch
        %1025 = sbr.rel (%p1023) target = $region83
      $region82: #{run.5} parent=63 // pred_region
        _
      $region83: #{run.5} parent=63 // pred_fallthru
        _
    $region64: #{run.5} parent=5 // pred_fallthru
      _
    %p1026 = scmp.le.s32.totalorder 2, %s31
    // Predicated region
    $region84: #{run.5} parent=5 // pred_check
      %p1027 = pneg %p1026
    $region85: #{run.5} parent=5 // pred_check_branch
      %1029 = sbr.rel (%p1027) target = $region87
    $region86: #{run.5} parent=5 // pred_region
      %s1030 = ssub.s32 %s31, 2
      // Predicated region
      $region88: #{run.5} parent=86 // pred_check
        %p1031 = pneg %p324
      $region89: #{run.5} parent=86 // pred_check_branch
        %1033 = sbr.rel (%p1031) target = $region91
      $region90: #{run.5} parent=86 // pred_region
        %p1034 = scmp.lt.s32.totalorder %s42, 1
        %s1035 = scalar_select %p1034, %s42, 1
        %s1036 = smul.addr %s1035, 8
        %s1037 = scalar_lea.vmem %s13, %s1036
      $region91: #{run.5} parent=86 // pred_fallthru
        _
      // Predicated region
      $region92: #{run.5} parent=86 // pred_check
        %p1038 = pneg %p350
      $region93: #{run.5} parent=86 // pred_check_branch
        %1040 = sbr.rel (%p1038) target = $region95
      $region94: #{run.5} parent=86 // pred_region
        %p1041 = scmp.lt.s32.totalorder %s42, 1
        %s1042 = scalar_select %p1041, %s42, 1
        %s1043 = smul.addr %s1042, 8
        %s1044 = scalar_lea.vmem %s14, %s1043
      $region95: #{run.5} parent=86 // pred_fallthru
        _
    $region87: #{run.5} parent=5 // pred_fallthru
      _
  $region6: #{run.5} parent=0 // loop_footer
    %s35 = sadd.s32 1, %s31
  $region7: #{run.5} parent=0 // loop_footer_branch
    %30 = sbr.rel target = $region3
  $region8: #{run.5} parent=0 // loop_exit
    _

</llo_original>
